<compile_context>
chip_gen: v7x
topology: tpu7x:2x2x1
jax: 0.10.0
libtpu: 0.0.40
codegen_flags: <defaults>
</compile_context>

<pallas_src>
import functools

import jax
import jax.numpy as jnp
from jax.experimental import pallas as pl
from jax.experimental.pallas import tpu as pltpu

_VMEM_LIMIT = 32 * 1024 * 1024  # bytes; well above worst-case tile footprint
_POOL_LANE = 128


def _round_up(x, m):
    return ((x + m - 1) // m) * m


# --------------------------------------------------------------------------
# Pallas kernels
# --------------------------------------------------------------------------
def _matmul_bias_act_kernel(x_ref, w_ref, b_ref, o_ref, *, apply_relu):
    """o = relu?(x @ w + b); x:(TM,K) bf16, w:(K,N) bf16 resident, b:(1,N) f32."""
    acc = jnp.dot(x_ref[...], w_ref[...], preferred_element_type=jnp.float32)
    acc = acc + b_ref[...]
    if apply_relu:
        acc = jnp.maximum(acc, 0.0)
    o_ref[...] = acc.astype(o_ref.dtype)


def _mlp_kernel(x_ref, w1_ref, b1_ref, w2_ref, b2_ref, w3_ref, b3_ref, o_ref):
    """Fused fc1->ReLU->fc2->ReLU->fc3 on one row-tile; weights resident."""
    h = jnp.dot(x_ref[...], w1_ref[...], preferred_element_type=jnp.float32)
    h = jnp.maximum(h + b1_ref[...], 0.0)
    h = jnp.dot(h.astype(jnp.bfloat16), w2_ref[...],
                preferred_element_type=jnp.float32)
    h = jnp.maximum(h + b2_ref[...], 0.0)
    o = jnp.dot(h.astype(jnp.bfloat16), w3_ref[...],
                preferred_element_type=jnp.float32)
    o_ref[...] = o + b3_ref[...]


def _maxpool_kernel(a_ref, b_ref, c_ref, d_ref, o_ref):
    """Pairwise VPU max over the 4 window corners; lane-dense (TM,128) tiles."""
    o_ref[...] = jnp.maximum(jnp.maximum(a_ref[...], b_ref[...]),
                             jnp.maximum(c_ref[...], d_ref[...]))


# --------------------------------------------------------------------------
# Pallas wrappers
# --------------------------------------------------------------------------
def _row_tiling(m, tm_max=256, align=16):
    rows = _round_up(max(m, align), align)
    tm = min(tm_max, rows)
    rows = _round_up(rows, tm)
    return rows, tm


def matmul_bias_act(x, w, b, apply_relu=True, tm_max=256):
    """relu?(x @ w + b). x:(M,K) bf16, w:(K,N) bf16, b:(1,N) f32 -> (M,N) f32.

    Tiled over M (double-buffered DMA overlaps MXU), weights/bias resident,
    bias+ReLU epilogue fused in-kernel.
    """
    M, K = x.shape
    K2, N = w.shape
    assert K == K2
    Mp, tm = _row_tiling(M, tm_max)
    if Mp != M:
        x = jnp.pad(x, ((0, Mp - M), (0, 0)))
    kernel = functools.partial(_matmul_bias_act_kernel, apply_relu=apply_relu)
    out = pl.pallas_call(
        kernel,
        out_shape=jax.ShapeDtypeStruct((Mp, N), jnp.float32),
        grid=(Mp // tm,),
        in_specs=[
            pl.BlockSpec((tm, K), lambda i: (i, 0)),
            pl.BlockSpec((K, N), lambda i: (0, 0)),   # resident weight
            pl.BlockSpec((1, N), lambda i: (0, 0)),   # resident bias
        ],
        out_specs=pl.BlockSpec((tm, N), lambda i: (i, 0)),
        compiler_params=pltpu.CompilerParams(
            dimension_semantics=("parallel",),
            vmem_limit_bytes=_VMEM_LIMIT),
    )(x, w, b)
    return out[:M]


def maxpool2x2(x, tm_max=512):
    """2x2 max pool, stride 2, floor mode (drops odd trailing row/col)."""
    N, H, W, C = x.shape
    Hp, Wp = H // 2, W // 2
    xc = x[:, : 2 * Hp, : 2 * Wp, :]
    # glue: the 4 corners of every 2x2 window, flattened (layout plumbing only)
    corners = [
        xc[:, 0::2, 0::2, :].reshape(-1),
        xc[:, 0::2, 1::2, :].reshape(-1),
        xc[:, 1::2, 0::2, :].reshape(-1),
        xc[:, 1::2, 1::2, :].reshape(-1),
    ]
    M = corners[0].shape[0]
    rows = _round_up((M + _POOL_LANE - 1) // _POOL_LANE, 8)
    tm = min(tm_max, rows)
    rows = _round_up(rows, tm)
    Mp = rows * _POOL_LANE
    corners = [jnp.pad(v, (0, Mp - M)).reshape(rows, _POOL_LANE) for v in corners]
    out = pl.pallas_call(
        _maxpool_kernel,
        out_shape=jax.ShapeDtypeStruct((rows, _POOL_LANE), x.dtype),
        grid=(rows // tm,),
        in_specs=[pl.BlockSpec((tm, _POOL_LANE), lambda i: (i, 0))] * 4,
        out_specs=pl.BlockSpec((tm, _POOL_LANE), lambda i: (i, 0)),
        compiler_params=pltpu.CompilerParams(
            dimension_semantics=("parallel",),
            vmem_limit_bytes=_VMEM_LIMIT),
    )(*corners)
    return out.reshape(-1)[:M].reshape(N, Hp, Wp, C)


def conv2d_relu(x, w_mat, b, kh, kw):
    """VALID conv + bias + ReLU via im2col + tiled Pallas matmul.

    x:(N,H,W,Cin) f32; w_mat:(Kpad,Cout) bf16 with rows = (i*kw+j)*Cin + ci,
    zero-padded to a multiple of 8; b:(1,Cout) f32.
    """
    N, H, W, Cin = x.shape
    Ho, Wo = H - kh + 1, W - kw + 1
    # glue: im2col patch extraction (kept in XLA; see header comment).
    cols = []
    for i in range(kh):
        for j in range(kw):
            cols.append(x[:, i: i + Ho, j: j + Wo, :])
    patches = jnp.stack(cols, axis=3).reshape(N * Ho * Wo, kh * kw * Cin)
    patches = patches.astype(jnp.bfloat16)           # halve HBM traffic
    Kpad = w_mat.shape[0]
    if Kpad != kh * kw * Cin:
        patches = jnp.pad(patches, ((0, 0), (0, Kpad - kh * kw * Cin)))
    y = matmul_bias_act(patches, w_mat, b, apply_relu=True)
    return y.reshape(N, Ho, Wo, w_mat.shape[1])


def mlp_fused(x, w1, b1, w2, b2, w3, b3, tm_max=256):
    """One pallas_call for fc1->ReLU->fc2->ReLU->fc3; intermediates stay on-chip."""
    M, K = x.shape
    Mp, tm = _row_tiling(M, tm_max)
    if Mp != M:
        x = jnp.pad(x, ((0, Mp - M), (0, 0)))
    N_out = w3.shape[1]
    out = pl.pallas_call(
        _mlp_kernel,
        out_shape=jax.ShapeDtypeStruct((Mp, N_out), jnp.float32),
        grid=(Mp // tm,),
        in_specs=[
            pl.BlockSpec((tm, K), lambda i: (i, 0)),
            pl.BlockSpec(w1.shape, lambda i: (0, 0)),
            pl.BlockSpec(b1.shape, lambda i: (0, 0)),
            pl.BlockSpec(w2.shape, lambda i: (0, 0)),
            pl.BlockSpec(b2.shape, lambda i: (0, 0)),
            pl.BlockSpec(w3.shape, lambda i: (0, 0)),
            pl.BlockSpec(b3.shape, lambda i: (0, 0)),
        ],
        out_specs=pl.BlockSpec((tm, N_out), lambda i: (i, 0)),
        compiler_params=pltpu.CompilerParams(
            dimension_semantics=("parallel",),
            vmem_limit_bytes=_VMEM_LIMIT),
    )(x, w1, b1, w2, b2, w3, b3)
    return out[:M]


# --------------------------------------------------------------------------
# Parameters
# --------------------------------------------------------------------------
def init_params(key):
    """Random params in PyTorch layouts: conv (Cout,Cin,KH,KW), linear (out,in)."""
    ks = jax.random.split(key, 10)

    def nrm(k, shape, scale):
        return scale * jax.random.normal(k, shape, jnp.float32)

    return {
        "conv1_w": nrm(ks[0], (32, 1, 3, 3), 0.10),
        "conv1_b": nrm(ks[1], (32,), 0.10),
        "conv2_w": nrm(ks[2], (64, 32, 3, 3), 0.05),
        "conv2_b": nrm(ks[3], (64,), 0.05),
        "fc1_w": nrm(ks[4], (128, 64 * 5 * 5), 0.02),
        "fc1_b": nrm(ks[5], (128,), 0.02),
        "fc2_w": nrm(ks[6], (64, 128), 0.05),
        "fc2_b": nrm(ks[7], (64,), 0.05),
        "fc3_w": nrm(ks[8], (10, 64), 0.05),
        "fc3_b": nrm(ks[9], (10,), 0.05),
    }


def prepare_params(p):
    """One-time conversion of PyTorch-layout weights to kernel layouts:
       * conv weights -> (Kpad, Cout) bf16 matmul matrices (K zero-padded to x8)
       * fc1 rows permuted NCHW-flatten -> NHWC-flatten (folds the pre-MLP
         transpose into the weights; zero runtime relayout)
       * fc3 output columns padded 10 -> 128 for lane-dense stores
       * matmul weights bf16, biases f32 shaped (1, N)
    """
    out = {}

    def conv_mat(w):
        Cout, Cin, KH, KW = w.shape
        m = jnp.transpose(w, (2, 3, 1, 0)).reshape(KH * KW * Cin, Cout)
        Kpad = _round_up(KH * KW * Cin, 8)
        if Kpad != KH * KW * Cin:
            m = jnp.pad(m, ((0, Kpad - KH * KW * Cin), (0, 0)))
        return m.astype(jnp.bfloat16)

    out["conv1_w"] = conv_mat(p["conv1_w"])
    out["conv1_b"] = p["conv1_b"].reshape(1, -1).astype(jnp.float32)
    out["conv2_w"] = conv_mat(p["conv2_w"])
    out["conv2_b"] = p["conv2_b"].reshape(1, -1).astype(jnp.float32)

    # fc1 row permutation: NHWC flat index i=(h*5+w)*64+c reads PyTorch row c*25+h*5+w.
    C, Hs, Ws = 64, 5, 5
    idx = jnp.arange(C * Hs * Ws)
    h = idx // (Ws * C)
    wq = (idx // C) % Ws
    c = idx % C
    chw = c * (Hs * Ws) + h * Ws + wq
    w1 = p["fc1_w"].T                       # (1600, 128), rows in NCHW order
    out["fc1_w"] = w1[chw].astype(jnp.bfloat16)
    out["fc1_b"] = p["fc1_b"].reshape(1, -1).astype(jnp.float32)

    out["fc2_w"] = p["fc2_w"].T.astype(jnp.bfloat16)          # (128, 64)
    out["fc2_b"] = p["fc2_b"].reshape(1, -1).astype(jnp.float32)

    w3 = jnp.pad(p["fc3_w"].T, ((0, 0), (0, 128 - 10)))       # (64, 128)
    out["fc3_w"] = w3.astype(jnp.bfloat16)
    out["fc3_b"] = jnp.pad(p["fc3_b"], (0, 128 - 10)).reshape(1, -1).astype(jnp.float32)
    return out


# --------------------------------------------------------------------------
# Model
# --------------------------------------------------------------------------
def lenet_forward(kp, x_nchw):
    # NCHW (PyTorch) -> NHWC (internal); pure layout glue.
    x = jnp.transpose(x_nchw, (0, 2, 3, 1)).astype(jnp.float32)
    x = conv2d_relu(x, kp["conv1_w"], kp["conv1_b"], 3, 3)   # (N, 26, 26, 32)
    x = maxpool2x2(x)                                        # (N, 13, 13, 32)
    x = conv2d_relu(x, kp["conv2_w"], kp["conv2_b"], 3, 3)   # (N, 11, 11, 64)
    x = maxpool2x2(x)                                        # (N, 5, 5, 64)
    # NHWC flatten; the PyTorch NCHW-flatten ordering is folded into fc1_w.
    x = x.reshape(x.shape[0], -1).astype(jnp.bfloat16)       # (N, 1600)
    # Dropout(0.3) layers are identity at inference (eval mode).
    logits = mlp_fused(x, kp["fc1_w"], kp["fc1_b"],
                       kp["fc2_w"], kp["fc2_b"],
                       kp["fc3_w"], kp["fc3_b"])             # (N, 128) lane-dense
    return logits[:, :10]


if __name__ == "__main__":
    key = jax.random.PRNGKey(0)
    k_x, k_p = jax.random.split(key)
    # 28x28 input is required by the hard-coded 64*5*5 Linear in the module.
    x = jax.random.normal(k_x, (2, 1, 28, 28), jnp.float32)
    params = prepare_params(init_params(k_p))

    fwd = jax.jit(lenet_forward)
    out = jax.block_until_ready(fwd(params, x))
    assert out.shape == (2, 10)
    assert bool(jnp.all(jnp.isfinite(out)))
    print("KERNEL_OK")
</pallas_src>

<mosaic_0001>
module attributes {stable_mosaic.version = 11 : i64} {
  func.func @_matmul_bias_act_kernel(%arg0: i32, %arg1: memref<256x16xbf16, #tpu.memory_space<vmem>>, %arg2: memref<16x32xbf16, #tpu.memory_space<vmem>>, %arg3: memref<1x32xf32, #tpu.memory_space<vmem>>, %arg4: memref<256x32xf32, #tpu.memory_space<vmem>>) attributes {dimension_semantics = [#tpu.dimension_semantics<parallel>], iteration_bounds = array<i64: 6>, scalar_prefetch = 0 : i64, scratch_operands = 0 : i64, tpu.core_type = #tpu.core_type<tc>, window_params = [{transform_indices = @transform_0, window_bounds = array<i64: 256, 16>}, {pipeline_mode = #tpu.pipeline_mode<synchronous>, transform_indices = @transform_1, window_bounds = array<i64: 16, 32>}, {pipeline_mode = #tpu.pipeline_mode<synchronous>, transform_indices = @transform_2, window_bounds = array<i64: 1, 32>}, {transform_indices = @transform_3, window_bounds = array<i64: 256, 32>}]} {
    %c0 = arith.constant 0 : index
    %c0_0 = arith.constant 0 : index
    %0 = vector.load %arg1[%c0, %c0_0] : memref<256x16xbf16, #tpu.memory_space<vmem>>, vector<256x16xbf16>
    %c0_1 = arith.constant 0 : index
    %c0_2 = arith.constant 0 : index
    %1 = vector.load %arg2[%c0_1, %c0_2] : memref<16x32xbf16, #tpu.memory_space<vmem>>, vector<16x32xbf16>
    %cst = arith.constant dense<0.000000e+00> : vector<256x32xf32>
    %2 = tpu.matmul %0, %1, %cst {dimension_numbers = #tpu.dot_dimension_numbers<[1], [0], [0], [1], [0, 0, 1, 1], [], []>} : vector<256x16xbf16>, vector<16x32xbf16>, vector<256x32xf32> -> vector<256x32xf32>
    %c0_3 = arith.constant 0 : index
    %c0_4 = arith.constant 0 : index
    %3 = vector.load %arg3[%c0_3, %c0_4] : memref<1x32xf32, #tpu.memory_space<vmem>>, vector<1x32xf32>
    %4 = vector.broadcast %3 : vector<1x32xf32> to vector<256x32xf32>
    %5 = arith.addf %2, %4 : vector<256x32xf32>
    %cst_5 = arith.constant 0.000000e+00 : f32
    %6 = vector.broadcast %cst_5 : f32 to vector<256x32xf32>
    %7 = arith.maximumf %5, %6 : vector<256x32xf32>
    %c0_6 = arith.constant 0 : index
    %c0_7 = arith.constant 0 : index
    %8 = vector.load %arg4[%c0_6, %c0_7] : memref<256x32xf32, #tpu.memory_space<vmem>>, vector<256x32xf32>
    tpu.vector_store %arg4[%c0_6, %c0_7], %7 {strides = array<i32>} : memref<256x32xf32, #tpu.memory_space<vmem>>, vector<256x32xf32>,
    return
  }
  func.func @transform_0(%arg0: i32) -> (i32, i32) {
    %c0_i32 = arith.constant 0 : i32
    %c0_i32_0 = arith.constant 0 : i32
    return %arg0, %c0_i32 : i32, i32
  }
  func.func @transform_1(%arg0: i32) -> (i32, i32) {
    %c0_i32 = arith.constant 0 : i32
    %c0_i32_0 = arith.constant 0 : i32
    %c0_i32_1 = arith.constant 0 : i32
    return %c0_i32, %c0_i32_0 : i32, i32
  }
  func.func @transform_2(%arg0: i32) -> (i32, i32) {
    %c0_i32 = arith.constant 0 : i32
    %c0_i32_0 = arith.constant 0 : i32
    %c0_i32_1 = arith.constant 0 : i32
    return %c0_i32, %c0_i32_0 : i32, i32
  }
  func.func @transform_3(%arg0: i32) -> (i32, i32) {
    %c0_i32 = arith.constant 0 : i32
    %c0_i32_0 = arith.constant 0 : i32
    return %arg0, %c0_i32 : i32, i32
  }
}

module attributes {stable_mosaic.version = 11 : i64} {
  func.func @_maxpool_kernel(%arg0: i32, %arg1: memref<88x128xf32, #tpu.memory_space<vmem>>, %arg2: memref<88x128xf32, #tpu.memory_space<vmem>>, %arg3: memref<88x128xf32, #tpu.memory_space<vmem>>, %arg4: memref<88x128xf32, #tpu.memory_space<vmem>>, %arg5: memref<88x128xf32, #tpu.memory_space<vmem>>) attributes {dimension_semantics = [#tpu.dimension_semantics<parallel>], iteration_bounds = array<i64: 1>, scalar_prefetch = 0 : i64, scratch_operands = 0 : i64, tpu.core_type = #tpu.core_type<tc>, window_params = [{transform_indices = @transform_0, window_bounds = array<i64: 88, 128>}, {transform_indices = @transform_1, window_bounds = array<i64: 88, 128>}, {transform_indices = @transform_2, window_bounds = array<i64: 88, 128>}, {transform_indices = @transform_3, window_bounds = array<i64: 88, 128>}, {transform_indices = @transform_4, window_bounds = array<i64: 88, 128>}]} {
    %c0 = arith.constant 0 : index
    %c0_0 = arith.constant 0 : index
    %0 = vector.load %arg1[%c0, %c0_0] : memref<88x128xf32, #tpu.memory_space<vmem>>, vector<88x128xf32>
    %c0_1 = arith.constant 0 : index
    %c0_2 = arith.constant 0 : index
    %1 = vector.load %arg2[%c0_1, %c0_2] : memref<88x128xf32, #tpu.memory_space<vmem>>, vector<88x128xf32>
    %2 = arith.maximumf %0, %1 : vector<88x128xf32>
    %c0_3 = arith.constant 0 : index
    %c0_4 = arith.constant 0 : index
    %3 = vector.load %arg3[%c0_3, %c0_4] : memref<88x128xf32, #tpu.memory_space<vmem>>, vector<88x128xf32>
    %c0_5 = arith.constant 0 : index
    %c0_6 = arith.constant 0 : index
    %4 = vector.load %arg4[%c0_5, %c0_6] : memref<88x128xf32, #tpu.memory_space<vmem>>, vector<88x128xf32>
    %5 = arith.maximumf %3, %4 : vector<88x128xf32>
    %6 = arith.maximumf %2, %5 : vector<88x128xf32>
    %c0_7 = arith.constant 0 : index
    %c0_8 = arith.constant 0 : index
    %7 = vector.load %arg5[%c0_7, %c0_8] : memref<88x128xf32, #tpu.memory_space<vmem>>, vector<88x128xf32>
    tpu.vector_store %arg5[%c0_7, %c0_8], %6 {strides = array<i32>} : memref<88x128xf32, #tpu.memory_space<vmem>>, vector<88x128xf32>,
    return
  }
  func.func @transform_0(%arg0: i32) -> (i32, i32) {
    %c0_i32 = arith.constant 0 : i32
    %c0_i32_0 = arith.constant 0 : i32
    return %arg0, %c0_i32 : i32, i32
  }
  func.func @transform_1(%arg0: i32) -> (i32, i32) {
    %c0_i32 = arith.constant 0 : i32
    %c0_i32_0 = arith.constant 0 : i32
    return %arg0, %c0_i32 : i32, i32
  }
  func.func @transform_2(%arg0: i32) -> (i32, i32) {
    %c0_i32 = arith.constant 0 : i32
    %c0_i32_0 = arith.constant 0 : i32
    return %arg0, %c0_i32 : i32, i32
  }
  func.func @transform_3(%arg0: i32) -> (i32, i32) {
    %c0_i32 = arith.constant 0 : i32
    %c0_i32_0 = arith.constant 0 : i32
    return %arg0, %c0_i32 : i32, i32
  }
  func.func @transform_4(%arg0: i32) -> (i32, i32) {
    %c0_i32 = arith.constant 0 : i32
    %c0_i32_0 = arith.constant 0 : i32
    return %arg0, %c0_i32 : i32, i32
  }
}

module attributes {stable_mosaic.version = 11 : i64} {
  func.func @_matmul_bias_act_kernel(%arg0: i32, %arg1: memref<256x288xbf16, #tpu.memory_space<vmem>>, %arg2: memref<288x64xbf16, #tpu.memory_space<vmem>>, %arg3: memref<1x64xf32, #tpu.memory_space<vmem>>, %arg4: memref<256x64xf32, #tpu.memory_space<vmem>>) attributes {dimension_semantics = [#tpu.dimension_semantics<parallel>], iteration_bounds = array<i64: 1>, scalar_prefetch = 0 : i64, scratch_operands = 0 : i64, tpu.core_type = #tpu.core_type<tc>, window_params = [{transform_indices = @transform_0, window_bounds = array<i64: 256, 288>}, {pipeline_mode = #tpu.pipeline_mode<synchronous>, transform_indices = @transform_1, window_bounds = array<i64: 288, 64>}, {pipeline_mode = #tpu.pipeline_mode<synchronous>, transform_indices = @transform_2, window_bounds = array<i64: 1, 64>}, {transform_indices = @transform_3, window_bounds = array<i64: 256, 64>}]} {
    %c0 = arith.constant 0 : index
    %c0_0 = arith.constant 0 : index
    %0 = vector.load %arg1[%c0, %c0_0] : memref<256x288xbf16, #tpu.memory_space<vmem>>, vector<256x288xbf16>
    %c0_1 = arith.constant 0 : index
    %c0_2 = arith.constant 0 : index
    %1 = vector.load %arg2[%c0_1, %c0_2] : memref<288x64xbf16, #tpu.memory_space<vmem>>, vector<288x64xbf16>
    %cst = arith.constant dense<0.000000e+00> : vector<256x64xf32>
    %2 = tpu.matmul %0, %1, %cst {dimension_numbers = #tpu.dot_dimension_numbers<[1], [0], [0], [1], [0, 0, 1, 1], [], []>} : vector<256x288xbf16>, vector<288x64xbf16>, vector<256x64xf32> -> vector<256x64xf32>
    %c0_3 = arith.constant 0 : index
    %c0_4 = arith.constant 0 : index
    %3 = vector.load %arg3[%c0_3, %c0_4] : memref<1x64xf32, #tpu.memory_space<vmem>>, vector<1x64xf32>
    %4 = vector.broadcast %3 : vector<1x64xf32> to vector<256x64xf32>
    %5 = arith.addf %2, %4 : vector<256x64xf32>
    %cst_5 = arith.constant 0.000000e+00 : f32
    %6 = vector.broadcast %cst_5 : f32 to vector<256x64xf32>
    %7 = arith.maximumf %5, %6 : vector<256x64xf32>
    %c0_6 = arith.constant 0 : index
    %c0_7 = arith.constant 0 : index
    %8 = vector.load %arg4[%c0_6, %c0_7] : memref<256x64xf32, #tpu.memory_space<vmem>>, vector<256x64xf32>
    tpu.vector_store %arg4[%c0_6, %c0_7], %7 {strides = array<i32>} : memref<256x64xf32, #tpu.memory_space<vmem>>, vector<256x64xf32>,
    return
  }
  func.func @transform_0(%arg0: i32) -> (i32, i32) {
    %c0_i32 = arith.constant 0 : i32
    %c0_i32_0 = arith.constant 0 : i32
    return %arg0, %c0_i32 : i32, i32
  }
  func.func @transform_1(%arg0: i32) -> (i32, i32) {
    %c0_i32 = arith.constant 0 : i32
    %c0_i32_0 = arith.constant 0 : i32
    %c0_i32_1 = arith.constant 0 : i32
    return %c0_i32, %c0_i32_0 : i32, i32
  }
  func.func @transform_2(%arg0: i32) -> (i32, i32) {
    %c0_i32 = arith.constant 0 : i32
    %c0_i32_0 = arith.constant 0 : i32
    %c0_i32_1 = arith.constant 0 : i32
    return %c0_i32, %c0_i32_0 : i32, i32
  }
  func.func @transform_3(%arg0: i32) -> (i32, i32) {
    %c0_i32 = arith.constant 0 : i32
    %c0_i32_0 = arith.constant 0 : i32
    return %arg0, %c0_i32 : i32, i32
  }
}

module attributes {stable_mosaic.version = 11 : i64} {
  func.func @_maxpool_kernel(%arg0: i32, %arg1: memref<32x128xf32, #tpu.memory_space<vmem>>, %arg2: memref<32x128xf32, #tpu.memory_space<vmem>>, %arg3: memref<32x128xf32, #tpu.memory_space<vmem>>, %arg4: memref<32x128xf32, #tpu.memory_space<vmem>>, %arg5: memref<32x128xf32, #tpu.memory_space<vmem>>) attributes {dimension_semantics = [#tpu.dimension_semantics<parallel>], iteration_bounds = array<i64: 1>, scalar_prefetch = 0 : i64, scratch_operands = 0 : i64, tpu.core_type = #tpu.core_type<tc>, window_params = [{transform_indices = @transform_0, window_bounds = array<i64: 32, 128>}, {transform_indices = @transform_1, window_bounds = array<i64: 32, 128>}, {transform_indices = @transform_2, window_bounds = array<i64: 32, 128>}, {transform_indices = @transform_3, window_bounds = array<i64: 32, 128>}, {transform_indices = @transform_4, window_bounds = array<i64: 32, 128>}]} {
    %c0 = arith.constant 0 : index
    %c0_0 = arith.constant 0 : index
    %0 = vector.load %arg1[%c0, %c0_0] : memref<32x128xf32, #tpu.memory_space<vmem>>, vector<32x128xf32>
    %c0_1 = arith.constant 0 : index
    %c0_2 = arith.constant 0 : index
    %1 = vector.load %arg2[%c0_1, %c0_2] : memref<32x128xf32, #tpu.memory_space<vmem>>, vector<32x128xf32>
    %2 = arith.maximumf %0, %1 : vector<32x128xf32>
    %c0_3 = arith.constant 0 : index
    %c0_4 = arith.constant 0 : index
    %3 = vector.load %arg3[%c0_3, %c0_4] : memref<32x128xf32, #tpu.memory_space<vmem>>, vector<32x128xf32>
    %c0_5 = arith.constant 0 : index
    %c0_6 = arith.constant 0 : index
    %4 = vector.load %arg4[%c0_5, %c0_6] : memref<32x128xf32, #tpu.memory_space<vmem>>, vector<32x128xf32>
    %5 = arith.maximumf %3, %4 : vector<32x128xf32>
    %6 = arith.maximumf %2, %5 : vector<32x128xf32>
    %c0_7 = arith.constant 0 : index
    %c0_8 = arith.constant 0 : index
    %7 = vector.load %arg5[%c0_7, %c0_8] : memref<32x128xf32, #tpu.memory_space<vmem>>, vector<32x128xf32>
    tpu.vector_store %arg5[%c0_7, %c0_8], %6 {strides = array<i32>} : memref<32x128xf32, #tpu.memory_space<vmem>>, vector<32x128xf32>,
    return
  }
  func.func @transform_0(%arg0: i32) -> (i32, i32) {
    %c0_i32 = arith.constant 0 : i32
    %c0_i32_0 = arith.constant 0 : i32
    return %arg0, %c0_i32 : i32, i32
  }
  func.func @transform_1(%arg0: i32) -> (i32, i32) {
    %c0_i32 = arith.constant 0 : i32
    %c0_i32_0 = arith.constant 0 : i32
    return %arg0, %c0_i32 : i32, i32
  }
  func.func @transform_2(%arg0: i32) -> (i32, i32) {
    %c0_i32 = arith.constant 0 : i32
    %c0_i32_0 = arith.constant 0 : i32
    return %arg0, %c0_i32 : i32, i32
  }
  func.func @transform_3(%arg0: i32) -> (i32, i32) {
    %c0_i32 = arith.constant 0 : i32
    %c0_i32_0 = arith.constant 0 : i32
    return %arg0, %c0_i32 : i32, i32
  }
  func.func @transform_4(%arg0: i32) -> (i32, i32) {
    %c0_i32 = arith.constant 0 : i32
    %c0_i32_0 = arith.constant 0 : i32
    return %arg0, %c0_i32 : i32, i32
  }
}

module attributes {stable_mosaic.version = 11 : i64} {
  func.func @_mlp_kernel(%arg0: i32, %arg1: memref<16x1600xbf16, #tpu.memory_space<vmem>>, %arg2: memref<1600x128xbf16, #tpu.memory_space<vmem>>, %arg3: memref<1x128xf32, #tpu.memory_space<vmem>>, %arg4: memref<128x64xbf16, #tpu.memory_space<vmem>>, %arg5: memref<1x64xf32, #tpu.memory_space<vmem>>, %arg6: memref<64x128xbf16, #tpu.memory_space<vmem>>, %arg7: memref<1x128xf32, #tpu.memory_space<vmem>>, %arg8: memref<16x128xf32, #tpu.memory_space<vmem>>) attributes {dimension_semantics = [#tpu.dimension_semantics<parallel>], iteration_bounds = array<i64: 1>, scalar_prefetch = 0 : i64, scratch_operands = 0 : i64, tpu.core_type = #tpu.core_type<tc>, window_params = [{transform_indices = @transform_0, window_bounds = array<i64: 16, 1600>}, {pipeline_mode = #tpu.pipeline_mode<synchronous>, transform_indices = @transform_1, window_bounds = array<i64: 1600, 128>}, {pipeline_mode = #tpu.pipeline_mode<synchronous>, transform_indices = @transform_2, window_bounds = array<i64: 1, 128>}, {pipeline_mode = #tpu.pipeline_mode<synchronous>, transform_indices = @transform_3, window_bounds = array<i64: 128, 64>}, {pipeline_mode = #tpu.pipeline_mode<synchronous>, transform_indices = @transform_4, window_bounds = array<i64: 1, 64>}, {pipeline_mode = #tpu.pipeline_mode<synchronous>, transform_indices = @transform_5, window_bounds = array<i64: 64, 128>}, {pipeline_mode = #tpu.pipeline_mode<synchronous>, transform_indices = @transform_6, window_bounds = array<i64: 1, 128>}, {transform_indices = @transform_7, window_bounds = array<i64: 16, 128>}]} {
    %c0 = arith.constant 0 : index
    %c0_0 = arith.constant 0 : index
    %0 = vector.load %arg1[%c0, %c0_0] : memref<16x1600xbf16, #tpu.memory_space<vmem>>, vector<16x1600xbf16>
    %c0_1 = arith.constant 0 : index
    %c0_2 = arith.constant 0 : index
    %1 = vector.load %arg2[%c0_1, %c0_2] : memref<1600x128xbf16, #tpu.memory_space<vmem>>, vector<1600x128xbf16>
    %cst = arith.constant dense<0.000000e+00> : vector<16x128xf32>
    %2 = tpu.matmul %0, %1, %cst {dimension_numbers = #tpu.dot_dimension_numbers<[1], [0], [0], [1], [0, 0, 1, 1], [], []>} : vector<16x1600xbf16>, vector<1600x128xbf16>, vector<16x128xf32> -> vector<16x128xf32>
    %c0_3 = arith.constant 0 : index
    %c0_4 = arith.constant 0 : index
    %3 = vector.load %arg3[%c0_3, %c0_4] : memref<1x128xf32, #tpu.memory_space<vmem>>, vector<1x128xf32>
    %4 = vector.broadcast %3 : vector<1x128xf32> to vector<16x128xf32>
    %5 = arith.addf %2, %4 : vector<16x128xf32>
    %cst_5 = arith.constant 0.000000e+00 : f32
    %6 = vector.broadcast %cst_5 : f32 to vector<16x128xf32>
    %7 = arith.maximumf %5, %6 : vector<16x128xf32>
    %8 = arith.truncf %7 : vector<16x128xf32> to vector<16x128xbf16>
    %c0_6 = arith.constant 0 : index
    %c0_7 = arith.constant 0 : index
    %9 = vector.load %arg4[%c0_6, %c0_7] : memref<128x64xbf16, #tpu.memory_space<vmem>>, vector<128x64xbf16>
    %cst_8 = arith.constant dense<0.000000e+00> : vector<16x64xf32>
    %10 = tpu.matmul %8, %9, %cst_8 {dimension_numbers = #tpu.dot_dimension_numbers<[1], [0], [0], [1], [0, 0, 1, 1], [], []>} : vector<16x128xbf16>, vector<128x64xbf16>, vector<16x64xf32> -> vector<16x64xf32>
    %c0_9 = arith.constant 0 : index
    %c0_10 = arith.constant 0 : index
    %11 = vector.load %arg5[%c0_9, %c0_10] : memref<1x64xf32, #tpu.memory_space<vmem>>, vector<1x64xf32>
    %12 = vector.broadcast %11 : vector<1x64xf32> to vector<16x64xf32>
    %13 = arith.addf %10, %12 : vector<16x64xf32>
    %cst_11 = arith.constant 0.000000e+00 : f32
    %14 = vector.broadcast %cst_11 : f32 to vector<16x64xf32>
    %15 = arith.maximumf %13, %14 : vector<16x64xf32>
    %16 = arith.truncf %15 : vector<16x64xf32> to vector<16x64xbf16>
    %c0_12 = arith.constant 0 : index
    %c0_13 = arith.constant 0 : index
    %17 = vector.load %arg6[%c0_12, %c0_13] : memref<64x128xbf16, #tpu.memory_space<vmem>>, vector<64x128xbf16>
    %cst_14 = arith.constant dense<0.000000e+00> : vector<16x128xf32>
    %18 = tpu.matmul %16, %17, %cst_14 {dimension_numbers = #tpu.dot_dimension_numbers<[1], [0], [0], [1], [0, 0, 1, 1], [], []>} : vector<16x64xbf16>, vector<64x128xbf16>, vector<16x128xf32> -> vector<16x128xf32>
    %c0_15 = arith.constant 0 : index
    %c0_16 = arith.constant 0 : index
    %19 = vector.load %arg7[%c0_15, %c0_16] : memref<1x128xf32, #tpu.memory_space<vmem>>, vector<1x128xf32>
    %20 = vector.broadcast %19 : vector<1x128xf32> to vector<16x128xf32>
    %21 = arith.addf %18, %20 : vector<16x128xf32>
    %c0_17 = arith.constant 0 : index
    %c0_18 = arith.constant 0 : index
    %22 = vector.load %arg8[%c0_17, %c0_18] : memref<16x128xf32, #tpu.memory_space<vmem>>, vector<16x128xf32>
    tpu.vector_store %arg8[%c0_17, %c0_18], %21 {strides = array<i32>} : memref<16x128xf32, #tpu.memory_space<vmem>>, vector<16x128xf32>,
    return
  }
  func.func @transform_0(%arg0: i32) -> (i32, i32) {
    %c0_i32 = arith.constant 0 : i32
    %c0_i32_0 = arith.constant 0 : i32
    return %arg0, %c0_i32 : i32, i32
  }
  func.func @transform_1(%arg0: i32) -> (i32, i32) {
    %c0_i32 = arith.constant 0 : i32
    %c0_i32_0 = arith.constant 0 : i32
    %c0_i32_1 = arith.constant 0 : i32
    return %c0_i32, %c0_i32_0 : i32, i32
  }
  func.func @transform_2(%arg0: i32) -> (i32, i32) {
    %c0_i32 = arith.constant 0 : i32
    %c0_i32_0 = arith.constant 0 : i32
    %c0_i32_1 = arith.constant 0 : i32
    return %c0_i32, %c0_i32_0 : i32, i32
  }
  func.func @transform_3(%arg0: i32) -> (i32, i32) {
    %c0_i32 = arith.constant 0 : i32
    %c0_i32_0 = arith.constant 0 : i32
    %c0_i32_1 = arith.constant 0 : i32
    return %c0_i32, %c0_i32_0 : i32, i32
  }
  func.func @transform_4(%arg0: i32) -> (i32, i32) {
    %c0_i32 = arith.constant 0 : i32
    %c0_i32_0 = arith.constant 0 : i32
    %c0_i32_1 = arith.constant 0 : i32
    return %c0_i32, %c0_i32_0 : i32, i32
  }
  func.func @transform_5(%arg0: i32) -> (i32, i32) {
    %c0_i32 = arith.constant 0 : i32
    %c0_i32_0 = arith.constant 0 : i32
    %c0_i32_1 = arith.constant 0 : i32
    return %c0_i32, %c0_i32_0 : i32, i32
  }
  func.func @transform_6(%arg0: i32) -> (i32, i32) {
    %c0_i32 = arith.constant 0 : i32
    %c0_i32_0 = arith.constant 0 : i32
    %c0_i32_1 = arith.constant 0 : i32
    return %c0_i32, %c0_i32_0 : i32, i32
  }
  func.func @transform_7(%arg0: i32) -> (i32, i32) {
    %c0_i32 = arith.constant 0 : i32
    %c0_i32_0 = arith.constant 0 : i32
    return %arg0, %c0_i32 : i32, i32
  }
}

</mosaic_0001>

<llo_original>
// kernel: lenet_forward.5
$region0: #{lenet_forward.5}
  #allocation0 [shape = 'u32[]', space=smem, size = 0x4, offset = 0x4, fixed_abs, tag = 'smem constant byte address 0x4 - core index']
  #allocation1 [shape = 'u32[144,128]{1,0:T(1,128)}', space=vmem, size = 0x12000, scoped, tag = 'internal scratch']
  %s0 = inlined_call_operand.vmem [shape: bf16[1536,16], index: 0, kind: input, shape index: {}]
  %s1 = inlined_call_operand.vmem [shape: bf16[16,32], index: 1, kind: input, shape index: {}]
  %s2 = inlined_call_operand.vmem [shape: f32[1,32], index: 2, kind: input, shape index: {}]
  %s3 = inlined_call_operand.vmem [shape: f32[1536,32], index: 3, kind: output, shape index: {}]
  %s4 = sld [smem:[#allocation0]]
  $region45: #{lenet_forward.5} parent=0
    _
  %s6 = ssub.s32 1, %s4
  %s7 = scalar_select 0, %s6, %s4
  loop: start=0, step=1, limit=8
  $region2: #{lenet_forward.5} parent=0 // loop_pre_header
    _
  $region3: #{lenet_forward.5} parent=0 // loop_header
    %s9 = sphi 0, %s13
    %p10 = scmp.ge.s32.totalorder %s9, 8
    %s19 = sphi 0, %s21
    %s22 = sphi 0, %s19
    %s23 = sphi 0, %s22
    %s39 = sphi 0, %s23
    %s43 = sphi 0, %s43
    %s45 = sphi 0, %s43
    %s46 = sphi 0, %s45
    %s60 = sphi 0, %s46
    %s64 = sphi 0, %s64
    %s66 = sphi 0, %s64
    %s67 = sphi 0, %s66
    %s81 = sphi 0, %s67
    %s87 = sphi 0, %s89
    %s90 = sphi 0, %s87
    %s91 = sphi 0, %s90
    %s107 = sphi 0, %s91
  $region4: #{lenet_forward.5} parent=0 // loop_header_branch
    %12 = sbr.rel (%p10) target = $region8
  $region5: #{lenet_forward.5} parent=0 // loop_body
    %s14 = ssub.s32 %s9, 1
    %s15 = ssub.s32 %s9, 2
    %s16 = sadd.s32 %s9, 1
    %s17 = ssub.s32 %s9, %s16
    %p18 = scmp.eq.s32.totalorder %s17, 0
    %s20 = sadd.s32 %s19, 1
    %s21 = scalar_select %p18, %s19, %s20
    %p24 = pneg %p18
    %p25 = scmp.eq.s32.totalorder %s9, 5
    %p26 = por %p24, %p25
    %p27 = scmp.ne.s32.totalorder %s19, %s22
    %p28 = scmp.eq.s32.totalorder %s9, 0
    %p29 = por %p27, %p28
    %p30 = scmp.ne.s32.totalorder %s19, %s22
    %p31 = scmp.eq.s32.totalorder %s14, 5
    %p32 = por %p30, %p31
    %p33 = scmp.ne.s32.totalorder %s22, %s23
    %p34 = scmp.eq.s32.totalorder %s14, 0
    %p35 = por %p33, %p34
    %p36 = scmp.ne.s32.totalorder %s22, %s23
    %p37 = scmp.eq.s32.totalorder %s15, 5
    %p38 = por %p36, %p37
    %p40 = scmp.ne.s32.totalorder %s23, %s39
    %p41 = scmp.eq.s32.totalorder %s15, 0
    %p42 = por %p40, %p41
    %s44 = sadd.s32 %s43, 1
    %p47 = scmp.eq.s32.totalorder %s9, 5
    %p48 = scmp.ne.s32.totalorder %s43, %s45
    %p49 = scmp.eq.s32.totalorder %s9, 0
    %p50 = por %p48, %p49
    %p51 = scmp.ne.s32.totalorder %s43, %s45
    %p52 = scmp.eq.s32.totalorder %s14, 5
    %p53 = por %p51, %p52
    %p54 = scmp.ne.s32.totalorder %s45, %s46
    %p55 = scmp.eq.s32.totalorder %s14, 0
    %p56 = por %p54, %p55
    %p57 = scmp.ne.s32.totalorder %s45, %s46
    %p58 = scmp.eq.s32.totalorder %s15, 5
    %p59 = por %p57, %p58
    %p61 = scmp.ne.s32.totalorder %s46, %s60
    %p62 = scmp.eq.s32.totalorder %s15, 0
    %p63 = por %p61, %p62
    %s65 = sadd.s32 %s64, 1
    %p68 = scmp.eq.s32.totalorder %s9, 5
    %p69 = scmp.ne.s32.totalorder %s64, %s66
    %p70 = scmp.eq.s32.totalorder %s9, 0
    %p71 = por %p69, %p70
    %p72 = scmp.ne.s32.totalorder %s64, %s66
    %p73 = scmp.eq.s32.totalorder %s14, 5
    %p74 = por %p72, %p73
    %p75 = scmp.ne.s32.totalorder %s66, %s67
    %p76 = scmp.eq.s32.totalorder %s14, 0
    %p77 = por %p75, %p76
    %p78 = scmp.ne.s32.totalorder %s66, %s67
    %p79 = scmp.eq.s32.totalorder %s15, 5
    %p80 = por %p78, %p79
    %p82 = scmp.ne.s32.totalorder %s67, %s81
    %p83 = scmp.eq.s32.totalorder %s15, 0
    %p84 = por %p82, %p83
    %s85 = ssub.s32 %s9, %s16
    %p86 = scmp.eq.s32.totalorder %s85, 0
    %s88 = sadd.s32 %s87, 1
    %s89 = scalar_select %p86, %s87, %s88
    %p92 = pneg %p86
    %p93 = scmp.eq.s32.totalorder %s9, 5
    %p94 = por %p92, %p93
    %p95 = scmp.ne.s32.totalorder %s87, %s90
    %p96 = scmp.eq.s32.totalorder %s9, 0
    %p97 = por %p95, %p96
    %p98 = scmp.ne.s32.totalorder %s87, %s90
    %p99 = scmp.eq.s32.totalorder %s14, 5
    %p100 = por %p98, %p99
    %p101 = scmp.ne.s32.totalorder %s90, %s91
    %p102 = scmp.eq.s32.totalorder %s14, 0
    %p103 = por %p101, %p102
    %p104 = scmp.ne.s32.totalorder %s90, %s91
    %p105 = scmp.eq.s32.totalorder %s15, 5
    %p106 = por %p104, %p105
    %p108 = scmp.ne.s32.totalorder %s91, %s107
    %p109 = scmp.eq.s32.totalorder %s15, 0
    %p110 = por %p108, %p109
    %p111 = scmp.le.s32.totalorder 1, %s9
    %p112 = scmp.lt.s32.totalorder %s9, 7
    %p113 = pnand %p111, %p112
    %p114 = pneg %p113
    // Predicated region
    $region9: #{lenet_forward.5} parent=5 // pred_check
      _
    $region10: #{lenet_forward.5} parent=5 // pred_check_branch
      %116 = sbr.rel (%p113) target = $region12
    $region11: #{lenet_forward.5} parent=5 // pred_region
      %s117 = ssub.s32 %s9, 1
      // Predicated region
      $region13: #{lenet_forward.5} parent=11 // pred_check
        %p118 = pneg %p56
      $region14: #{lenet_forward.5} parent=11 // pred_check_branch
        %120 = sbr.rel (%p118) target = $region16
      $region15: #{lenet_forward.5} parent=11 // pred_region
        _
      $region16: #{lenet_forward.5} parent=11 // pred_fallthru
        _
      // Predicated region
      $region17: #{lenet_forward.5} parent=11 // pred_check
        %p121 = pneg %p77
      $region18: #{lenet_forward.5} parent=11 // pred_check_branch
        %123 = sbr.rel (%p121) target = $region20
      $region19: #{lenet_forward.5} parent=11 // pred_region
        _
      $region20: #{lenet_forward.5} parent=11 // pred_fallthru
        _
    $region12: #{lenet_forward.5} parent=5 // pred_fallthru
      _
    %p124 = scmp.lt.s32.totalorder %s9, 6
    // Predicated region
    $region21: #{lenet_forward.5} parent=5 // pred_check
      %p125 = pneg %p124
    $region22: #{lenet_forward.5} parent=5 // pred_check_branch
      %127 = sbr.rel (%p125) target = $region24
    $region23: #{lenet_forward.5} parent=5 // pred_region
      // Predicated region
      $region25: #{lenet_forward.5} parent=23 // pred_check
        %p128 = pneg %p29
      $region26: #{lenet_forward.5} parent=23 // pred_check_branch
        %130 = sbr.rel (%p128) target = $region28
      $region27: #{lenet_forward.5} parent=23 // pred_region
        %s131 = smul.u32 32, %s9
        %p132 = scmp.lt.s32.totalorder %s131, 191
        %s133 = scalar_select %p132, %s131, 191
        %s134 = smul.addr %s133, 4
        %s135 = scalar_lea.vmem %s0, %s134
        %s136 = smul.u32 32, %s9
      $region28: #{lenet_forward.5} parent=23 // pred_fallthru
        _
    $region24: #{lenet_forward.5} parent=5 // pred_fallthru
      _
    %p137 = scmp.le.s32.totalorder 1, %s9
    %p138 = scmp.lt.s32.totalorder %s9, 7
    %p139 = pnand %p137, %p138
    %p140 = pneg %p139
    // Predicated region
    $region29: #{lenet_forward.5} parent=5 // pred_check
      _
    $region30: #{lenet_forward.5} parent=5 // pred_check_branch
      %142 = sbr.rel (%p139) target = $region32
    $region31: #{lenet_forward.5} parent=5 // pred_region
      %s143 = ssub.s32 %s9, 1
      %s144 = smul.u32 32, %s14
      %p145 = scmp.lt.s32.totalorder %s144, 191
      %s146 = scalar_select %p145, %s144, 191
      %s147 = smul.addr %s146, 4
      %s148 = scalar_lea.vmem %s0, %s147
      %p149 = pneg %p35
      %p150 = pneg %p32
      %p151 = pneg %p56
      %p152 = pneg %p53
      %p153 = pneg %p77
      %p154 = pneg %p74
      %p155 = pneg %p103
      %p156 = pneg %p100
      %s157 = smul.u32 32, %s14
      %p158 = scmp.lt.s32.totalorder %s157, 191
      %s159 = scalar_select %p158, %s157, 191
      %s160 = smul.addr %s159, 8
      %s161 = scalar_lea.vmem %s3, %s160
      %s162 = smul.u32 32, %s14
      %p163 = scmp.lt.s32.totalorder %s162, 191
      %s164 = scalar_select %p163, %s162, 191
      %s165 = smul.addr %s164, 4
      %s166 = scalar_lea.vmem %s0, %s165
      %s167 = smul.u32 32, %s14
      %s168 = smul.u32 32, %s14
      %p169 = scmp.lt.s32.totalorder %s168, 191
      %s170 = scalar_select %p169, %s168, 191
      %s171 = smul.addr %s170, 8
      %s172 = scalar_lea.vmem %s3, %s171
      %s173 = smul.u32 32, %s14
      %v175 = vld [vmem:[%s166] sm:$0xf]
      %v176 = vld [vmem:[%s166 + $0x4] sm:$0xf]
      %v177 = vld [vmem:[%s166 + $0x8] sm:$0xf]
      %v178 = vld [vmem:[%s166 + $0xc] sm:$0xf]
      %v179 = vld [vmem:[%s166 + $0x10] sm:$0xf]
      %v180 = vld [vmem:[%s166 + $0x14] sm:$0xf]
      %v181 = vld [vmem:[%s166 + $0x18] sm:$0xf]
      %v182 = vld [vmem:[%s166 + $0x1c] sm:$0xf]
      %v183 = vld [vmem:[%s166 + $0x20] sm:$0xf]
      %v184 = vld [vmem:[%s166 + $0x24] sm:$0xf]
      %v185 = vld [vmem:[%s166 + $0x28] sm:$0xf]
      %v186 = vld [vmem:[%s166 + $0x2c] sm:$0xf]
      %v187 = vld [vmem:[%s166 + $0x30] sm:$0xf]
      %v188 = vld [vmem:[%s166 + $0x34] sm:$0xf]
      %v189 = vld [vmem:[%s166 + $0x38] sm:$0xf]
      %v190 = vld [vmem:[%s166 + $0x3c] sm:$0xf]
      %v191 = vld [vmem:[%s166 + $0x40] sm:$0xf]
      %v192 = vld [vmem:[%s166 + $0x44] sm:$0xf]
      %v193 = vld [vmem:[%s166 + $0x48] sm:$0xf]
      %v194 = vld [vmem:[%s166 + $0x4c] sm:$0xf]
      %v195 = vld [vmem:[%s166 + $0x50] sm:$0xf]
      %v196 = vld [vmem:[%s166 + $0x54] sm:$0xf]
      %v197 = vld [vmem:[%s166 + $0x58] sm:$0xf]
      %v198 = vld [vmem:[%s166 + $0x5c] sm:$0xf]
      %v199 = vld [vmem:[%s166 + $0x60] sm:$0xf]
      %v200 = vld [vmem:[%s166 + $0x64] sm:$0xf]
      %v201 = vld [vmem:[%s166 + $0x68] sm:$0xf]
      %v202 = vld [vmem:[%s166 + $0x6c] sm:$0xf]
      %v203 = vld [vmem:[%s166 + $0x70] sm:$0xf]
      %v204 = vld [vmem:[%s166 + $0x74] sm:$0xf]
      %v205 = vld [vmem:[%s166 + $0x78] sm:$0xf]
      %v206 = vld [vmem:[%s166 + $0x7c] sm:$0xf]
      %v207 = vld [vmem:[%s1] sm:$0xf]
      %v208 = vld [vmem:[%s1 + $0x4] sm:$0xf]
      %v209 = vld [vmem:[%s2] sm:$0x1]
      %v211 = vlaneseq
      %v212 = vshrl.u32 %v211, 7
      %v213 = vsub.s32 0, %v212
      %v214 = vrot.slane %v209, %v213
      %v248 = vunpack.c.l.b16 %v175
      %v249 = vunpack.c.l.b16 %v176
      %v250 = vunpack.c.l.b16 %v177
      %v251 = vunpack.c.l.b16 %v178
      %v252 = vunpack.c.l.b16 %v179
      %v253 = vunpack.c.l.b16 %v180
      %v254 = vunpack.c.l.b16 %v181
      %v255 = vunpack.c.l.b16 %v182
      %v256 = vunpack.c.l.b16 %v183
      %v257 = vunpack.c.l.b16 %v184
      %v258 = vunpack.c.l.b16 %v185
      %v259 = vunpack.c.l.b16 %v186
      %v260 = vunpack.c.l.b16 %v187
      %v261 = vunpack.c.l.b16 %v188
      %v262 = vunpack.c.l.b16 %v189
      %v263 = vunpack.c.l.b16 %v190
      %v264 = vunpack.c.l.b16 %v191
      %v265 = vunpack.c.l.b16 %v192
      %v266 = vunpack.c.l.b16 %v193
      %v267 = vunpack.c.l.b16 %v194
      %v268 = vunpack.c.l.b16 %v195
      %v269 = vunpack.c.l.b16 %v196
      %v270 = vunpack.c.l.b16 %v197
      %v271 = vunpack.c.l.b16 %v198
      %v272 = vunpack.c.l.b16 %v199
      %v273 = vunpack.c.l.b16 %v200
      %v274 = vunpack.c.l.b16 %v201
      %v275 = vunpack.c.l.b16 %v202
      %v276 = vunpack.c.l.b16 %v203
      %v277 = vunpack.c.l.b16 %v204
      %v278 = vunpack.c.l.b16 %v205
      %v279 = vunpack.c.l.b16 %v206
      %v280 = vpack.c.b16 %v249, %v248
      %v281 = vpack.c.b16 %v251, %v250
      %v282 = vpack.c.b16 %v253, %v252
      %v283 = vpack.c.b16 %v255, %v254
      %v284 = vpack.c.b16 %v257, %v256
      %v285 = vpack.c.b16 %v259, %v258
      %v286 = vpack.c.b16 %v261, %v260
      %v287 = vpack.c.b16 %v263, %v262
      %v288 = vpack.c.b16 %v265, %v264
      %v289 = vpack.c.b16 %v267, %v266
      %v290 = vpack.c.b16 %v269, %v268
      %v291 = vpack.c.b16 %v271, %v270
      %v292 = vpack.c.b16 %v273, %v272
      %v293 = vpack.c.b16 %v275, %v274
      %v294 = vpack.c.b16 %v277, %v276
      %v295 = vpack.c.b16 %v279, %v278
      %v298 = vunpack.c.l.b16 %v207
      %v299 = vunpack.c.l.b16 %v208
      %v300 = vpack.c.b16 %v299, %v298
      %vm302 = vcmask 130048
      %v304 = vsel %vm302, %v280, 0
      %v307 = vsel %vm302, %v281, 0
      %v310 = vsel %vm302, %v282, 0
      %v313 = vsel %vm302, %v283, 0
      %v316 = vsel %vm302, %v284, 0
      %v319 = vsel %vm302, %v285, 0
      %v322 = vsel %vm302, %v286, 0
      %v325 = vsel %vm302, %v287, 0
      %v328 = vsel %vm302, %v288, 0
      %v331 = vsel %vm302, %v289, 0
      %v334 = vsel %vm302, %v290, 0
      %v337 = vsel %vm302, %v291, 0
      %v340 = vsel %vm302, %v292, 0
      %v343 = vsel %vm302, %v293, 0
      %v346 = vsel %vm302, %v294, 0
      %v349 = vsel %vm302, %v295, 0
      %351 = vmatprep.subr.bf16.mxu0 0
      %352 = vmatpush1.bf16.msra.mxu0 %v300
      %353 = vmatprep.subr.bf16.mxu0 0
      %354 = vmatpush1.bf16.msra.mxu0 0
      %355 = vmatprep.subr.bf16.mxu0 0
      %356 = vmatpush1.bf16.msra.mxu0 0
      %357 = vmatprep.subr.bf16.mxu0 0
      %358 = vmatpush1.bf16.msra.mxu0 0
      %359 = vmatprep.subr.bf16.mxu0 0
      %360 = vmatpush1.bf16.msra.mxu0 0
      %361 = vmatprep.subr.bf16.mxu0 0
      %362 = vmatpush1.bf16.msra.mxu0 0
      %363 = vmatprep.subr.bf16.mxu0 0
      %364 = vmatpush1.bf16.msra.mxu0 0
      %365 = vmatprep.subr.bf16.mxu0 0
      %366 = vmatpush1.bf16.msra.mxu0 0
      %367 = vmatprep.subr.bf16.mxu0 0
      %368 = vmatpush1.bf16.msra.mxu0 0
      %369 = vmatprep.subr.bf16.mxu0 0
      %370 = vmatpush1.bf16.msra.mxu0 0
      %371 = vmatprep.subr.bf16.mxu0 0
      %372 = vmatpush1.bf16.msra.mxu0 0
      %373 = vmatprep.subr.bf16.mxu0 0
      %374 = vmatpush1.bf16.msra.mxu0 0
      %375 = vmatprep.subr.bf16.mxu0 0
      %376 = vmatpush1.bf16.msra.mxu0 0
      %377 = vmatprep.subr.bf16.mxu0 0
      %378 = vmatpush1.bf16.msra.mxu0 0
      %379 = vmatprep.subr.bf16.mxu0 0
      %380 = vmatpush1.bf16.msra.mxu0 0
      %381 = vmatprep.subr.bf16.mxu0 0
      %382 = vmatpush1.bf16.msra.mxu0 0
      %383 = vmatprep.mubr.bf16.mxu0 0
      %384 = vmatmul.mubr.bf16.gmra.mrb[0].mxu0 %v304
      %v385 = vpop.f32.mrb[0].mxu0
      %v386 = vadd.f32 %v214, %v385
      %v387 = vpop.f32.mrb[0].mxu0
      %v388 = vpop.f32.mrb[0].mxu0
      %v389 = vadd.f32 %v214, %v388
      %v390 = vpop.f32.mrb[0].mxu0
      %391 = vmatprep.mubr.bf16.mxu0 0
      %392 = vmatmul.mubr.bf16.gmra.mrb[0].mxu0 %v307
      %v393 = vpop.f32.mrb[0].mxu0
      %v394 = vadd.f32 %v214, %v393
      %v395 = vpop.f32.mrb[0].mxu0
      %v396 = vpop.f32.mrb[0].mxu0
      %v397 = vadd.f32 %v214, %v396
      %v398 = vpop.f32.mrb[0].mxu0
      %399 = vmatprep.mubr.bf16.mxu0 0
      %400 = vmatmul.mubr.bf16.gmra.mrb[0].mxu0 %v310
      %v401 = vpop.f32.mrb[0].mxu0
      %v402 = vadd.f32 %v214, %v401
      %v403 = vpop.f32.mrb[0].mxu0
      %v404 = vpop.f32.mrb[0].mxu0
      %v405 = vadd.f32 %v214, %v404
      %v406 = vpop.f32.mrb[0].mxu0
      %407 = vmatprep.mubr.bf16.mxu0 0
      %408 = vmatmul.mubr.bf16.gmra.mrb[0].mxu0 %v313
      %v409 = vpop.f32.mrb[0].mxu0
      %v410 = vadd.f32 %v214, %v409
      %v411 = vpop.f32.mrb[0].mxu0
      %v412 = vpop.f32.mrb[0].mxu0
      %v413 = vadd.f32 %v214, %v412
      %v414 = vpop.f32.mrb[0].mxu0
      %415 = vmatprep.mubr.bf16.mxu0 0
      %416 = vmatmul.mubr.bf16.gmra.mrb[0].mxu0 %v316
      %v417 = vpop.f32.mrb[0].mxu0
      %v418 = vadd.f32 %v214, %v417
      %v419 = vpop.f32.mrb[0].mxu0
      %v420 = vpop.f32.mrb[0].mxu0
      %v421 = vadd.f32 %v214, %v420
      %v422 = vpop.f32.mrb[0].mxu0
      %423 = vmatprep.mubr.bf16.mxu0 0
      %424 = vmatmul.mubr.bf16.gmra.mrb[0].mxu0 %v319
      %v425 = vpop.f32.mrb[0].mxu0
      %v426 = vadd.f32 %v214, %v425
      %v427 = vpop.f32.mrb[0].mxu0
      %v428 = vpop.f32.mrb[0].mxu0
      %v429 = vadd.f32 %v214, %v428
      %v430 = vpop.f32.mrb[0].mxu0
      %431 = vmatprep.mubr.bf16.mxu0 0
      %432 = vmatmul.mubr.bf16.gmra.mrb[0].mxu0 %v322
      %v433 = vpop.f32.mrb[0].mxu0
      %v434 = vadd.f32 %v214, %v433
      %v435 = vpop.f32.mrb[0].mxu0
      %v436 = vpop.f32.mrb[0].mxu0
      %v437 = vadd.f32 %v214, %v436
      %v438 = vpop.f32.mrb[0].mxu0
      %439 = vmatprep.mubr.bf16.mxu0 0
      %440 = vmatmul.mubr.bf16.gmra.mrb[0].mxu0 %v325
      %v441 = vpop.f32.mrb[0].mxu0
      %v442 = vadd.f32 %v214, %v441
      %v443 = vpop.f32.mrb[0].mxu0
      %v444 = vpop.f32.mrb[0].mxu0
      %v445 = vadd.f32 %v214, %v444
      %v446 = vpop.f32.mrb[0].mxu0
      %447 = vmatprep.mubr.bf16.mxu0 0
      %448 = vmatmul.mubr.bf16.gmra.mrb[0].mxu0 %v328
      %v449 = vpop.f32.mrb[0].mxu0
      %v450 = vadd.f32 %v214, %v449
      %v451 = vpop.f32.mrb[0].mxu0
      %v452 = vpop.f32.mrb[0].mxu0
      %v453 = vadd.f32 %v214, %v452
      %v454 = vpop.f32.mrb[0].mxu0
      %455 = vmatprep.mubr.bf16.mxu0 0
      %456 = vmatmul.mubr.bf16.gmra.mrb[0].mxu0 %v331
      %v457 = vpop.f32.mrb[0].mxu0
      %v458 = vadd.f32 %v214, %v457
      %v459 = vpop.f32.mrb[0].mxu0
      %v460 = vpop.f32.mrb[0].mxu0
      %v461 = vadd.f32 %v214, %v460
      %v462 = vpop.f32.mrb[0].mxu0
      %463 = vmatprep.mubr.bf16.mxu0 0
      %464 = vmatmul.mubr.bf16.gmra.mrb[0].mxu0 %v334
      %v465 = vpop.f32.mrb[0].mxu0
      %v466 = vadd.f32 %v214, %v465
      %v467 = vpop.f32.mrb[0].mxu0
      %v468 = vpop.f32.mrb[0].mxu0
      %v469 = vadd.f32 %v214, %v468
      %v470 = vpop.f32.mrb[0].mxu0
      %471 = vmatprep.mubr.bf16.mxu0 0
      %472 = vmatmul.mubr.bf16.gmra.mrb[0].mxu0 %v337
      %v473 = vpop.f32.mrb[0].mxu0
      %v474 = vadd.f32 %v214, %v473
      %v475 = vpop.f32.mrb[0].mxu0
      %v476 = vpop.f32.mrb[0].mxu0
      %v477 = vadd.f32 %v214, %v476
      %v478 = vpop.f32.mrb[0].mxu0
      %479 = vmatprep.mubr.bf16.mxu0 0
      %480 = vmatmul.mubr.bf16.gmra.mrb[0].mxu0 %v340
      %v481 = vpop.f32.mrb[0].mxu0
      %v482 = vadd.f32 %v214, %v481
      %v483 = vpop.f32.mrb[0].mxu0
      %v484 = vpop.f32.mrb[0].mxu0
      %v485 = vadd.f32 %v214, %v484
      %v486 = vpop.f32.mrb[0].mxu0
      %487 = vmatprep.mubr.bf16.mxu0 0
      %488 = vmatmul.mubr.bf16.gmra.mrb[0].mxu0 %v343
      %v489 = vpop.f32.mrb[0].mxu0
      %v490 = vadd.f32 %v214, %v489
      %v491 = vpop.f32.mrb[0].mxu0
      %v492 = vpop.f32.mrb[0].mxu0
      %v493 = vadd.f32 %v214, %v492
      %v494 = vpop.f32.mrb[0].mxu0
      %495 = vmatprep.mubr.bf16.mxu0 0
      %496 = vmatmul.mubr.bf16.gmra.mrb[0].mxu0 %v346
      %v497 = vpop.f32.mrb[0].mxu0
      %v498 = vadd.f32 %v214, %v497
      %v499 = vpop.f32.mrb[0].mxu0
      %v500 = vpop.f32.mrb[0].mxu0
      %v501 = vadd.f32 %v214, %v500
      %v502 = vpop.f32.mrb[0].mxu0
      %503 = vmatprep.mubr.bf16.mxu0 0
      %504 = vmatmul.mubr.bf16.gmra.mrb[0].mxu0 %v349
      %v505 = vpop.f32.mrb[0].mxu0
      %v506 = vadd.f32 %v214, %v505
      %v507 = vpop.f32.mrb[0].mxu0
      %v508 = vpop.f32.mrb[0].mxu0
      %v509 = vadd.f32 %v214, %v508
      %v510 = vpop.f32.mrb[0].mxu0
      %511 = vdwg.mxu0
      %v512 = vmax.f32 %v386, 0.0
      %v513 = vmax.f32 %v389, 0.0
      %v514 = vmax.f32 %v394, 0.0
      %v515 = vmax.f32 %v397, 0.0
      %v516 = vmax.f32 %v402, 0.0
      %v517 = vmax.f32 %v405, 0.0
      %v518 = vmax.f32 %v410, 0.0
      %v519 = vmax.f32 %v413, 0.0
      %v520 = vmax.f32 %v418, 0.0
      %v521 = vmax.f32 %v421, 0.0
      %v522 = vmax.f32 %v426, 0.0
      %v523 = vmax.f32 %v429, 0.0
      %v524 = vmax.f32 %v434, 0.0
      %v525 = vmax.f32 %v437, 0.0
      %v526 = vmax.f32 %v442, 0.0
      %v527 = vmax.f32 %v445, 0.0
      %v528 = vmax.f32 %v450, 0.0
      %v529 = vmax.f32 %v453, 0.0
      %v530 = vmax.f32 %v458, 0.0
      %v531 = vmax.f32 %v461, 0.0
      %v532 = vmax.f32 %v466, 0.0
      %v533 = vmax.f32 %v469, 0.0
      %v534 = vmax.f32 %v474, 0.0
      %v535 = vmax.f32 %v477, 0.0
      %v536 = vmax.f32 %v482, 0.0
      %v537 = vmax.f32 %v485, 0.0
      %v538 = vmax.f32 %v490, 0.0
      %v539 = vmax.f32 %v493, 0.0
      %v540 = vmax.f32 %v498, 0.0
      %v541 = vmax.f32 %v501, 0.0
      %v542 = vmax.f32 %v506, 0.0
      %v543 = vmax.f32 %v509, 0.0
      %vm544 = vcmask 261120
      %545 = vst.msk [vmem:[%s172] sm:$0xff] %vm544, %v512
      %546 = vst.msk [vmem:[%s172 + $0x8] sm:$0xff] %vm544, %v513
      %547 = vst.msk [vmem:[%s172 + $0x10] sm:$0xff] %vm544, %v514
      %548 = vst.msk [vmem:[%s172 + $0x18] sm:$0xff] %vm544, %v515
      %549 = vst.msk [vmem:[%s172 + $0x20] sm:$0xff] %vm544, %v516
      %550 = vst.msk [vmem:[%s172 + $0x28] sm:$0xff] %vm544, %v517
      %551 = vst.msk [vmem:[%s172 + $0x30] sm:$0xff] %vm544, %v518
      %552 = vst.msk [vmem:[%s172 + $0x38] sm:$0xff] %vm544, %v519
      %553 = vst.msk [vmem:[%s172 + $0x40] sm:$0xff] %vm544, %v520
      %554 = vst.msk [vmem:[%s172 + $0x48] sm:$0xff] %vm544, %v521
      %555 = vst.msk [vmem:[%s172 + $0x50] sm:$0xff] %vm544, %v522
      %556 = vst.msk [vmem:[%s172 + $0x58] sm:$0xff] %vm544, %v523
      %557 = vst.msk [vmem:[%s172 + $0x60] sm:$0xff] %vm544, %v524
      %558 = vst.msk [vmem:[%s172 + $0x68] sm:$0xff] %vm544, %v525
      %559 = vst.msk [vmem:[%s172 + $0x70] sm:$0xff] %vm544, %v526
      %560 = vst.msk [vmem:[%s172 + $0x78] sm:$0xff] %vm544, %v527
      %561 = vst.msk [vmem:[%s172 + $0x80] sm:$0xff] %vm544, %v528
      %562 = vst.msk [vmem:[%s172 + $0x88] sm:$0xff] %vm544, %v529
      %563 = vst.msk [vmem:[%s172 + $0x90] sm:$0xff] %vm544, %v530
      %564 = vst.msk [vmem:[%s172 + $0x98] sm:$0xff] %vm544, %v531
      %565 = vst.msk [vmem:[%s172 + $0xa0] sm:$0xff] %vm544, %v532
      %566 = vst.msk [vmem:[%s172 + $0xa8] sm:$0xff] %vm544, %v533
      %567 = vst.msk [vmem:[%s172 + $0xb0] sm:$0xff] %vm544, %v534
      %568 = vst.msk [vmem:[%s172 + $0xb8] sm:$0xff] %vm544, %v535
      %569 = vst.msk [vmem:[%s172 + $0xc0] sm:$0xff] %vm544, %v536
      %570 = vst.msk [vmem:[%s172 + $0xc8] sm:$0xff] %vm544, %v537
      %571 = vst.msk [vmem:[%s172 + $0xd0] sm:$0xff] %vm544, %v538
      %572 = vst.msk [vmem:[%s172 + $0xd8] sm:$0xff] %vm544, %v539
      %573 = vst.msk [vmem:[%s172 + $0xe0] sm:$0xff] %vm544, %v540
      %574 = vst.msk [vmem:[%s172 + $0xe8] sm:$0xff] %vm544, %v541
      %575 = vst.msk [vmem:[%s172 + $0xf0] sm:$0xff] %vm544, %v542
      %576 = vst.msk [vmem:[%s172 + $0xf8] sm:$0xff] %vm544, %v543
      %s577 = smul.u32 32, %s14
      %p578 = scmp.lt.s32.totalorder %s577, 191
      %s579 = scalar_select %p578, %s577, 191
      %s580 = smul.addr %s579, 8
      %s581 = scalar_lea.vmem %s3, %s580
      // Predicated region
      $region33: #{lenet_forward.5} parent=31 // pred_check
        %p582 = pneg %p100
      $region34: #{lenet_forward.5} parent=31 // pred_check_branch
        %584 = sbr.rel (%p582) target = $region36
      $region35: #{lenet_forward.5} parent=31 // pred_region
        %s585 = smul.u32 32, %s14
      $region36: #{lenet_forward.5} parent=31 // pred_fallthru
        _
    $region32: #{lenet_forward.5} parent=5 // pred_fallthru
      _
    %p586 = scmp.le.s32.totalorder 2, %s9
    // Predicated region
    $region37: #{lenet_forward.5} parent=5 // pred_check
      %p587 = pneg %p586
    $region38: #{lenet_forward.5} parent=5 // pred_check_branch
      %589 = sbr.rel (%p587) target = $region40
    $region39: #{lenet_forward.5} parent=5 // pred_region
      %s590 = ssub.s32 %s9, 2
      // Predicated region
      $region41: #{lenet_forward.5} parent=39 // pred_check
        %p591 = pneg %p106
      $region42: #{lenet_forward.5} parent=39 // pred_check_branch
        %593 = sbr.rel (%p591) target = $region44
      $region43: #{lenet_forward.5} parent=39 // pred_region
        %s594 = smul.u32 32, %s15
        %p595 = scmp.lt.s32.totalorder %s594, 191
        %s596 = scalar_select %p595, %s594, 191
        %s597 = smul.addr %s596, 8
        %s598 = scalar_lea.vmem %s3, %s597
      $region44: #{lenet_forward.5} parent=39 // pred_fallthru
        _
    $region40: #{lenet_forward.5} parent=5 // pred_fallthru
      _
  $region6: #{lenet_forward.5} parent=0 // loop_footer
    %s13 = sadd.s32 1, %s9
  $region7: #{lenet_forward.5} parent=0 // loop_footer_branch
    %8 = sbr.rel target = $region3
  $region8: #{lenet_forward.5} parent=0 // loop_exit
    _

// kernel: lenet_forward.6
$region0: #{lenet_forward.6}
  #allocation0 [shape = 'u32[]', space=smem, size = 0x4, offset = 0x4, fixed_abs, tag = 'smem constant byte address 0x4 - core index']
  #allocation1 [shape = 'u32[144,128]{1,0:T(1,128)}', space=vmem, size = 0x12000, scoped, tag = 'internal scratch']
  %s0 = inlined_call_operand.vmem [shape: f32[88,128], index: 0, kind: input, shape index: {}]
  %s1 = inlined_call_operand.vmem [shape: f32[88,128], index: 1, kind: input, shape index: {}]
  %s2 = inlined_call_operand.vmem [shape: f32[88,128], index: 2, kind: input, shape index: {}]
  %s3 = inlined_call_operand.vmem [shape: f32[88,128], index: 3, kind: input, shape index: {}]
  %s4 = inlined_call_operand.vmem [shape: f32[88,128], index: 4, kind: output, shape index: {}]
  %s5 = sld [smem:[#allocation0]]
  $region26: #{lenet_forward.6} parent=0
    _
  %s7 = ssub.s32 1, %s5
  %s8 = scalar_select 0, %s7, %s5
  // Predicated region
  $region2: #{lenet_forward.6} parent=0 // pred_check
    _
  $region3: #{lenet_forward.6} parent=0 // pred_check_branch
    %10 = sbr.rel (0) target = $region5
  $region4: #{lenet_forward.6} parent=0 // pred_region
    _
  $region5: #{lenet_forward.6} parent=0 // pred_fallthru
    _
  // Predicated region
  $region6: #{lenet_forward.6} parent=0 // pred_check
    _
  $region7: #{lenet_forward.6} parent=0 // pred_check_branch
    %12 = sbr.rel (0) target = $region9
  $region8: #{lenet_forward.6} parent=0 // pred_region
    _
  $region9: #{lenet_forward.6} parent=0 // pred_fallthru
    _
  // Predicated region
  $region10: #{lenet_forward.6} parent=0 // pred_check
    _
  $region11: #{lenet_forward.6} parent=0 // pred_check_branch
    %14 = sbr.rel (0) target = $region13
  $region12: #{lenet_forward.6} parent=0 // pred_region
    _
  $region13: #{lenet_forward.6} parent=0 // pred_fallthru
    _
  // Predicated region
  $region14: #{lenet_forward.6} parent=0 // pred_check
    _
  $region15: #{lenet_forward.6} parent=0 // pred_check_branch
    %16 = sbr.rel (0) target = $region17
  $region16: #{lenet_forward.6} parent=0 // pred_region
    _
  $region17: #{lenet_forward.6} parent=0 // pred_fallthru
    _
  %v17 = vld [vmem:[%s0] sm:$0xff]
  %v18 = vld [vmem:[%s0 + $0x8] sm:$0xff]
  %v19 = vld [vmem:[%s0 + $0x10] sm:$0xff]
  %v20 = vld [vmem:[%s0 + $0x18] sm:$0xff]
  %v21 = vld [vmem:[%s0 + $0x20] sm:$0xff]
  %v22 = vld [vmem:[%s0 + $0x28] sm:$0xff]
  %v23 = vld [vmem:[%s0 + $0x30] sm:$0xff]
  %v24 = vld [vmem:[%s0 + $0x38] sm:$0xff]
  %v25 = vld [vmem:[%s0 + $0x40] sm:$0xff]
  %v26 = vld [vmem:[%s0 + $0x48] sm:$0xff]
  %v27 = vld [vmem:[%s0 + $0x50] sm:$0xff]
  %v28 = vld [vmem:[%s1] sm:$0xff]
  %v29 = vld [vmem:[%s1 + $0x8] sm:$0xff]
  %v30 = vld [vmem:[%s1 + $0x10] sm:$0xff]
  %v31 = vld [vmem:[%s1 + $0x18] sm:$0xff]
  %v32 = vld [vmem:[%s1 + $0x20] sm:$0xff]
  %v33 = vld [vmem:[%s1 + $0x28] sm:$0xff]
  %v34 = vld [vmem:[%s1 + $0x30] sm:$0xff]
  %v35 = vld [vmem:[%s1 + $0x38] sm:$0xff]
  %v36 = vld [vmem:[%s1 + $0x40] sm:$0xff]
  %v37 = vld [vmem:[%s1 + $0x48] sm:$0xff]
  %v38 = vld [vmem:[%s1 + $0x50] sm:$0xff]
  %v39 = vmax.f32 %v17, %v28
  %v40 = vmax.f32 %v18, %v29
  %v41 = vmax.f32 %v19, %v30
  %v42 = vmax.f32 %v20, %v31
  %v43 = vmax.f32 %v21, %v32
  %v44 = vmax.f32 %v22, %v33
  %v45 = vmax.f32 %v23, %v34
  %v46 = vmax.f32 %v24, %v35
  %v47 = vmax.f32 %v25, %v36
  %v48 = vmax.f32 %v26, %v37
  %v49 = vmax.f32 %v27, %v38
  %v50 = vld [vmem:[%s2] sm:$0xff]
  %v51 = vld [vmem:[%s2 + $0x8] sm:$0xff]
  %v52 = vld [vmem:[%s2 + $0x10] sm:$0xff]
  %v53 = vld [vmem:[%s2 + $0x18] sm:$0xff]
  %v54 = vld [vmem:[%s2 + $0x20] sm:$0xff]
  %v55 = vld [vmem:[%s2 + $0x28] sm:$0xff]
  %v56 = vld [vmem:[%s2 + $0x30] sm:$0xff]
  %v57 = vld [vmem:[%s2 + $0x38] sm:$0xff]
  %v58 = vld [vmem:[%s2 + $0x40] sm:$0xff]
  %v59 = vld [vmem:[%s2 + $0x48] sm:$0xff]
  %v60 = vld [vmem:[%s2 + $0x50] sm:$0xff]
  %v61 = vld [vmem:[%s3] sm:$0xff]
  %v62 = vld [vmem:[%s3 + $0x8] sm:$0xff]
  %v63 = vld [vmem:[%s3 + $0x10] sm:$0xff]
  %v64 = vld [vmem:[%s3 + $0x18] sm:$0xff]
  %v65 = vld [vmem:[%s3 + $0x20] sm:$0xff]
  %v66 = vld [vmem:[%s3 + $0x28] sm:$0xff]
  %v67 = vld [vmem:[%s3 + $0x30] sm:$0xff]
  %v68 = vld [vmem:[%s3 + $0x38] sm:$0xff]
  %v69 = vld [vmem:[%s3 + $0x40] sm:$0xff]
  %v70 = vld [vmem:[%s3 + $0x48] sm:$0xff]
  %v71 = vld [vmem:[%s3 + $0x50] sm:$0xff]
  %v72 = vmax.f32 %v50, %v61
  %v73 = vmax.f32 %v51, %v62
  %v74 = vmax.f32 %v52, %v63
  %v75 = vmax.f32 %v53, %v64
  %v76 = vmax.f32 %v54, %v65
  %v77 = vmax.f32 %v55, %v66
  %v78 = vmax.f32 %v56, %v67
  %v79 = vmax.f32 %v57, %v68
  %v80 = vmax.f32 %v58, %v69
  %v81 = vmax.f32 %v59, %v70
  %v82 = vmax.f32 %v60, %v71
  %v83 = vmax.f32 %v39, %v72
  %v84 = vmax.f32 %v40, %v73
  %v85 = vmax.f32 %v41, %v74
  %v86 = vmax.f32 %v42, %v75
  %v87 = vmax.f32 %v43, %v76
  %v88 = vmax.f32 %v44, %v77
  %v89 = vmax.f32 %v45, %v78
  %v90 = vmax.f32 %v46, %v79
  %v91 = vmax.f32 %v47, %v80
  %v92 = vmax.f32 %v48, %v81
  %v93 = vmax.f32 %v49, %v82
  %94 = vst [vmem:[%s4] sm:$0xff] %v83
  %95 = vst [vmem:[%s4 + $0x8] sm:$0xff] %v84
  %96 = vst [vmem:[%s4 + $0x10] sm:$0xff] %v85
  %97 = vst [vmem:[%s4 + $0x18] sm:$0xff] %v86
  %98 = vst [vmem:[%s4 + $0x20] sm:$0xff] %v87
  %99 = vst [vmem:[%s4 + $0x28] sm:$0xff] %v88
  %100 = vst [vmem:[%s4 + $0x30] sm:$0xff] %v89
  %101 = vst [vmem:[%s4 + $0x38] sm:$0xff] %v90
  %102 = vst [vmem:[%s4 + $0x40] sm:$0xff] %v91
  %103 = vst [vmem:[%s4 + $0x48] sm:$0xff] %v92
  %104 = vst [vmem:[%s4 + $0x50] sm:$0xff] %v93
  // Predicated region
  $region18: #{lenet_forward.6} parent=0 // pred_check
    _
  $region19: #{lenet_forward.6} parent=0 // pred_check_branch
    %106 = sbr.rel (0) target = $region21
  $region20: #{lenet_forward.6} parent=0 // pred_region
    _
  $region21: #{lenet_forward.6} parent=0 // pred_fallthru
    _
  // Predicated region
  $region22: #{lenet_forward.6} parent=0 // pred_check
    _
  $region23: #{lenet_forward.6} parent=0 // pred_check_branch
    %108 = sbr.rel (0) target = $region25
  $region24: #{lenet_forward.6} parent=0 // pred_region
    _
  $region25: #{lenet_forward.6} parent=0 // pred_fallthru
    _

// kernel: lenet_forward.7
$region0: #{lenet_forward.7}
  #allocation0 [shape = 'u32[]', space=smem, size = 0x4, offset = 0x4, fixed_abs, tag = 'smem constant byte address 0x4 - core index']
  #allocation1 [shape = 'u32[144,128]{1,0:T(1,128)}', space=vmem, size = 0x12000, scoped, tag = 'internal scratch']
  %s0 = inlined_call_operand.vmem [shape: bf16[256,288], index: 0, kind: input, shape index: {}]
  %s1 = inlined_call_operand.vmem [shape: bf16[288,64], index: 1, kind: input, shape index: {}]
  %s2 = inlined_call_operand.vmem [shape: f32[1,64], index: 2, kind: input, shape index: {}]
  %s3 = inlined_call_operand.vmem [shape: f32[256,64], index: 3, kind: output, shape index: {}]
  %s4 = sld [smem:[#allocation0]]
  $region22: #{lenet_forward.7} parent=0
    _
  %s6 = ssub.s32 1, %s4
  %s7 = scalar_select 0, %s6, %s4
  // Predicated region
  $region2: #{lenet_forward.7} parent=0 // pred_check
    _
  $region3: #{lenet_forward.7} parent=0 // pred_check_branch
    %9 = sbr.rel (0) target = $region5
  $region4: #{lenet_forward.7} parent=0 // pred_region
    _
  $region5: #{lenet_forward.7} parent=0 // pred_fallthru
    _
  // Predicated region
  $region6: #{lenet_forward.7} parent=0 // pred_check
    _
  $region7: #{lenet_forward.7} parent=0 // pred_check_branch
    %11 = sbr.rel (0) target = $region9
  $region8: #{lenet_forward.7} parent=0 // pred_region
    _
  $region9: #{lenet_forward.7} parent=0 // pred_fallthru
    _
  // Predicated region
  $region10: #{lenet_forward.7} parent=0 // pred_check
    _
  $region11: #{lenet_forward.7} parent=0 // pred_check_branch
    %13 = sbr.rel (0) target = $region13
  $region12: #{lenet_forward.7} parent=0 // pred_region
    _
  $region13: #{lenet_forward.7} parent=0 // pred_fallthru
    _
  %v15 = vld [vmem:[%s0] sm:$0xff]
  %v16 = vld [vmem:[%s0 + $0x8] sm:$0xf]
  %v17 = vld [vmem:[%s0 + $0xc] sm:$0xff]
  %v18 = vld [vmem:[%s0 + $0x14] sm:$0xf]
  %v19 = vld [vmem:[%s0 + $0x18] sm:$0xff]
  %v20 = vld [vmem:[%s0 + $0x20] sm:$0xf]
  %v21 = vld [vmem:[%s0 + $0x24] sm:$0xff]
  %v22 = vld [vmem:[%s0 + $0x2c] sm:$0xf]
  %v23 = vld [vmem:[%s0 + $0x30] sm:$0xff]
  %v24 = vld [vmem:[%s0 + $0x38] sm:$0xf]
  %v25 = vld [vmem:[%s0 + $0x3c] sm:$0xff]
  %v26 = vld [vmem:[%s0 + $0x44] sm:$0xf]
  %v27 = vld [vmem:[%s0 + $0x48] sm:$0xff]
  %v28 = vld [vmem:[%s0 + $0x50] sm:$0xf]
  %v29 = vld [vmem:[%s0 + $0x54] sm:$0xff]
  %v30 = vld [vmem:[%s0 + $0x5c] sm:$0xf]
  %v31 = vld [vmem:[%s0 + $0x60] sm:$0xff]
  %v32 = vld [vmem:[%s0 + $0x68] sm:$0xf]
  %v33 = vld [vmem:[%s0 + $0x6c] sm:$0xff]
  %v34 = vld [vmem:[%s0 + $0x74] sm:$0xf]
  %v35 = vld [vmem:[%s0 + $0x78] sm:$0xff]
  %v36 = vld [vmem:[%s0 + $0x80] sm:$0xf]
  %v37 = vld [vmem:[%s0 + $0x84] sm:$0xff]
  %v38 = vld [vmem:[%s0 + $0x8c] sm:$0xf]
  %v39 = vld [vmem:[%s0 + $0x90] sm:$0xff]
  %v40 = vld [vmem:[%s0 + $0x98] sm:$0xf]
  %v41 = vld [vmem:[%s0 + $0x9c] sm:$0xff]
  %v42 = vld [vmem:[%s0 + $0xa4] sm:$0xf]
  %v43 = vld [vmem:[%s0 + $0xa8] sm:$0xff]
  %v44 = vld [vmem:[%s0 + $0xb0] sm:$0xf]
  %v45 = vld [vmem:[%s0 + $0xb4] sm:$0xff]
  %v46 = vld [vmem:[%s0 + $0xbc] sm:$0xf]
  %v47 = vld [vmem:[%s0 + $0xc0] sm:$0xff]
  %v48 = vld [vmem:[%s0 + $0xc8] sm:$0xf]
  %v49 = vld [vmem:[%s0 + $0xcc] sm:$0xff]
  %v50 = vld [vmem:[%s0 + $0xd4] sm:$0xf]
  %v51 = vld [vmem:[%s0 + $0xd8] sm:$0xff]
  %v52 = vld [vmem:[%s0 + $0xe0] sm:$0xf]
  %v53 = vld [vmem:[%s0 + $0xe4] sm:$0xff]
  %v54 = vld [vmem:[%s0 + $0xec] sm:$0xf]
  %v55 = vld [vmem:[%s0 + $0xf0] sm:$0xff]
  %v56 = vld [vmem:[%s0 + $0xf8] sm:$0xf]
  %v57 = vld [vmem:[%s0 + $0xfc] sm:$0xff]
  %v58 = vld [vmem:[%s0 + $0x104] sm:$0xf]
  %v59 = vld [vmem:[%s0 + $0x108] sm:$0xff]
  %v60 = vld [vmem:[%s0 + $0x110] sm:$0xf]
  %v61 = vld [vmem:[%s0 + $0x114] sm:$0xff]
  %v62 = vld [vmem:[%s0 + $0x11c] sm:$0xf]
  %v63 = vld [vmem:[%s0 + $0x120] sm:$0xff]
  %v64 = vld [vmem:[%s0 + $0x128] sm:$0xf]
  %v65 = vld [vmem:[%s0 + $0x12c] sm:$0xff]
  %v66 = vld [vmem:[%s0 + $0x134] sm:$0xf]
  %v67 = vld [vmem:[%s0 + $0x138] sm:$0xff]
  %v68 = vld [vmem:[%s0 + $0x140] sm:$0xf]
  %v69 = vld [vmem:[%s0 + $0x144] sm:$0xff]
  %v70 = vld [vmem:[%s0 + $0x14c] sm:$0xf]
  %v71 = vld [vmem:[%s0 + $0x150] sm:$0xff]
  %v72 = vld [vmem:[%s0 + $0x158] sm:$0xf]
  %v73 = vld [vmem:[%s0 + $0x15c] sm:$0xff]
  %v74 = vld [vmem:[%s0 + $0x164] sm:$0xf]
  %v75 = vld [vmem:[%s0 + $0x168] sm:$0xff]
  %v76 = vld [vmem:[%s0 + $0x170] sm:$0xf]
  %v77 = vld [vmem:[%s0 + $0x174] sm:$0xff]
  %v78 = vld [vmem:[%s0 + $0x17c] sm:$0xf]
  %v79 = vld [vmem:[%s1] sm:$0xf]
  %v80 = vld [vmem:[%s1 + $0x4] sm:$0xf]
  %v81 = vld [vmem:[%s1 + $0x8] sm:$0xf]
  %v82 = vld [vmem:[%s1 + $0xc] sm:$0xf]
  %v83 = vld [vmem:[%s1 + $0x10] sm:$0xf]
  %v84 = vld [vmem:[%s1 + $0x14] sm:$0xf]
  %v85 = vld [vmem:[%s1 + $0x18] sm:$0xf]
  %v86 = vld [vmem:[%s1 + $0x1c] sm:$0xf]
  %v87 = vld [vmem:[%s1 + $0x20] sm:$0xf]
  %v88 = vld [vmem:[%s1 + $0x24] sm:$0xf]
  %v89 = vld [vmem:[%s1 + $0x28] sm:$0xf]
  %v90 = vld [vmem:[%s1 + $0x2c] sm:$0xf]
  %v91 = vld [vmem:[%s1 + $0x30] sm:$0xf]
  %v92 = vld [vmem:[%s1 + $0x34] sm:$0xf]
  %v93 = vld [vmem:[%s1 + $0x38] sm:$0xf]
  %v94 = vld [vmem:[%s1 + $0x3c] sm:$0xf]
  %v95 = vld [vmem:[%s1 + $0x40] sm:$0xf]
  %v96 = vld [vmem:[%s1 + $0x44] sm:$0xf]
  %v97 = vld [vmem:[%s1 + $0x48] sm:$0xf]
  %v98 = vld [vmem:[%s1 + $0x4c] sm:$0xf]
  %v99 = vld [vmem:[%s1 + $0x50] sm:$0xf]
  %v100 = vld [vmem:[%s1 + $0x54] sm:$0xf]
  %v101 = vld [vmem:[%s1 + $0x58] sm:$0xf]
  %v102 = vld [vmem:[%s1 + $0x5c] sm:$0xf]
  %v103 = vld [vmem:[%s1 + $0x60] sm:$0xf]
  %v104 = vld [vmem:[%s1 + $0x64] sm:$0xf]
  %v105 = vld [vmem:[%s1 + $0x68] sm:$0xf]
  %v106 = vld [vmem:[%s1 + $0x6c] sm:$0xf]
  %v107 = vld [vmem:[%s1 + $0x70] sm:$0xf]
  %v108 = vld [vmem:[%s1 + $0x74] sm:$0xf]
  %v109 = vld [vmem:[%s1 + $0x78] sm:$0xf]
  %v110 = vld [vmem:[%s1 + $0x7c] sm:$0xf]
  %v111 = vld [vmem:[%s1 + $0x80] sm:$0xf]
  %v112 = vld [vmem:[%s1 + $0x84] sm:$0xf]
  %v113 = vld [vmem:[%s1 + $0x88] sm:$0xf]
  %v114 = vld [vmem:[%s1 + $0x8c] sm:$0xf]
  %v115 = vld [vmem:[%s2] sm:$0x1]
  %v117 = vlaneseq
  %v118 = vshrl.u32 %v117, 7
  %v119 = vsub.s32 0, %v118
  %v120 = vrot.slane %v115, %v119
  %v186 = vunpack.c.l.b16 %v15
  %v187 = vunpack.c.h.b16 %v15
  %v188 = vunpack.c.l.b16 %v16
  %v189 = vunpack.c.l.b16 %v17
  %v190 = vunpack.c.h.b16 %v17
  %v191 = vunpack.c.l.b16 %v18
  %v192 = vunpack.c.l.b16 %v19
  %v193 = vunpack.c.h.b16 %v19
  %v194 = vunpack.c.l.b16 %v20
  %v195 = vunpack.c.l.b16 %v21
  %v196 = vunpack.c.h.b16 %v21
  %v197 = vunpack.c.l.b16 %v22
  %v198 = vunpack.c.l.b16 %v23
  %v199 = vunpack.c.h.b16 %v23
  %v200 = vunpack.c.l.b16 %v24
  %v201 = vunpack.c.l.b16 %v25
  %v202 = vunpack.c.h.b16 %v25
  %v203 = vunpack.c.l.b16 %v26
  %v204 = vunpack.c.l.b16 %v27
  %v205 = vunpack.c.h.b16 %v27
  %v206 = vunpack.c.l.b16 %v28
  %v207 = vunpack.c.l.b16 %v29
  %v208 = vunpack.c.h.b16 %v29
  %v209 = vunpack.c.l.b16 %v30
  %v210 = vunpack.c.l.b16 %v31
  %v211 = vunpack.c.h.b16 %v31
  %v212 = vunpack.c.l.b16 %v32
  %v213 = vunpack.c.l.b16 %v33
  %v214 = vunpack.c.h.b16 %v33
  %v215 = vunpack.c.l.b16 %v34
  %v216 = vunpack.c.l.b16 %v35
  %v217 = vunpack.c.h.b16 %v35
  %v218 = vunpack.c.l.b16 %v36
  %v219 = vunpack.c.l.b16 %v37
  %v220 = vunpack.c.h.b16 %v37
  %v221 = vunpack.c.l.b16 %v38
  %v222 = vunpack.c.l.b16 %v39
  %v223 = vunpack.c.h.b16 %v39
  %v224 = vunpack.c.l.b16 %v40
  %v225 = vunpack.c.l.b16 %v41
  %v226 = vunpack.c.h.b16 %v41
  %v227 = vunpack.c.l.b16 %v42
  %v228 = vunpack.c.l.b16 %v43
  %v229 = vunpack.c.h.b16 %v43
  %v230 = vunpack.c.l.b16 %v44
  %v231 = vunpack.c.l.b16 %v45
  %v232 = vunpack.c.h.b16 %v45
  %v233 = vunpack.c.l.b16 %v46
  %v234 = vunpack.c.l.b16 %v47
  %v235 = vunpack.c.h.b16 %v47
  %v236 = vunpack.c.l.b16 %v48
  %v237 = vunpack.c.l.b16 %v49
  %v238 = vunpack.c.h.b16 %v49
  %v239 = vunpack.c.l.b16 %v50
  %v240 = vunpack.c.l.b16 %v51
  %v241 = vunpack.c.h.b16 %v51
  %v242 = vunpack.c.l.b16 %v52
  %v243 = vunpack.c.l.b16 %v53
  %v244 = vunpack.c.h.b16 %v53
  %v245 = vunpack.c.l.b16 %v54
  %v246 = vunpack.c.l.b16 %v55
  %v247 = vunpack.c.h.b16 %v55
  %v248 = vunpack.c.l.b16 %v56
  %v249 = vunpack.c.l.b16 %v57
  %v250 = vunpack.c.h.b16 %v57
  %v251 = vunpack.c.l.b16 %v58
  %v252 = vunpack.c.l.b16 %v59
  %v253 = vunpack.c.h.b16 %v59
  %v254 = vunpack.c.l.b16 %v60
  %v255 = vunpack.c.l.b16 %v61
  %v256 = vunpack.c.h.b16 %v61
  %v257 = vunpack.c.l.b16 %v62
  %v258 = vunpack.c.l.b16 %v63
  %v259 = vunpack.c.h.b16 %v63
  %v260 = vunpack.c.l.b16 %v64
  %v261 = vunpack.c.l.b16 %v65
  %v262 = vunpack.c.h.b16 %v65
  %v263 = vunpack.c.l.b16 %v66
  %v264 = vunpack.c.l.b16 %v67
  %v265 = vunpack.c.h.b16 %v67
  %v266 = vunpack.c.l.b16 %v68
  %v267 = vunpack.c.l.b16 %v69
  %v268 = vunpack.c.h.b16 %v69
  %v269 = vunpack.c.l.b16 %v70
  %v270 = vunpack.c.l.b16 %v71
  %v271 = vunpack.c.h.b16 %v71
  %v272 = vunpack.c.l.b16 %v72
  %v273 = vunpack.c.l.b16 %v73
  %v274 = vunpack.c.h.b16 %v73
  %v275 = vunpack.c.l.b16 %v74
  %v276 = vunpack.c.l.b16 %v75
  %v277 = vunpack.c.h.b16 %v75
  %v278 = vunpack.c.l.b16 %v76
  %v279 = vunpack.c.l.b16 %v77
  %v280 = vunpack.c.h.b16 %v77
  %v281 = vunpack.c.l.b16 %v78
  %v282 = vpack.c.b16 %v189, %v186
  %v283 = vpack.c.b16 %v190, %v187
  %v284 = vpack.c.b16 %v191, %v188
  %v285 = vpack.c.b16 %v195, %v192
  %v286 = vpack.c.b16 %v196, %v193
  %v287 = vpack.c.b16 %v197, %v194
  %v288 = vpack.c.b16 %v201, %v198
  %v289 = vpack.c.b16 %v202, %v199
  %v290 = vpack.c.b16 %v203, %v200
  %v291 = vpack.c.b16 %v207, %v204
  %v292 = vpack.c.b16 %v208, %v205
  %v293 = vpack.c.b16 %v209, %v206
  %v294 = vpack.c.b16 %v213, %v210
  %v295 = vpack.c.b16 %v214, %v211
  %v296 = vpack.c.b16 %v215, %v212
  %v297 = vpack.c.b16 %v219, %v216
  %v298 = vpack.c.b16 %v220, %v217
  %v299 = vpack.c.b16 %v221, %v218
  %v300 = vpack.c.b16 %v225, %v222
  %v301 = vpack.c.b16 %v226, %v223
  %v302 = vpack.c.b16 %v227, %v224
  %v303 = vpack.c.b16 %v231, %v228
  %v304 = vpack.c.b16 %v232, %v229
  %v305 = vpack.c.b16 %v233, %v230
  %v306 = vpack.c.b16 %v237, %v234
  %v307 = vpack.c.b16 %v238, %v235
  %v308 = vpack.c.b16 %v239, %v236
  %v309 = vpack.c.b16 %v243, %v240
  %v310 = vpack.c.b16 %v244, %v241
  %v311 = vpack.c.b16 %v245, %v242
  %v312 = vpack.c.b16 %v249, %v246
  %v313 = vpack.c.b16 %v250, %v247
  %v314 = vpack.c.b16 %v251, %v248
  %v315 = vpack.c.b16 %v255, %v252
  %v316 = vpack.c.b16 %v256, %v253
  %v317 = vpack.c.b16 %v257, %v254
  %v318 = vpack.c.b16 %v261, %v258
  %v319 = vpack.c.b16 %v262, %v259
  %v320 = vpack.c.b16 %v263, %v260
  %v321 = vpack.c.b16 %v267, %v264
  %v322 = vpack.c.b16 %v268, %v265
  %v323 = vpack.c.b16 %v269, %v266
  %v324 = vpack.c.b16 %v273, %v270
  %v325 = vpack.c.b16 %v274, %v271
  %v326 = vpack.c.b16 %v275, %v272
  %v327 = vpack.c.b16 %v279, %v276
  %v328 = vpack.c.b16 %v280, %v277
  %v329 = vpack.c.b16 %v281, %v278
  %v398 = vunpack.c.l.b16 %v79
  %v399 = vunpack.c.l.b16 %v80
  %v400 = vunpack.c.l.b16 %v81
  %v401 = vunpack.c.l.b16 %v82
  %v402 = vunpack.c.l.b16 %v83
  %v403 = vunpack.c.l.b16 %v84
  %v404 = vunpack.c.l.b16 %v85
  %v405 = vunpack.c.l.b16 %v86
  %v406 = vunpack.c.l.b16 %v87
  %v407 = vunpack.c.l.b16 %v88
  %v408 = vunpack.c.l.b16 %v89
  %v409 = vunpack.c.l.b16 %v90
  %v410 = vunpack.c.l.b16 %v91
  %v411 = vunpack.c.l.b16 %v92
  %v412 = vunpack.c.l.b16 %v93
  %v413 = vunpack.c.l.b16 %v94
  %v414 = vunpack.c.l.b16 %v95
  %v415 = vunpack.c.l.b16 %v96
  %v416 = vunpack.c.l.b16 %v97
  %v417 = vunpack.c.l.b16 %v98
  %v418 = vunpack.c.l.b16 %v99
  %v419 = vunpack.c.l.b16 %v100
  %v420 = vunpack.c.l.b16 %v101
  %v421 = vunpack.c.l.b16 %v102
  %v422 = vunpack.c.l.b16 %v103
  %v423 = vunpack.c.l.b16 %v104
  %v424 = vunpack.c.l.b16 %v105
  %v425 = vunpack.c.l.b16 %v106
  %v426 = vunpack.c.l.b16 %v107
  %v427 = vunpack.c.l.b16 %v108
  %v428 = vunpack.c.l.b16 %v109
  %v429 = vunpack.c.l.b16 %v110
  %v430 = vunpack.c.l.b16 %v111
  %v431 = vunpack.c.l.b16 %v112
  %v432 = vunpack.c.l.b16 %v113
  %v433 = vunpack.c.l.b16 %v114
  %v434 = vpack.c.b16 %v399, %v398
  %v435 = vpack.c.b16 %v401, %v400
  %v436 = vpack.c.b16 %v403, %v402
  %v437 = vpack.c.b16 %v405, %v404
  %v438 = vpack.c.b16 %v407, %v406
  %v439 = vpack.c.b16 %v409, %v408
  %v440 = vpack.c.b16 %v411, %v410
  %v441 = vpack.c.b16 %v413, %v412
  %v442 = vpack.c.b16 %v415, %v414
  %v443 = vpack.c.b16 %v417, %v416
  %v444 = vpack.c.b16 %v419, %v418
  %v445 = vpack.c.b16 %v421, %v420
  %v446 = vpack.c.b16 %v423, %v422
  %v447 = vpack.c.b16 %v425, %v424
  %v448 = vpack.c.b16 %v427, %v426
  %v449 = vpack.c.b16 %v429, %v428
  %v450 = vpack.c.b16 %v431, %v430
  %v451 = vpack.c.b16 %v433, %v432
  %vm470 = vcmask 261120
  %v472 = vsel %vm470, %v284, 0
  %v475 = vsel %vm470, %v287, 0
  %v478 = vsel %vm470, %v290, 0
  %v481 = vsel %vm470, %v293, 0
  %v484 = vsel %vm470, %v296, 0
  %v487 = vsel %vm470, %v299, 0
  %v490 = vsel %vm470, %v302, 0
  %v493 = vsel %vm470, %v305, 0
  %v496 = vsel %vm470, %v308, 0
  %v499 = vsel %vm470, %v311, 0
  %v502 = vsel %vm470, %v314, 0
  %v505 = vsel %vm470, %v317, 0
  %v508 = vsel %vm470, %v320, 0
  %v511 = vsel %vm470, %v323, 0
  %v514 = vsel %vm470, %v326, 0
  %v517 = vsel %vm470, %v329, 0
  %519 = vmatprep.subr.bf16.mxu0 0
  %520 = vmatpush1.bf16.msra.mxu0 %v434
  %521 = vmatprep.subr.bf16.mxu0 0
  %522 = vmatpush1.bf16.msra.mxu0 %v435
  %523 = vmatprep.subr.bf16.mxu0 0
  %524 = vmatpush1.bf16.msra.mxu0 %v436
  %525 = vmatprep.subr.bf16.mxu0 0
  %526 = vmatpush1.bf16.msra.mxu0 %v437
  %527 = vmatprep.subr.bf16.mxu0 0
  %528 = vmatpush1.bf16.msra.mxu0 %v438
  %529 = vmatprep.subr.bf16.mxu0 0
  %530 = vmatpush1.bf16.msra.mxu0 %v439
  %531 = vmatprep.subr.bf16.mxu0 0
  %532 = vmatpush1.bf16.msra.mxu0 %v440
  %533 = vmatprep.subr.bf16.mxu0 0
  %534 = vmatpush1.bf16.msra.mxu0 %v441
  %535 = vmatprep.subr.bf16.mxu0 0
  %536 = vmatpush1.bf16.msra.mxu0 %v442
  %537 = vmatprep.subr.bf16.mxu0 0
  %538 = vmatpush1.bf16.msra.mxu0 %v443
  %539 = vmatprep.subr.bf16.mxu0 0
  %540 = vmatpush1.bf16.msra.mxu0 %v444
  %541 = vmatprep.subr.bf16.mxu0 0
  %542 = vmatpush1.bf16.msra.mxu0 %v445
  %543 = vmatprep.subr.bf16.mxu0 0
  %544 = vmatpush1.bf16.msra.mxu0 %v446
  %545 = vmatprep.subr.bf16.mxu0 0
  %546 = vmatpush1.bf16.msra.mxu0 %v447
  %547 = vmatprep.subr.bf16.mxu0 0
  %548 = vmatpush1.bf16.msra.mxu0 %v448
  %549 = vmatprep.subr.bf16.mxu0 0
  %550 = vmatpush1.bf16.msra.mxu0 %v449
  %551 = vmatprep.mubr.bf16.mxu0 %v283
  %552 = vmatmul.mubr.bf16.gmra.mrb[0].mxu0 %v282
  %v553 = vpop.f32.mrb[0].mxu0
  %v554 = vadd.f32 %v120, %v553
  %v555 = vpop.f32.mrb[0].mxu0
  %v556 = vpop.f32.mrb[0].mxu0
  %v557 = vadd.f32 %v120, %v556
  %v558 = vpop.f32.mrb[0].mxu0
  %559 = vmatprep.mubr.bf16.mxu0 %v286
  %560 = vmatmul.mubr.bf16.gmra.mrb[0].mxu0 %v285
  %v561 = vpop.f32.mrb[0].mxu0
  %v562 = vadd.f32 %v120, %v561
  %v563 = vpop.f32.mrb[0].mxu0
  %v564 = vpop.f32.mrb[0].mxu0
  %v565 = vadd.f32 %v120, %v564
  %v566 = vpop.f32.mrb[0].mxu0
  %567 = vmatprep.mubr.bf16.mxu0 %v289
  %568 = vmatmul.mubr.bf16.gmra.mrb[0].mxu0 %v288
  %v569 = vpop.f32.mrb[0].mxu0
  %v570 = vadd.f32 %v120, %v569
  %v571 = vpop.f32.mrb[0].mxu0
  %v572 = vpop.f32.mrb[0].mxu0
  %v573 = vadd.f32 %v120, %v572
  %v574 = vpop.f32.mrb[0].mxu0
  %575 = vmatprep.mubr.bf16.mxu0 %v292
  %576 = vmatmul.mubr.bf16.gmra.mrb[0].mxu0 %v291
  %v577 = vpop.f32.mrb[0].mxu0
  %v578 = vadd.f32 %v120, %v577
  %v579 = vpop.f32.mrb[0].mxu0
  %v580 = vpop.f32.mrb[0].mxu0
  %v581 = vadd.f32 %v120, %v580
  %v582 = vpop.f32.mrb[0].mxu0
  %583 = vmatprep.mubr.bf16.mxu0 %v295
  %584 = vmatmul.mubr.bf16.gmra.mrb[0].mxu0 %v294
  %v585 = vpop.f32.mrb[0].mxu0
  %v586 = vadd.f32 %v120, %v585
  %v587 = vpop.f32.mrb[0].mxu0
  %v588 = vpop.f32.mrb[0].mxu0
  %v589 = vadd.f32 %v120, %v588
  %v590 = vpop.f32.mrb[0].mxu0
  %591 = vmatprep.mubr.bf16.mxu0 %v298
  %592 = vmatmul.mubr.bf16.gmra.mrb[0].mxu0 %v297
  %v593 = vpop.f32.mrb[0].mxu0
  %v594 = vadd.f32 %v120, %v593
  %v595 = vpop.f32.mrb[0].mxu0
  %v596 = vpop.f32.mrb[0].mxu0
  %v597 = vadd.f32 %v120, %v596
  %v598 = vpop.f32.mrb[0].mxu0
  %599 = vmatprep.mubr.bf16.mxu0 %v301
  %600 = vmatmul.mubr.bf16.gmra.mrb[0].mxu0 %v300
  %v601 = vpop.f32.mrb[0].mxu0
  %v602 = vadd.f32 %v120, %v601
  %v603 = vpop.f32.mrb[0].mxu0
  %v604 = vpop.f32.mrb[0].mxu0
  %v605 = vadd.f32 %v120, %v604
  %v606 = vpop.f32.mrb[0].mxu0
  %607 = vmatprep.mubr.bf16.mxu0 %v304
  %608 = vmatmul.mubr.bf16.gmra.mrb[0].mxu0 %v303
  %v609 = vpop.f32.mrb[0].mxu0
  %v610 = vadd.f32 %v120, %v609
  %v611 = vpop.f32.mrb[0].mxu0
  %v612 = vpop.f32.mrb[0].mxu0
  %v613 = vadd.f32 %v120, %v612
  %v614 = vpop.f32.mrb[0].mxu0
  %615 = vmatprep.mubr.bf16.mxu0 %v307
  %616 = vmatmul.mubr.bf16.gmra.mrb[0].mxu0 %v306
  %v617 = vpop.f32.mrb[0].mxu0
  %v618 = vadd.f32 %v120, %v617
  %v619 = vpop.f32.mrb[0].mxu0
  %v620 = vpop.f32.mrb[0].mxu0
  %v621 = vadd.f32 %v120, %v620
  %v622 = vpop.f32.mrb[0].mxu0
  %623 = vmatprep.mubr.bf16.mxu0 %v310
  %624 = vmatmul.mubr.bf16.gmra.mrb[0].mxu0 %v309
  %v625 = vpop.f32.mrb[0].mxu0
  %v626 = vadd.f32 %v120, %v625
  %v627 = vpop.f32.mrb[0].mxu0
  %v628 = vpop.f32.mrb[0].mxu0
  %v629 = vadd.f32 %v120, %v628
  %v630 = vpop.f32.mrb[0].mxu0
  %631 = vmatprep.mubr.bf16.mxu0 %v313
  %632 = vmatmul.mubr.bf16.gmra.mrb[0].mxu0 %v312
  %v633 = vpop.f32.mrb[0].mxu0
  %v634 = vadd.f32 %v120, %v633
  %v635 = vpop.f32.mrb[0].mxu0
  %v636 = vpop.f32.mrb[0].mxu0
  %v637 = vadd.f32 %v120, %v636
  %v638 = vpop.f32.mrb[0].mxu0
  %639 = vmatprep.mubr.bf16.mxu0 %v316
  %640 = vmatmul.mubr.bf16.gmra.mrb[0].mxu0 %v315
  %v641 = vpop.f32.mrb[0].mxu0
  %v642 = vadd.f32 %v120, %v641
  %v643 = vpop.f32.mrb[0].mxu0
  %v644 = vpop.f32.mrb[0].mxu0
  %v645 = vadd.f32 %v120, %v644
  %v646 = vpop.f32.mrb[0].mxu0
  %647 = vmatprep.mubr.bf16.mxu0 %v319
  %648 = vmatmul.mubr.bf16.gmra.mrb[0].mxu0 %v318
  %v649 = vpop.f32.mrb[0].mxu0
  %v650 = vadd.f32 %v120, %v649
  %v651 = vpop.f32.mrb[0].mxu0
  %v652 = vpop.f32.mrb[0].mxu0
  %v653 = vadd.f32 %v120, %v652
  %v654 = vpop.f32.mrb[0].mxu0
  %655 = vmatprep.mubr.bf16.mxu0 %v322
  %656 = vmatmul.mubr.bf16.gmra.mrb[0].mxu0 %v321
  %v657 = vpop.f32.mrb[0].mxu0
  %v658 = vadd.f32 %v120, %v657
  %v659 = vpop.f32.mrb[0].mxu0
  %v660 = vpop.f32.mrb[0].mxu0
  %v661 = vadd.f32 %v120, %v660
  %v662 = vpop.f32.mrb[0].mxu0
  %663 = vmatprep.mubr.bf16.mxu0 %v325
  %664 = vmatmul.mubr.bf16.gmra.mrb[0].mxu0 %v324
  %v665 = vpop.f32.mrb[0].mxu0
  %v666 = vadd.f32 %v120, %v665
  %v667 = vpop.f32.mrb[0].mxu0
  %v668 = vpop.f32.mrb[0].mxu0
  %v669 = vadd.f32 %v120, %v668
  %v670 = vpop.f32.mrb[0].mxu0
  %671 = vmatprep.mubr.bf16.mxu0 %v328
  %672 = vmatmul.mubr.bf16.gmra.mrb[0].mxu0 %v327
  %v673 = vpop.f32.mrb[0].mxu0
  %v674 = vadd.f32 %v120, %v673
  %v675 = vpop.f32.mrb[0].mxu0
  %v676 = vpop.f32.mrb[0].mxu0
  %v677 = vadd.f32 %v120, %v676
  %v678 = vpop.f32.mrb[0].mxu0
  %679 = vdwg.mxu0
  %680 = vmatprep.subr.bf16.mxu0 0
  %681 = vmatpush1.bf16.msra.mxu0 %v450
  %682 = vmatprep.subr.bf16.mxu0 0
  %683 = vmatpush1.bf16.msra.mxu0 %v451
  %684 = vmatprep.subr.bf16.mxu0 0
  %685 = vmatpush1.bf16.msra.mxu0 0
  %686 = vmatprep.subr.bf16.mxu0 0
  %687 = vmatpush1.bf16.msra.mxu0 0
  %688 = vmatprep.subr.bf16.mxu0 0
  %689 = vmatpush1.bf16.msra.mxu0 0
  %690 = vmatprep.subr.bf16.mxu0 0
  %691 = vmatpush1.bf16.msra.mxu0 0
  %692 = vmatprep.subr.bf16.mxu0 0
  %693 = vmatpush1.bf16.msra.mxu0 0
  %694 = vmatprep.subr.bf16.mxu0 0
  %695 = vmatpush1.bf16.msra.mxu0 0
  %696 = vmatprep.subr.bf16.mxu0 0
  %697 = vmatpush1.bf16.msra.mxu0 0
  %698 = vmatprep.subr.bf16.mxu0 0
  %699 = vmatpush1.bf16.msra.mxu0 0
  %700 = vmatprep.subr.bf16.mxu0 0
  %701 = vmatpush1.bf16.msra.mxu0 0
  %702 = vmatprep.subr.bf16.mxu0 0
  %703 = vmatpush1.bf16.msra.mxu0 0
  %704 = vmatprep.subr.bf16.mxu0 0
  %705 = vmatpush1.bf16.msra.mxu0 0
  %706 = vmatprep.subr.bf16.mxu0 0
  %707 = vmatpush1.bf16.msra.mxu0 0
  %708 = vmatprep.subr.bf16.mxu0 0
  %709 = vmatpush1.bf16.msra.mxu0 0
  %710 = vmatprep.subr.bf16.mxu0 0
  %711 = vmatpush1.bf16.msra.mxu0 0
  %712 = vmatprep.mubr.bf16.mxu0 0
  %713 = vmatmul.mubr.bf16.gmra.mrb[0].mxu0 %v472
  %v714 = vpop.f32.mrb[0].mxu0
  %v715 = vadd.f32 %v554, %v714
  %v716 = vpop.f32.mrb[0].mxu0
  %v717 = vpop.f32.mrb[0].mxu0
  %v718 = vadd.f32 %v557, %v717
  %v719 = vpop.f32.mrb[0].mxu0
  %720 = vmatprep.mubr.bf16.mxu0 0
  %721 = vmatmul.mubr.bf16.gmra.mrb[0].mxu0 %v475
  %v722 = vpop.f32.mrb[0].mxu0
  %v723 = vadd.f32 %v562, %v722
  %v724 = vpop.f32.mrb[0].mxu0
  %v725 = vpop.f32.mrb[0].mxu0
  %v726 = vadd.f32 %v565, %v725
  %v727 = vpop.f32.mrb[0].mxu0
  %728 = vmatprep.mubr.bf16.mxu0 0
  %729 = vmatmul.mubr.bf16.gmra.mrb[0].mxu0 %v478
  %v730 = vpop.f32.mrb[0].mxu0
  %v731 = vadd.f32 %v570, %v730
  %v732 = vpop.f32.mrb[0].mxu0
  %v733 = vpop.f32.mrb[0].mxu0
  %v734 = vadd.f32 %v573, %v733
  %v735 = vpop.f32.mrb[0].mxu0
  %736 = vmatprep.mubr.bf16.mxu0 0
  %737 = vmatmul.mubr.bf16.gmra.mrb[0].mxu0 %v481
  %v738 = vpop.f32.mrb[0].mxu0
  %v739 = vadd.f32 %v578, %v738
  %v740 = vpop.f32.mrb[0].mxu0
  %v741 = vpop.f32.mrb[0].mxu0
  %v742 = vadd.f32 %v581, %v741
  %v743 = vpop.f32.mrb[0].mxu0
  %744 = vmatprep.mubr.bf16.mxu0 0
  %745 = vmatmul.mubr.bf16.gmra.mrb[0].mxu0 %v484
  %v746 = vpop.f32.mrb[0].mxu0
  %v747 = vadd.f32 %v586, %v746
  %v748 = vpop.f32.mrb[0].mxu0
  %v749 = vpop.f32.mrb[0].mxu0
  %v750 = vadd.f32 %v589, %v749
  %v751 = vpop.f32.mrb[0].mxu0
  %752 = vmatprep.mubr.bf16.mxu0 0
  %753 = vmatmul.mubr.bf16.gmra.mrb[0].mxu0 %v487
  %v754 = vpop.f32.mrb[0].mxu0
  %v755 = vadd.f32 %v594, %v754
  %v756 = vpop.f32.mrb[0].mxu0
  %v757 = vpop.f32.mrb[0].mxu0
  %v758 = vadd.f32 %v597, %v757
  %v759 = vpop.f32.mrb[0].mxu0
  %760 = vmatprep.mubr.bf16.mxu0 0
  %761 = vmatmul.mubr.bf16.gmra.mrb[0].mxu0 %v490
  %v762 = vpop.f32.mrb[0].mxu0
  %v763 = vadd.f32 %v602, %v762
  %v764 = vpop.f32.mrb[0].mxu0
  %v765 = vpop.f32.mrb[0].mxu0
  %v766 = vadd.f32 %v605, %v765
  %v767 = vpop.f32.mrb[0].mxu0
  %768 = vmatprep.mubr.bf16.mxu0 0
  %769 = vmatmul.mubr.bf16.gmra.mrb[0].mxu0 %v493
  %v770 = vpop.f32.mrb[0].mxu0
  %v771 = vadd.f32 %v610, %v770
  %v772 = vpop.f32.mrb[0].mxu0
  %v773 = vpop.f32.mrb[0].mxu0
  %v774 = vadd.f32 %v613, %v773
  %v775 = vpop.f32.mrb[0].mxu0
  %776 = vmatprep.mubr.bf16.mxu0 0
  %777 = vmatmul.mubr.bf16.gmra.mrb[0].mxu0 %v496
  %v778 = vpop.f32.mrb[0].mxu0
  %v779 = vadd.f32 %v618, %v778
  %v780 = vpop.f32.mrb[0].mxu0
  %v781 = vpop.f32.mrb[0].mxu0
  %v782 = vadd.f32 %v621, %v781
  %v783 = vpop.f32.mrb[0].mxu0
  %784 = vmatprep.mubr.bf16.mxu0 0
  %785 = vmatmul.mubr.bf16.gmra.mrb[0].mxu0 %v499
  %v786 = vpop.f32.mrb[0].mxu0
  %v787 = vadd.f32 %v626, %v786
  %v788 = vpop.f32.mrb[0].mxu0
  %v789 = vpop.f32.mrb[0].mxu0
  %v790 = vadd.f32 %v629, %v789
  %v791 = vpop.f32.mrb[0].mxu0
  %792 = vmatprep.mubr.bf16.mxu0 0
  %793 = vmatmul.mubr.bf16.gmra.mrb[0].mxu0 %v502
  %v794 = vpop.f32.mrb[0].mxu0
  %v795 = vadd.f32 %v634, %v794
  %v796 = vpop.f32.mrb[0].mxu0
  %v797 = vpop.f32.mrb[0].mxu0
  %v798 = vadd.f32 %v637, %v797
  %v799 = vpop.f32.mrb[0].mxu0
  %800 = vmatprep.mubr.bf16.mxu0 0
  %801 = vmatmul.mubr.bf16.gmra.mrb[0].mxu0 %v505
  %v802 = vpop.f32.mrb[0].mxu0
  %v803 = vadd.f32 %v642, %v802
  %v804 = vpop.f32.mrb[0].mxu0
  %v805 = vpop.f32.mrb[0].mxu0
  %v806 = vadd.f32 %v645, %v805
  %v807 = vpop.f32.mrb[0].mxu0
  %808 = vmatprep.mubr.bf16.mxu0 0
  %809 = vmatmul.mubr.bf16.gmra.mrb[0].mxu0 %v508
  %v810 = vpop.f32.mrb[0].mxu0
  %v811 = vadd.f32 %v650, %v810
  %v812 = vpop.f32.mrb[0].mxu0
  %v813 = vpop.f32.mrb[0].mxu0
  %v814 = vadd.f32 %v653, %v813
  %v815 = vpop.f32.mrb[0].mxu0
  %816 = vmatprep.mubr.bf16.mxu0 0
  %817 = vmatmul.mubr.bf16.gmra.mrb[0].mxu0 %v511
  %v818 = vpop.f32.mrb[0].mxu0
  %v819 = vadd.f32 %v658, %v818
  %v820 = vpop.f32.mrb[0].mxu0
  %v821 = vpop.f32.mrb[0].mxu0
  %v822 = vadd.f32 %v661, %v821
  %v823 = vpop.f32.mrb[0].mxu0
  %824 = vmatprep.mubr.bf16.mxu0 0
  %825 = vmatmul.mubr.bf16.gmra.mrb[0].mxu0 %v514
  %v826 = vpop.f32.mrb[0].mxu0
  %v827 = vadd.f32 %v666, %v826
  %v828 = vpop.f32.mrb[0].mxu0
  %v829 = vpop.f32.mrb[0].mxu0
  %v830 = vadd.f32 %v669, %v829
  %v831 = vpop.f32.mrb[0].mxu0
  %832 = vmatprep.mubr.bf16.mxu0 0
  %833 = vmatmul.mubr.bf16.gmra.mrb[0].mxu0 %v517
  %v834 = vpop.f32.mrb[0].mxu0
  %v835 = vadd.f32 %v674, %v834
  %v836 = vpop.f32.mrb[0].mxu0
  %v837 = vpop.f32.mrb[0].mxu0
  %v838 = vadd.f32 %v677, %v837
  %v839 = vpop.f32.mrb[0].mxu0
  %840 = vdwg.mxu0
  %v841 = vmax.f32 %v715, 0.0
  %v842 = vmax.f32 %v718, 0.0
  %v843 = vmax.f32 %v723, 0.0
  %v844 = vmax.f32 %v726, 0.0
  %v845 = vmax.f32 %v731, 0.0
  %v846 = vmax.f32 %v734, 0.0
  %v847 = vmax.f32 %v739, 0.0
  %v848 = vmax.f32 %v742, 0.0
  %v849 = vmax.f32 %v747, 0.0
  %v850 = vmax.f32 %v750, 0.0
  %v851 = vmax.f32 %v755, 0.0
  %v852 = vmax.f32 %v758, 0.0
  %v853 = vmax.f32 %v763, 0.0
  %v854 = vmax.f32 %v766, 0.0
  %v855 = vmax.f32 %v771, 0.0
  %v856 = vmax.f32 %v774, 0.0
  %v857 = vmax.f32 %v779, 0.0
  %v858 = vmax.f32 %v782, 0.0
  %v859 = vmax.f32 %v787, 0.0
  %v860 = vmax.f32 %v790, 0.0
  %v861 = vmax.f32 %v795, 0.0
  %v862 = vmax.f32 %v798, 0.0
  %v863 = vmax.f32 %v803, 0.0
  %v864 = vmax.f32 %v806, 0.0
  %v865 = vmax.f32 %v811, 0.0
  %v866 = vmax.f32 %v814, 0.0
  %v867 = vmax.f32 %v819, 0.0
  %v868 = vmax.f32 %v822, 0.0
  %v869 = vmax.f32 %v827, 0.0
  %v870 = vmax.f32 %v830, 0.0
  %v871 = vmax.f32 %v835, 0.0
  %v872 = vmax.f32 %v838, 0.0
  %vm873 = vcmask 523264
  %874 = vst.msk [vmem:[%s3] sm:$0xff] %vm873, %v841
  %875 = vst.msk [vmem:[%s3 + $0x8] sm:$0xff] %vm873, %v842
  %876 = vst.msk [vmem:[%s3 + $0x10] sm:$0xff] %vm873, %v843
  %877 = vst.msk [vmem:[%s3 + $0x18] sm:$0xff] %vm873, %v844
  %878 = vst.msk [vmem:[%s3 + $0x20] sm:$0xff] %vm873, %v845
  %879 = vst.msk [vmem:[%s3 + $0x28] sm:$0xff] %vm873, %v846
  %880 = vst.msk [vmem:[%s3 + $0x30] sm:$0xff] %vm873, %v847
  %881 = vst.msk [vmem:[%s3 + $0x38] sm:$0xff] %vm873, %v848
  %882 = vst.msk [vmem:[%s3 + $0x40] sm:$0xff] %vm873, %v849
  %883 = vst.msk [vmem:[%s3 + $0x48] sm:$0xff] %vm873, %v850
  %884 = vst.msk [vmem:[%s3 + $0x50] sm:$0xff] %vm873, %v851
  %885 = vst.msk [vmem:[%s3 + $0x58] sm:$0xff] %vm873, %v852
  %886 = vst.msk [vmem:[%s3 + $0x60] sm:$0xff] %vm873, %v853
  %887 = vst.msk [vmem:[%s3 + $0x68] sm:$0xff] %vm873, %v854
  %888 = vst.msk [vmem:[%s3 + $0x70] sm:$0xff] %vm873, %v855
  %889 = vst.msk [vmem:[%s3 + $0x78] sm:$0xff] %vm873, %v856
  %890 = vst.msk [vmem:[%s3 + $0x80] sm:$0xff] %vm873, %v857
  %891 = vst.msk [vmem:[%s3 + $0x88] sm:$0xff] %vm873, %v858
  %892 = vst.msk [vmem:[%s3 + $0x90] sm:$0xff] %vm873, %v859
  %893 = vst.msk [vmem:[%s3 + $0x98] sm:$0xff] %vm873, %v860
  %894 = vst.msk [vmem:[%s3 + $0xa0] sm:$0xff] %vm873, %v861
  %895 = vst.msk [vmem:[%s3 + $0xa8] sm:$0xff] %vm873, %v862
  %896 = vst.msk [vmem:[%s3 + $0xb0] sm:$0xff] %vm873, %v863
  %897 = vst.msk [vmem:[%s3 + $0xb8] sm:$0xff] %vm873, %v864
  %898 = vst.msk [vmem:[%s3 + $0xc0] sm:$0xff] %vm873, %v865
  %899 = vst.msk [vmem:[%s3 + $0xc8] sm:$0xff] %vm873, %v866
  %900 = vst.msk [vmem:[%s3 + $0xd0] sm:$0xff] %vm873, %v867
  %901 = vst.msk [vmem:[%s3 + $0xd8] sm:$0xff] %vm873, %v868
  %902 = vst.msk [vmem:[%s3 + $0xe0] sm:$0xff] %vm873, %v869
  %903 = vst.msk [vmem:[%s3 + $0xe8] sm:$0xff] %vm873, %v870
  %904 = vst.msk [vmem:[%s3 + $0xf0] sm:$0xff] %vm873, %v871
  %905 = vst.msk [vmem:[%s3 + $0xf8] sm:$0xff] %vm873, %v872
  // Predicated region
  $region14: #{lenet_forward.7} parent=0 // pred_check
    _
  $region15: #{lenet_forward.7} parent=0 // pred_check_branch
    %907 = sbr.rel (0) target = $region17
  $region16: #{lenet_forward.7} parent=0 // pred_region
    _
  $region17: #{lenet_forward.7} parent=0 // pred_fallthru
    _
  // Predicated region
  $region18: #{lenet_forward.7} parent=0 // pred_check
    _
  $region19: #{lenet_forward.7} parent=0 // pred_check_branch
    %909 = sbr.rel (0) target = $region21
  $region20: #{lenet_forward.7} parent=0 // pred_region
    _
  $region21: #{lenet_forward.7} parent=0 // pred_fallthru
    _

// kernel: lenet_forward.8
$region0: #{lenet_forward.8}
  #allocation0 [shape = 'u32[]', space=smem, size = 0x4, offset = 0x4, fixed_abs, tag = 'smem constant byte address 0x4 - core index']
  #allocation1 [shape = 'u32[144,128]{1,0:T(1,128)}', space=vmem, size = 0x12000, scoped, tag = 'internal scratch']
  %s0 = inlined_call_operand.vmem [shape: f32[32,128], index: 0, kind: input, shape index: {}]
  %s1 = inlined_call_operand.vmem [shape: f32[32,128], index: 1, kind: input, shape index: {}]
  %s2 = inlined_call_operand.vmem [shape: f32[32,128], index: 2, kind: input, shape index: {}]
  %s3 = inlined_call_operand.vmem [shape: f32[32,128], index: 3, kind: input, shape index: {}]
  %s4 = inlined_call_operand.vmem [shape: f32[32,128], index: 4, kind: output, shape index: {}]
  %s5 = sld [smem:[#allocation0]]
  $region26: #{lenet_forward.8} parent=0
    _
  %s7 = ssub.s32 1, %s5
  %s8 = scalar_select 0, %s7, %s5
  // Predicated region
  $region2: #{lenet_forward.8} parent=0 // pred_check
    _
  $region3: #{lenet_forward.8} parent=0 // pred_check_branch
    %10 = sbr.rel (0) target = $region5
  $region4: #{lenet_forward.8} parent=0 // pred_region
    _
  $region5: #{lenet_forward.8} parent=0 // pred_fallthru
    _
  // Predicated region
  $region6: #{lenet_forward.8} parent=0 // pred_check
    _
  $region7: #{lenet_forward.8} parent=0 // pred_check_branch
    %12 = sbr.rel (0) target = $region9
  $region8: #{lenet_forward.8} parent=0 // pred_region
    _
  $region9: #{lenet_forward.8} parent=0 // pred_fallthru
    _
  // Predicated region
  $region10: #{lenet_forward.8} parent=0 // pred_check
    _
  $region11: #{lenet_forward.8} parent=0 // pred_check_branch
    %14 = sbr.rel (0) target = $region13
  $region12: #{lenet_forward.8} parent=0 // pred_region
    _
  $region13: #{lenet_forward.8} parent=0 // pred_fallthru
    _
  // Predicated region
  $region14: #{lenet_forward.8} parent=0 // pred_check
    _
  $region15: #{lenet_forward.8} parent=0 // pred_check_branch
    %16 = sbr.rel (0) target = $region17
  $region16: #{lenet_forward.8} parent=0 // pred_region
    _
  $region17: #{lenet_forward.8} parent=0 // pred_fallthru
    _
  %v17 = vld [vmem:[%s0] sm:$0xff]
  %v18 = vld [vmem:[%s0 + $0x8] sm:$0xff]
  %v19 = vld [vmem:[%s0 + $0x10] sm:$0xff]
  %v20 = vld [vmem:[%s0 + $0x18] sm:$0xff]
  %v21 = vld [vmem:[%s1] sm:$0xff]
  %v22 = vld [vmem:[%s1 + $0x8] sm:$0xff]
  %v23 = vld [vmem:[%s1 + $0x10] sm:$0xff]
  %v24 = vld [vmem:[%s1 + $0x18] sm:$0xff]
  %v25 = vmax.f32 %v17, %v21
  %v26 = vmax.f32 %v18, %v22
  %v27 = vmax.f32 %v19, %v23
  %v28 = vmax.f32 %v20, %v24
  %v29 = vld [vmem:[%s2] sm:$0xff]
  %v30 = vld [vmem:[%s2 + $0x8] sm:$0xff]
  %v31 = vld [vmem:[%s2 + $0x10] sm:$0xff]
  %v32 = vld [vmem:[%s2 + $0x18] sm:$0xff]
  %v33 = vld [vmem:[%s3] sm:$0xff]
  %v34 = vld [vmem:[%s3 + $0x8] sm:$0xff]
  %v35 = vld [vmem:[%s3 + $0x10] sm:$0xff]
  %v36 = vld [vmem:[%s3 + $0x18] sm:$0xff]
  %v37 = vmax.f32 %v29, %v33
  %v38 = vmax.f32 %v30, %v34
  %v39 = vmax.f32 %v31, %v35
  %v40 = vmax.f32 %v32, %v36
  %v41 = vmax.f32 %v25, %v37
  %v42 = vmax.f32 %v26, %v38
  %v43 = vmax.f32 %v27, %v39
  %v44 = vmax.f32 %v28, %v40
  %45 = vst [vmem:[%s4] sm:$0xff] %v41
  %46 = vst [vmem:[%s4 + $0x8] sm:$0xff] %v42
  %47 = vst [vmem:[%s4 + $0x10] sm:$0xff] %v43
  %48 = vst [vmem:[%s4 + $0x18] sm:$0xff] %v44
  // Predicated region
  $region18: #{lenet_forward.8} parent=0 // pred_check
    _
  $region19: #{lenet_forward.8} parent=0 // pred_check_branch
    %50 = sbr.rel (0) target = $region21
  $region20: #{lenet_forward.8} parent=0 // pred_region
    _
  $region21: #{lenet_forward.8} parent=0 // pred_fallthru
    _
  // Predicated region
  $region22: #{lenet_forward.8} parent=0 // pred_check
    _
  $region23: #{lenet_forward.8} parent=0 // pred_check_branch
    %52 = sbr.rel (0) target = $region25
  $region24: #{lenet_forward.8} parent=0 // pred_region
    _
  $region25: #{lenet_forward.8} parent=0 // pred_fallthru
    _

// kernel: lenet_forward.9
$region0: #{lenet_forward.9}
  #allocation0 [shape = 'u32[]', space=smem, size = 0x4, offset = 0x4, fixed_abs, tag = 'smem constant byte address 0x4 - core index']
  #allocation1 [shape = 'u32[144,128]{1,0:T(1,128)}', space=vmem, size = 0x12000, scoped, tag = 'internal scratch']
  %s0 = inlined_call_operand.vmem [shape: bf16[16,1600], index: 0, kind: input, shape index: {}]
  %s1 = inlined_call_operand.vmem [shape: bf16[1600,128], index: 1, kind: input, shape index: {}]
  %s2 = inlined_call_operand.vmem [shape: f32[1,128], index: 2, kind: input, shape index: {}]
  %s3 = inlined_call_operand.vmem [shape: bf16[128,64], index: 3, kind: input, shape index: {}]
  %s4 = inlined_call_operand.vmem [shape: f32[1,64], index: 4, kind: input, shape index: {}]
  %s5 = inlined_call_operand.vmem [shape: bf16[64,128], index: 5, kind: input, shape index: {}]
  %s6 = inlined_call_operand.vmem [shape: f32[1,128], index: 6, kind: input, shape index: {}]
  %s7 = inlined_call_operand.vmem [shape: f32[16,128], index: 7, kind: output, shape index: {}]
  %s8 = sld [smem:[#allocation0]]
  $region38: #{lenet_forward.9} parent=0
    _
  %s10 = ssub.s32 1, %s8
  %s11 = scalar_select 0, %s10, %s8
  // Predicated region
  $region2: #{lenet_forward.9} parent=0 // pred_check
    _
  $region3: #{lenet_forward.9} parent=0 // pred_check_branch
    %13 = sbr.rel (0) target = $region5
  $region4: #{lenet_forward.9} parent=0 // pred_region
    _
  $region5: #{lenet_forward.9} parent=0 // pred_fallthru
    _
  // Predicated region
  $region6: #{lenet_forward.9} parent=0 // pred_check
    _
  $region7: #{lenet_forward.9} parent=0 // pred_check_branch
    %15 = sbr.rel (0) target = $region9
  $region8: #{lenet_forward.9} parent=0 // pred_region
    _
  $region9: #{lenet_forward.9} parent=0 // pred_fallthru
    _
  // Predicated region
  $region10: #{lenet_forward.9} parent=0 // pred_check
    _
  $region11: #{lenet_forward.9} parent=0 // pred_check_branch
    %17 = sbr.rel (0) target = $region13
  $region12: #{lenet_forward.9} parent=0 // pred_region
    _
  $region13: #{lenet_forward.9} parent=0 // pred_fallthru
    _
  // Predicated region
  $region14: #{lenet_forward.9} parent=0 // pred_check
    _
  $region15: #{lenet_forward.9} parent=0 // pred_check_branch
    %19 = sbr.rel (0) target = $region17
  $region16: #{lenet_forward.9} parent=0 // pred_region
    _
  $region17: #{lenet_forward.9} parent=0 // pred_fallthru
    _
  // Predicated region
  $region18: #{lenet_forward.9} parent=0 // pred_check
    _
  $region19: #{lenet_forward.9} parent=0 // pred_check_branch
    %21 = sbr.rel (0) target = $region21
  $region20: #{lenet_forward.9} parent=0 // pred_region
    _
  $region21: #{lenet_forward.9} parent=0 // pred_fallthru
    _
  // Predicated region
  $region22: #{lenet_forward.9} parent=0 // pred_check
    _
  $region23: #{lenet_forward.9} parent=0 // pred_check_branch
    %23 = sbr.rel (0) target = $region25
  $region24: #{lenet_forward.9} parent=0 // pred_region
    _
  $region25: #{lenet_forward.9} parent=0 // pred_fallthru
    _
  // Predicated region
  $region26: #{lenet_forward.9} parent=0 // pred_check
    _
  $region27: #{lenet_forward.9} parent=0 // pred_check_branch
    %25 = sbr.rel (0) target = $region29
  $region28: #{lenet_forward.9} parent=0 // pred_region
    _
  $region29: #{lenet_forward.9} parent=0 // pred_fallthru
    _
  %v27 = vld [vmem:[%s0] sm:$0xff]
  %v28 = vld [vmem:[%s0 + $0x8] sm:$0xff]
  %v29 = vld [vmem:[%s0 + $0x10] sm:$0xff]
  %v30 = vld [vmem:[%s0 + $0x18] sm:$0xff]
  %v31 = vld [vmem:[%s0 + $0x20] sm:$0xff]
  %v32 = vld [vmem:[%s0 + $0x28] sm:$0xff]
  %v33 = vld [vmem:[%s0 + $0x30] sm:$0xf]
  %v34 = vld [vmem:[%s0 + $0x34] sm:$0xff]
  %v35 = vld [vmem:[%s0 + $0x3c] sm:$0xff]
  %v36 = vld [vmem:[%s0 + $0x44] sm:$0xff]
  %v37 = vld [vmem:[%s0 + $0x4c] sm:$0xff]
  %v38 = vld [vmem:[%s0 + $0x54] sm:$0xff]
  %v39 = vld [vmem:[%s0 + $0x5c] sm:$0xff]
  %v40 = vld [vmem:[%s0 + $0x64] sm:$0xf]
  %v41 = vld [vmem:[%s1] sm:$0xf]
  %v42 = vld [vmem:[%s1 + $0x4] sm:$0xf]
  %v43 = vld [vmem:[%s1 + $0x8] sm:$0xf]
  %v44 = vld [vmem:[%s1 + $0xc] sm:$0xf]
  %v45 = vld [vmem:[%s1 + $0x10] sm:$0xf]
  %v46 = vld [vmem:[%s1 + $0x14] sm:$0xf]
  %v47 = vld [vmem:[%s1 + $0x18] sm:$0xf]
  %v48 = vld [vmem:[%s1 + $0x1c] sm:$0xf]
  %v49 = vld [vmem:[%s1 + $0x20] sm:$0xf]
  %v50 = vld [vmem:[%s1 + $0x24] sm:$0xf]
  %v51 = vld [vmem:[%s1 + $0x28] sm:$0xf]
  %v52 = vld [vmem:[%s1 + $0x2c] sm:$0xf]
  %v53 = vld [vmem:[%s1 + $0x30] sm:$0xf]
  %v54 = vld [vmem:[%s1 + $0x34] sm:$0xf]
  %v55 = vld [vmem:[%s1 + $0x38] sm:$0xf]
  %v56 = vld [vmem:[%s1 + $0x3c] sm:$0xf]
  %v57 = vld [vmem:[%s1 + $0x40] sm:$0xf]
  %v58 = vld [vmem:[%s1 + $0x44] sm:$0xf]
  %v59 = vld [vmem:[%s1 + $0x48] sm:$0xf]
  %v60 = vld [vmem:[%s1 + $0x4c] sm:$0xf]
  %v61 = vld [vmem:[%s1 + $0x50] sm:$0xf]
  %v62 = vld [vmem:[%s1 + $0x54] sm:$0xf]
  %v63 = vld [vmem:[%s1 + $0x58] sm:$0xf]
  %v64 = vld [vmem:[%s1 + $0x5c] sm:$0xf]
  %v65 = vld [vmem:[%s1 + $0x60] sm:$0xf]
  %v66 = vld [vmem:[%s1 + $0x64] sm:$0xf]
  %v67 = vld [vmem:[%s1 + $0x68] sm:$0xf]
  %v68 = vld [vmem:[%s1 + $0x6c] sm:$0xf]
  %v69 = vld [vmem:[%s1 + $0x70] sm:$0xf]
  %v70 = vld [vmem:[%s1 + $0x74] sm:$0xf]
  %v71 = vld [vmem:[%s1 + $0x78] sm:$0xf]
  %v72 = vld [vmem:[%s1 + $0x7c] sm:$0xf]
  %v73 = vld [vmem:[%s1 + $0x80] sm:$0xf]
  %v74 = vld [vmem:[%s1 + $0x84] sm:$0xf]
  %v75 = vld [vmem:[%s1 + $0x88] sm:$0xf]
  %v76 = vld [vmem:[%s1 + $0x8c] sm:$0xf]
  %v77 = vld [vmem:[%s1 + $0x90] sm:$0xf]
  %v78 = vld [vmem:[%s1 + $0x94] sm:$0xf]
  %v79 = vld [vmem:[%s1 + $0x98] sm:$0xf]
  %v80 = vld [vmem:[%s1 + $0x9c] sm:$0xf]
  %v81 = vld [vmem:[%s1 + $0xa0] sm:$0xf]
  %v82 = vld [vmem:[%s1 + $0xa4] sm:$0xf]
  %v83 = vld [vmem:[%s1 + $0xa8] sm:$0xf]
  %v84 = vld [vmem:[%s1 + $0xac] sm:$0xf]
  %v85 = vld [vmem:[%s1 + $0xb0] sm:$0xf]
  %v86 = vld [vmem:[%s1 + $0xb4] sm:$0xf]
  %v87 = vld [vmem:[%s1 + $0xb8] sm:$0xf]
  %v88 = vld [vmem:[%s1 + $0xbc] sm:$0xf]
  %v89 = vld [vmem:[%s1 + $0xc0] sm:$0xf]
  %v90 = vld [vmem:[%s1 + $0xc4] sm:$0xf]
  %v91 = vld [vmem:[%s1 + $0xc8] sm:$0xf]
  %v92 = vld [vmem:[%s1 + $0xcc] sm:$0xf]
  %v93 = vld [vmem:[%s1 + $0xd0] sm:$0xf]
  %v94 = vld [vmem:[%s1 + $0xd4] sm:$0xf]
  %v95 = vld [vmem:[%s1 + $0xd8] sm:$0xf]
  %v96 = vld [vmem:[%s1 + $0xdc] sm:$0xf]
  %v97 = vld [vmem:[%s1 + $0xe0] sm:$0xf]
  %v98 = vld [vmem:[%s1 + $0xe4] sm:$0xf]
  %v99 = vld [vmem:[%s1 + $0xe8] sm:$0xf]
  %v100 = vld [vmem:[%s1 + $0xec] sm:$0xf]
  %v101 = vld [vmem:[%s1 + $0xf0] sm:$0xf]
  %v102 = vld [vmem:[%s1 + $0xf4] sm:$0xf]
  %v103 = vld [vmem:[%s1 + $0xf8] sm:$0xf]
  %v104 = vld [vmem:[%s1 + $0xfc] sm:$0xf]
  %v105 = vld [vmem:[%s1 + $0x100] sm:$0xf]
  %v106 = vld [vmem:[%s1 + $0x104] sm:$0xf]
  %v107 = vld [vmem:[%s1 + $0x108] sm:$0xf]
  %v108 = vld [vmem:[%s1 + $0x10c] sm:$0xf]
  %v109 = vld [vmem:[%s1 + $0x110] sm:$0xf]
  %v110 = vld [vmem:[%s1 + $0x114] sm:$0xf]
  %v111 = vld [vmem:[%s1 + $0x118] sm:$0xf]
  %v112 = vld [vmem:[%s1 + $0x11c] sm:$0xf]
  %v113 = vld [vmem:[%s1 + $0x120] sm:$0xf]
  %v114 = vld [vmem:[%s1 + $0x124] sm:$0xf]
  %v115 = vld [vmem:[%s1 + $0x128] sm:$0xf]
  %v116 = vld [vmem:[%s1 + $0x12c] sm:$0xf]
  %v117 = vld [vmem:[%s1 + $0x130] sm:$0xf]
  %v118 = vld [vmem:[%s1 + $0x134] sm:$0xf]
  %v119 = vld [vmem:[%s1 + $0x138] sm:$0xf]
  %v120 = vld [vmem:[%s1 + $0x13c] sm:$0xf]
  %v121 = vld [vmem:[%s1 + $0x140] sm:$0xf]
  %v122 = vld [vmem:[%s1 + $0x144] sm:$0xf]
  %v123 = vld [vmem:[%s1 + $0x148] sm:$0xf]
  %v124 = vld [vmem:[%s1 + $0x14c] sm:$0xf]
  %v125 = vld [vmem:[%s1 + $0x150] sm:$0xf]
  %v126 = vld [vmem:[%s1 + $0x154] sm:$0xf]
  %v127 = vld [vmem:[%s1 + $0x158] sm:$0xf]
  %v128 = vld [vmem:[%s1 + $0x15c] sm:$0xf]
  %v129 = vld [vmem:[%s1 + $0x160] sm:$0xf]
  %v130 = vld [vmem:[%s1 + $0x164] sm:$0xf]
  %v131 = vld [vmem:[%s1 + $0x168] sm:$0xf]
  %v132 = vld [vmem:[%s1 + $0x16c] sm:$0xf]
  %v133 = vld [vmem:[%s1 + $0x170] sm:$0xf]
  %v134 = vld [vmem:[%s1 + $0x174] sm:$0xf]
  %v135 = vld [vmem:[%s1 + $0x178] sm:$0xf]
  %v136 = vld [vmem:[%s1 + $0x17c] sm:$0xf]
  %v137 = vld [vmem:[%s1 + $0x180] sm:$0xf]
  %v138 = vld [vmem:[%s1 + $0x184] sm:$0xf]
  %v139 = vld [vmem:[%s1 + $0x188] sm:$0xf]
  %v140 = vld [vmem:[%s1 + $0x18c] sm:$0xf]
  %v141 = vld [vmem:[%s1 + $0x190] sm:$0xf]
  %v142 = vld [vmem:[%s1 + $0x194] sm:$0xf]
  %v143 = vld [vmem:[%s1 + $0x198] sm:$0xf]
  %v144 = vld [vmem:[%s1 + $0x19c] sm:$0xf]
  %v145 = vld [vmem:[%s1 + $0x1a0] sm:$0xf]
  %v146 = vld [vmem:[%s1 + $0x1a4] sm:$0xf]
  %v147 = vld [vmem:[%s1 + $0x1a8] sm:$0xf]
  %v148 = vld [vmem:[%s1 + $0x1ac] sm:$0xf]
  %v149 = vld [vmem:[%s1 + $0x1b0] sm:$0xf]
  %v150 = vld [vmem:[%s1 + $0x1b4] sm:$0xf]
  %v151 = vld [vmem:[%s1 + $0x1b8] sm:$0xf]
  %v152 = vld [vmem:[%s1 + $0x1bc] sm:$0xf]
  %v153 = vld [vmem:[%s1 + $0x1c0] sm:$0xf]
  %v154 = vld [vmem:[%s1 + $0x1c4] sm:$0xf]
  %v155 = vld [vmem:[%s1 + $0x1c8] sm:$0xf]
  %v156 = vld [vmem:[%s1 + $0x1cc] sm:$0xf]
  %v157 = vld [vmem:[%s1 + $0x1d0] sm:$0xf]
  %v158 = vld [vmem:[%s1 + $0x1d4] sm:$0xf]
  %v159 = vld [vmem:[%s1 + $0x1d8] sm:$0xf]
  %v160 = vld [vmem:[%s1 + $0x1dc] sm:$0xf]
  %v161 = vld [vmem:[%s1 + $0x1e0] sm:$0xf]
  %v162 = vld [vmem:[%s1 + $0x1e4] sm:$0xf]
  %v163 = vld [vmem:[%s1 + $0x1e8] sm:$0xf]
  %v164 = vld [vmem:[%s1 + $0x1ec] sm:$0xf]
  %v165 = vld [vmem:[%s1 + $0x1f0] sm:$0xf]
  %v166 = vld [vmem:[%s1 + $0x1f4] sm:$0xf]
  %v167 = vld [vmem:[%s1 + $0x1f8] sm:$0xf]
  %v168 = vld [vmem:[%s1 + $0x1fc] sm:$0xf]
  %v169 = vld [vmem:[%s1 + $0x200] sm:$0xf]
  %v170 = vld [vmem:[%s1 + $0x204] sm:$0xf]
  %v171 = vld [vmem:[%s1 + $0x208] sm:$0xf]
  %v172 = vld [vmem:[%s1 + $0x20c] sm:$0xf]
  %v173 = vld [vmem:[%s1 + $0x210] sm:$0xf]
  %v174 = vld [vmem:[%s1 + $0x214] sm:$0xf]
  %v175 = vld [vmem:[%s1 + $0x218] sm:$0xf]
  %v176 = vld [vmem:[%s1 + $0x21c] sm:$0xf]
  %v177 = vld [vmem:[%s1 + $0x220] sm:$0xf]
  %v178 = vld [vmem:[%s1 + $0x224] sm:$0xf]
  %v179 = vld [vmem:[%s1 + $0x228] sm:$0xf]
  %v180 = vld [vmem:[%s1 + $0x22c] sm:$0xf]
  %v181 = vld [vmem:[%s1 + $0x230] sm:$0xf]
  %v182 = vld [vmem:[%s1 + $0x234] sm:$0xf]
  %v183 = vld [vmem:[%s1 + $0x238] sm:$0xf]
  %v184 = vld [vmem:[%s1 + $0x23c] sm:$0xf]
  %v185 = vld [vmem:[%s1 + $0x240] sm:$0xf]
  %v186 = vld [vmem:[%s1 + $0x244] sm:$0xf]
  %v187 = vld [vmem:[%s1 + $0x248] sm:$0xf]
  %v188 = vld [vmem:[%s1 + $0x24c] sm:$0xf]
  %v189 = vld [vmem:[%s1 + $0x250] sm:$0xf]
  %v190 = vld [vmem:[%s1 + $0x254] sm:$0xf]
  %v191 = vld [vmem:[%s1 + $0x258] sm:$0xf]
  %v192 = vld [vmem:[%s1 + $0x25c] sm:$0xf]
  %v193 = vld [vmem:[%s1 + $0x260] sm:$0xf]
  %v194 = vld [vmem:[%s1 + $0x264] sm:$0xf]
  %v195 = vld [vmem:[%s1 + $0x268] sm:$0xf]
  %v196 = vld [vmem:[%s1 + $0x26c] sm:$0xf]
  %v197 = vld [vmem:[%s1 + $0x270] sm:$0xf]
  %v198 = vld [vmem:[%s1 + $0x274] sm:$0xf]
  %v199 = vld [vmem:[%s1 + $0x278] sm:$0xf]
  %v200 = vld [vmem:[%s1 + $0x27c] sm:$0xf]
  %v201 = vld [vmem:[%s1 + $0x280] sm:$0xf]
  %v202 = vld [vmem:[%s1 + $0x284] sm:$0xf]
  %v203 = vld [vmem:[%s1 + $0x288] sm:$0xf]
  %v204 = vld [vmem:[%s1 + $0x28c] sm:$0xf]
  %v205 = vld [vmem:[%s1 + $0x290] sm:$0xf]
  %v206 = vld [vmem:[%s1 + $0x294] sm:$0xf]
  %v207 = vld [vmem:[%s1 + $0x298] sm:$0xf]
  %v208 = vld [vmem:[%s1 + $0x29c] sm:$0xf]
  %v209 = vld [vmem:[%s1 + $0x2a0] sm:$0xf]
  %v210 = vld [vmem:[%s1 + $0x2a4] sm:$0xf]
  %v211 = vld [vmem:[%s1 + $0x2a8] sm:$0xf]
  %v212 = vld [vmem:[%s1 + $0x2ac] sm:$0xf]
  %v213 = vld [vmem:[%s1 + $0x2b0] sm:$0xf]
  %v214 = vld [vmem:[%s1 + $0x2b4] sm:$0xf]
  %v215 = vld [vmem:[%s1 + $0x2b8] sm:$0xf]
  %v216 = vld [vmem:[%s1 + $0x2bc] sm:$0xf]
  %v217 = vld [vmem:[%s1 + $0x2c0] sm:$0xf]
  %v218 = vld [vmem:[%s1 + $0x2c4] sm:$0xf]
  %v219 = vld [vmem:[%s1 + $0x2c8] sm:$0xf]
  %v220 = vld [vmem:[%s1 + $0x2cc] sm:$0xf]
  %v221 = vld [vmem:[%s1 + $0x2d0] sm:$0xf]
  %v222 = vld [vmem:[%s1 + $0x2d4] sm:$0xf]
  %v223 = vld [vmem:[%s1 + $0x2d8] sm:$0xf]
  %v224 = vld [vmem:[%s1 + $0x2dc] sm:$0xf]
  %v225 = vld [vmem:[%s1 + $0x2e0] sm:$0xf]
  %v226 = vld [vmem:[%s1 + $0x2e4] sm:$0xf]
  %v227 = vld [vmem:[%s1 + $0x2e8] sm:$0xf]
  %v228 = vld [vmem:[%s1 + $0x2ec] sm:$0xf]
  %v229 = vld [vmem:[%s1 + $0x2f0] sm:$0xf]
  %v230 = vld [vmem:[%s1 + $0x2f4] sm:$0xf]
  %v231 = vld [vmem:[%s1 + $0x2f8] sm:$0xf]
  %v232 = vld [vmem:[%s1 + $0x2fc] sm:$0xf]
  %v233 = vld [vmem:[%s1 + $0x300] sm:$0xf]
  %v234 = vld [vmem:[%s1 + $0x304] sm:$0xf]
  %v235 = vld [vmem:[%s1 + $0x308] sm:$0xf]
  %v236 = vld [vmem:[%s1 + $0x30c] sm:$0xf]
  %v237 = vld [vmem:[%s1 + $0x310] sm:$0xf]
  %v238 = vld [vmem:[%s1 + $0x314] sm:$0xf]
  %v239 = vld [vmem:[%s1 + $0x318] sm:$0xf]
  %v240 = vld [vmem:[%s1 + $0x31c] sm:$0xf]
  %v241 = vld [vmem:[%s2] sm:$0x1]
  %v243 = vlaneseq
  %v244 = vshrl.u32 %v243, 7
  %v245 = vsub.s32 0, %v244
  %v246 = vrot.slane %v241, %v245
  %v262 = vunpack.c.l.b16 %v27
  %v263 = vunpack.c.h.b16 %v27
  %v264 = vunpack.c.l.b16 %v28
  %v265 = vunpack.c.h.b16 %v28
  %v266 = vunpack.c.l.b16 %v29
  %v267 = vunpack.c.h.b16 %v29
  %v268 = vunpack.c.l.b16 %v30
  %v269 = vunpack.c.h.b16 %v30
  %v270 = vunpack.c.l.b16 %v31
  %v271 = vunpack.c.h.b16 %v31
  %v272 = vunpack.c.l.b16 %v32
  %v273 = vunpack.c.h.b16 %v32
  %v274 = vunpack.c.l.b16 %v33
  %v275 = vunpack.c.l.b16 %v34
  %v276 = vunpack.c.h.b16 %v34
  %v277 = vunpack.c.l.b16 %v35
  %v278 = vunpack.c.h.b16 %v35
  %v279 = vunpack.c.l.b16 %v36
  %v280 = vunpack.c.h.b16 %v36
  %v281 = vunpack.c.l.b16 %v37
  %v282 = vunpack.c.h.b16 %v37
  %v283 = vunpack.c.l.b16 %v38
  %v284 = vunpack.c.h.b16 %v38
  %v285 = vunpack.c.l.b16 %v39
  %v286 = vunpack.c.h.b16 %v39
  %v287 = vunpack.c.l.b16 %v40
  %v288 = vpack.c.b16 %v275, %v262
  %v289 = vpack.c.b16 %v276, %v263
  %v290 = vpack.c.b16 %v277, %v264
  %v291 = vpack.c.b16 %v278, %v265
  %v292 = vpack.c.b16 %v279, %v266
  %v293 = vpack.c.b16 %v280, %v267
  %v294 = vpack.c.b16 %v281, %v268
  %v295 = vpack.c.b16 %v282, %v269
  %v296 = vpack.c.b16 %v283, %v270
  %v297 = vpack.c.b16 %v284, %v271
  %v298 = vpack.c.b16 %v285, %v272
  %v299 = vpack.c.b16 %v286, %v273
  %v300 = vpack.c.b16 %v287, %v274
  %v513 = vunpack.c.l.b16 %v41
  %v514 = vunpack.c.l.b16 %v42
  %v515 = vunpack.c.l.b16 %v43
  %v516 = vunpack.c.l.b16 %v44
  %v517 = vunpack.c.l.b16 %v45
  %v518 = vunpack.c.l.b16 %v46
  %v519 = vunpack.c.l.b16 %v47
  %v520 = vunpack.c.l.b16 %v48
  %v521 = vunpack.c.l.b16 %v49
  %v522 = vunpack.c.l.b16 %v50
  %v523 = vunpack.c.l.b16 %v51
  %v524 = vunpack.c.l.b16 %v52
  %v525 = vunpack.c.l.b16 %v53
  %v526 = vunpack.c.l.b16 %v54
  %v527 = vunpack.c.l.b16 %v55
  %v528 = vunpack.c.l.b16 %v56
  %v529 = vunpack.c.l.b16 %v57
  %v530 = vunpack.c.l.b16 %v58
  %v531 = vunpack.c.l.b16 %v59
  %v532 = vunpack.c.l.b16 %v60
  %v533 = vunpack.c.l.b16 %v61
  %v534 = vunpack.c.l.b16 %v62
  %v535 = vunpack.c.l.b16 %v63
  %v536 = vunpack.c.l.b16 %v64
  %v537 = vunpack.c.l.b16 %v65
  %v538 = vunpack.c.l.b16 %v66
  %v539 = vunpack.c.l.b16 %v67
  %v540 = vunpack.c.l.b16 %v68
  %v541 = vunpack.c.l.b16 %v69
  %v542 = vunpack.c.l.b16 %v70
  %v543 = vunpack.c.l.b16 %v71
  %v544 = vunpack.c.l.b16 %v72
  %v545 = vunpack.c.l.b16 %v73
  %v546 = vunpack.c.l.b16 %v74
  %v547 = vunpack.c.l.b16 %v75
  %v548 = vunpack.c.l.b16 %v76
  %v549 = vunpack.c.l.b16 %v77
  %v550 = vunpack.c.l.b16 %v78
  %v551 = vunpack.c.l.b16 %v79
  %v552 = vunpack.c.l.b16 %v80
  %v553 = vunpack.c.l.b16 %v81
  %v554 = vunpack.c.l.b16 %v82
  %v555 = vunpack.c.l.b16 %v83
  %v556 = vunpack.c.l.b16 %v84
  %v557 = vunpack.c.l.b16 %v85
  %v558 = vunpack.c.l.b16 %v86
  %v559 = vunpack.c.l.b16 %v87
  %v560 = vunpack.c.l.b16 %v88
  %v561 = vunpack.c.l.b16 %v89
  %v562 = vunpack.c.l.b16 %v90
  %v563 = vunpack.c.l.b16 %v91
  %v564 = vunpack.c.l.b16 %v92
  %v565 = vunpack.c.l.b16 %v93
  %v566 = vunpack.c.l.b16 %v94
  %v567 = vunpack.c.l.b16 %v95
  %v568 = vunpack.c.l.b16 %v96
  %v569 = vunpack.c.l.b16 %v97
  %v570 = vunpack.c.l.b16 %v98
  %v571 = vunpack.c.l.b16 %v99
  %v572 = vunpack.c.l.b16 %v100
  %v573 = vunpack.c.l.b16 %v101
  %v574 = vunpack.c.l.b16 %v102
  %v575 = vunpack.c.l.b16 %v103
  %v576 = vunpack.c.l.b16 %v104
  %v577 = vunpack.c.l.b16 %v105
  %v578 = vunpack.c.l.b16 %v106
  %v579 = vunpack.c.l.b16 %v107
  %v580 = vunpack.c.l.b16 %v108
  %v581 = vunpack.c.l.b16 %v109
  %v582 = vunpack.c.l.b16 %v110
  %v583 = vunpack.c.l.b16 %v111
  %v584 = vunpack.c.l.b16 %v112
  %v585 = vunpack.c.l.b16 %v113
  %v586 = vunpack.c.l.b16 %v114
  %v587 = vunpack.c.l.b16 %v115
  %v588 = vunpack.c.l.b16 %v116
  %v589 = vunpack.c.l.b16 %v117
  %v590 = vunpack.c.l.b16 %v118
  %v591 = vunpack.c.l.b16 %v119
  %v592 = vunpack.c.l.b16 %v120
  %v593 = vunpack.c.l.b16 %v121
  %v594 = vunpack.c.l.b16 %v122
  %v595 = vunpack.c.l.b16 %v123
  %v596 = vunpack.c.l.b16 %v124
  %v597 = vunpack.c.l.b16 %v125
  %v598 = vunpack.c.l.b16 %v126
  %v599 = vunpack.c.l.b16 %v127
  %v600 = vunpack.c.l.b16 %v128
  %v601 = vunpack.c.l.b16 %v129
  %v602 = vunpack.c.l.b16 %v130
  %v603 = vunpack.c.l.b16 %v131
  %v604 = vunpack.c.l.b16 %v132
  %v605 = vunpack.c.l.b16 %v133
  %v606 = vunpack.c.l.b16 %v134
  %v607 = vunpack.c.l.b16 %v135
  %v608 = vunpack.c.l.b16 %v136
  %v609 = vunpack.c.l.b16 %v137
  %v610 = vunpack.c.l.b16 %v138
  %v611 = vunpack.c.l.b16 %v139
  %v612 = vunpack.c.l.b16 %v140
  %v613 = vunpack.c.l.b16 %v141
  %v614 = vunpack.c.l.b16 %v142
  %v615 = vunpack.c.l.b16 %v143
  %v616 = vunpack.c.l.b16 %v144
  %v617 = vunpack.c.l.b16 %v145
  %v618 = vunpack.c.l.b16 %v146
  %v619 = vunpack.c.l.b16 %v147
  %v620 = vunpack.c.l.b16 %v148
  %v621 = vunpack.c.l.b16 %v149
  %v622 = vunpack.c.l.b16 %v150
  %v623 = vunpack.c.l.b16 %v151
  %v624 = vunpack.c.l.b16 %v152
  %v625 = vunpack.c.l.b16 %v153
  %v626 = vunpack.c.l.b16 %v154
  %v627 = vunpack.c.l.b16 %v155
  %v628 = vunpack.c.l.b16 %v156
  %v629 = vunpack.c.l.b16 %v157
  %v630 = vunpack.c.l.b16 %v158
  %v631 = vunpack.c.l.b16 %v159
  %v632 = vunpack.c.l.b16 %v160
  %v633 = vunpack.c.l.b16 %v161
  %v634 = vunpack.c.l.b16 %v162
  %v635 = vunpack.c.l.b16 %v163
  %v636 = vunpack.c.l.b16 %v164
  %v637 = vunpack.c.l.b16 %v165
  %v638 = vunpack.c.l.b16 %v166
  %v639 = vunpack.c.l.b16 %v167
  %v640 = vunpack.c.l.b16 %v168
  %v641 = vunpack.c.l.b16 %v169
  %v642 = vunpack.c.l.b16 %v170
  %v643 = vunpack.c.l.b16 %v171
  %v644 = vunpack.c.l.b16 %v172
  %v645 = vunpack.c.l.b16 %v173
  %v646 = vunpack.c.l.b16 %v174
  %v647 = vunpack.c.l.b16 %v175
  %v648 = vunpack.c.l.b16 %v176
  %v649 = vunpack.c.l.b16 %v177
  %v650 = vunpack.c.l.b16 %v178
  %v651 = vunpack.c.l.b16 %v179
  %v652 = vunpack.c.l.b16 %v180
  %v653 = vunpack.c.l.b16 %v181
  %v654 = vunpack.c.l.b16 %v182
  %v655 = vunpack.c.l.b16 %v183
  %v656 = vunpack.c.l.b16 %v184
  %v657 = vunpack.c.l.b16 %v185
  %v658 = vunpack.c.l.b16 %v186
  %v659 = vunpack.c.l.b16 %v187
  %v660 = vunpack.c.l.b16 %v188
  %v661 = vunpack.c.l.b16 %v189
  %v662 = vunpack.c.l.b16 %v190
  %v663 = vunpack.c.l.b16 %v191
  %v664 = vunpack.c.l.b16 %v192
  %v665 = vunpack.c.l.b16 %v193
  %v666 = vunpack.c.l.b16 %v194
  %v667 = vunpack.c.l.b16 %v195
  %v668 = vunpack.c.l.b16 %v196
  %v669 = vunpack.c.l.b16 %v197
  %v670 = vunpack.c.l.b16 %v198
  %v671 = vunpack.c.l.b16 %v199
  %v672 = vunpack.c.l.b16 %v200
  %v673 = vunpack.c.l.b16 %v201
  %v674 = vunpack.c.l.b16 %v202
  %v675 = vunpack.c.l.b16 %v203
  %v676 = vunpack.c.l.b16 %v204
  %v677 = vunpack.c.l.b16 %v205
  %v678 = vunpack.c.l.b16 %v206
  %v679 = vunpack.c.l.b16 %v207
  %v680 = vunpack.c.l.b16 %v208
  %v681 = vunpack.c.l.b16 %v209
  %v682 = vunpack.c.l.b16 %v210
  %v683 = vunpack.c.l.b16 %v211
  %v684 = vunpack.c.l.b16 %v212
  %v685 = vunpack.c.l.b16 %v213
  %v686 = vunpack.c.l.b16 %v214
  %v687 = vunpack.c.l.b16 %v215
  %v688 = vunpack.c.l.b16 %v216
  %v689 = vunpack.c.l.b16 %v217
  %v690 = vunpack.c.l.b16 %v218
  %v691 = vunpack.c.l.b16 %v219
  %v692 = vunpack.c.l.b16 %v220
  %v693 = vunpack.c.l.b16 %v221
  %v694 = vunpack.c.l.b16 %v222
  %v695 = vunpack.c.l.b16 %v223
  %v696 = vunpack.c.l.b16 %v224
  %v697 = vunpack.c.l.b16 %v225
  %v698 = vunpack.c.l.b16 %v226
  %v699 = vunpack.c.l.b16 %v227
  %v700 = vunpack.c.l.b16 %v228
  %v701 = vunpack.c.l.b16 %v229
  %v702 = vunpack.c.l.b16 %v230
  %v703 = vunpack.c.l.b16 %v231
  %v704 = vunpack.c.l.b16 %v232
  %v705 = vunpack.c.l.b16 %v233
  %v706 = vunpack.c.l.b16 %v234
  %v707 = vunpack.c.l.b16 %v235
  %v708 = vunpack.c.l.b16 %v236
  %v709 = vunpack.c.l.b16 %v237
  %v710 = vunpack.c.l.b16 %v238
  %v711 = vunpack.c.l.b16 %v239
  %v712 = vunpack.c.l.b16 %v240
  %v713 = vpack.c.b16 %v514, %v513
  %v714 = vpack.c.b16 %v516, %v515
  %v715 = vpack.c.b16 %v518, %v517
  %v716 = vpack.c.b16 %v520, %v519
  %v717 = vpack.c.b16 %v522, %v521
  %v718 = vpack.c.b16 %v524, %v523
  %v719 = vpack.c.b16 %v526, %v525
  %v720 = vpack.c.b16 %v528, %v527
  %v721 = vpack.c.b16 %v530, %v529
  %v722 = vpack.c.b16 %v532, %v531
  %v723 = vpack.c.b16 %v534, %v533
  %v724 = vpack.c.b16 %v536, %v535
  %v725 = vpack.c.b16 %v538, %v537
  %v726 = vpack.c.b16 %v540, %v539
  %v727 = vpack.c.b16 %v542, %v541
  %v728 = vpack.c.b16 %v544, %v543
  %v729 = vpack.c.b16 %v546, %v545
  %v730 = vpack.c.b16 %v548, %v547
  %v731 = vpack.c.b16 %v550, %v549
  %v732 = vpack.c.b16 %v552, %v551
  %v733 = vpack.c.b16 %v554, %v553
  %v734 = vpack.c.b16 %v556, %v555
  %v735 = vpack.c.b16 %v558, %v557
  %v736 = vpack.c.b16 %v560, %v559
  %v737 = vpack.c.b16 %v562, %v561
  %v738 = vpack.c.b16 %v564, %v563
  %v739 = vpack.c.b16 %v566, %v565
  %v740 = vpack.c.b16 %v568, %v567
  %v741 = vpack.c.b16 %v570, %v569
  %v742 = vpack.c.b16 %v572, %v571
  %v743 = vpack.c.b16 %v574, %v573
  %v744 = vpack.c.b16 %v576, %v575
  %v745 = vpack.c.b16 %v578, %v577
  %v746 = vpack.c.b16 %v580, %v579
  %v747 = vpack.c.b16 %v582, %v581
  %v748 = vpack.c.b16 %v584, %v583
  %v749 = vpack.c.b16 %v586, %v585
  %v750 = vpack.c.b16 %v588, %v587
  %v751 = vpack.c.b16 %v590, %v589
  %v752 = vpack.c.b16 %v592, %v591
  %v753 = vpack.c.b16 %v594, %v593
  %v754 = vpack.c.b16 %v596, %v595
  %v755 = vpack.c.b16 %v598, %v597
  %v756 = vpack.c.b16 %v600, %v599
  %v757 = vpack.c.b16 %v602, %v601
  %v758 = vpack.c.b16 %v604, %v603
  %v759 = vpack.c.b16 %v606, %v605
  %v760 = vpack.c.b16 %v608, %v607
  %v761 = vpack.c.b16 %v610, %v609
  %v762 = vpack.c.b16 %v612, %v611
  %v763 = vpack.c.b16 %v614, %v613
  %v764 = vpack.c.b16 %v616, %v615
  %v765 = vpack.c.b16 %v618, %v617
  %v766 = vpack.c.b16 %v620, %v619
  %v767 = vpack.c.b16 %v622, %v621
  %v768 = vpack.c.b16 %v624, %v623
  %v769 = vpack.c.b16 %v626, %v625
  %v770 = vpack.c.b16 %v628, %v627
  %v771 = vpack.c.b16 %v630, %v629
  %v772 = vpack.c.b16 %v632, %v631
  %v773 = vpack.c.b16 %v634, %v633
  %v774 = vpack.c.b16 %v636, %v635
  %v775 = vpack.c.b16 %v638, %v637
  %v776 = vpack.c.b16 %v640, %v639
  %v777 = vpack.c.b16 %v642, %v641
  %v778 = vpack.c.b16 %v644, %v643
  %v779 = vpack.c.b16 %v646, %v645
  %v780 = vpack.c.b16 %v648, %v647
  %v781 = vpack.c.b16 %v650, %v649
  %v782 = vpack.c.b16 %v652, %v651
  %v783 = vpack.c.b16 %v654, %v653
  %v784 = vpack.c.b16 %v656, %v655
  %v785 = vpack.c.b16 %v658, %v657
  %v786 = vpack.c.b16 %v660, %v659
  %v787 = vpack.c.b16 %v662, %v661
  %v788 = vpack.c.b16 %v664, %v663
  %v789 = vpack.c.b16 %v666, %v665
  %v790 = vpack.c.b16 %v668, %v667
  %v791 = vpack.c.b16 %v670, %v669
  %v792 = vpack.c.b16 %v672, %v671
  %v793 = vpack.c.b16 %v674, %v673
  %v794 = vpack.c.b16 %v676, %v675
  %v795 = vpack.c.b16 %v678, %v677
  %v796 = vpack.c.b16 %v680, %v679
  %v797 = vpack.c.b16 %v682, %v681
  %v798 = vpack.c.b16 %v684, %v683
  %v799 = vpack.c.b16 %v686, %v685
  %v800 = vpack.c.b16 %v688, %v687
  %v801 = vpack.c.b16 %v690, %v689
  %v802 = vpack.c.b16 %v692, %v691
  %v803 = vpack.c.b16 %v694, %v693
  %v804 = vpack.c.b16 %v696, %v695
  %v805 = vpack.c.b16 %v698, %v697
  %v806 = vpack.c.b16 %v700, %v699
  %v807 = vpack.c.b16 %v702, %v701
  %v808 = vpack.c.b16 %v704, %v703
  %v809 = vpack.c.b16 %v706, %v705
  %v810 = vpack.c.b16 %v708, %v707
  %v811 = vpack.c.b16 %v710, %v709
  %v812 = vpack.c.b16 %v712, %v711
  %vm913 = vcmask 523264
  %v915 = vsel %vm913, %v300, 0
  %917 = vmatprep.subr.bf16.mxu0 0
  %918 = vmatpush1.bf16.msra.mxu0 %v713
  %919 = vmatprep.subr.bf16.mxu0 0
  %920 = vmatpush1.bf16.msra.mxu0 %v714
  %921 = vmatprep.subr.bf16.mxu0 0
  %922 = vmatpush1.bf16.msra.mxu0 %v715
  %923 = vmatprep.subr.bf16.mxu0 0
  %924 = vmatpush1.bf16.msra.mxu0 %v716
  %925 = vmatprep.subr.bf16.mxu0 0
  %926 = vmatpush1.bf16.msra.mxu0 %v717
  %927 = vmatprep.subr.bf16.mxu0 0
  %928 = vmatpush1.bf16.msra.mxu0 %v718
  %929 = vmatprep.subr.bf16.mxu0 0
  %930 = vmatpush1.bf16.msra.mxu0 %v719
  %931 = vmatprep.subr.bf16.mxu0 0
  %932 = vmatpush1.bf16.msra.mxu0 %v720
  %933 = vmatprep.subr.bf16.mxu0 0
  %934 = vmatpush1.bf16.msra.mxu0 %v721
  %935 = vmatprep.subr.bf16.mxu0 0
  %936 = vmatpush1.bf16.msra.mxu0 %v722
  %937 = vmatprep.subr.bf16.mxu0 0
  %938 = vmatpush1.bf16.msra.mxu0 %v723
  %939 = vmatprep.subr.bf16.mxu0 0
  %940 = vmatpush1.bf16.msra.mxu0 %v724
  %941 = vmatprep.subr.bf16.mxu0 0
  %942 = vmatpush1.bf16.msra.mxu0 %v725
  %943 = vmatprep.subr.bf16.mxu0 0
  %944 = vmatpush1.bf16.msra.mxu0 %v726
  %945 = vmatprep.subr.bf16.mxu0 0
  %946 = vmatpush1.bf16.msra.mxu0 %v727
  %947 = vmatprep.subr.bf16.mxu0 0
  %948 = vmatpush1.bf16.msra.mxu0 %v728
  %949 = vmatprep.mubr.bf16.mxu0 %v289
  %950 = vmatmul.mubr.bf16.gmra.mrb[0].mxu0 %v288
  %v951 = vpop.f32.mrb[0].mxu0
  %v952 = vadd.f32 %v246, %v951
  %v953 = vpop.f32.mrb[0].mxu0
  %v954 = vpop.f32.mrb[0].mxu0
  %v955 = vadd.f32 %v246, %v954
  %v956 = vpop.f32.mrb[0].mxu0
  %957 = vdwg.mxu0
  %958 = vmatprep.subr.bf16.mxu0 0
  %959 = vmatpush1.bf16.msra.mxu0 %v729
  %960 = vmatprep.subr.bf16.mxu0 0
  %961 = vmatpush1.bf16.msra.mxu0 %v730
  %962 = vmatprep.subr.bf16.mxu0 0
  %963 = vmatpush1.bf16.msra.mxu0 %v731
  %964 = vmatprep.subr.bf16.mxu0 0
  %965 = vmatpush1.bf16.msra.mxu0 %v732
  %966 = vmatprep.subr.bf16.mxu0 0
  %967 = vmatpush1.bf16.msra.mxu0 %v733
  %968 = vmatprep.subr.bf16.mxu0 0
  %969 = vmatpush1.bf16.msra.mxu0 %v734
  %970 = vmatprep.subr.bf16.mxu0 0
  %971 = vmatpush1.bf16.msra.mxu0 %v735
  %972 = vmatprep.subr.bf16.mxu0 0
  %973 = vmatpush1.bf16.msra.mxu0 %v736
  %974 = vmatprep.subr.bf16.mxu0 0
  %975 = vmatpush1.bf16.msra.mxu0 %v737
  %976 = vmatprep.subr.bf16.mxu0 0
  %977 = vmatpush1.bf16.msra.mxu0 %v738
  %978 = vmatprep.subr.bf16.mxu0 0
  %979 = vmatpush1.bf16.msra.mxu0 %v739
  %980 = vmatprep.subr.bf16.mxu0 0
  %981 = vmatpush1.bf16.msra.mxu0 %v740
  %982 = vmatprep.subr.bf16.mxu0 0
  %983 = vmatpush1.bf16.msra.mxu0 %v741
  %984 = vmatprep.subr.bf16.mxu0 0
  %985 = vmatpush1.bf16.msra.mxu0 %v742
  %986 = vmatprep.subr.bf16.mxu0 0
  %987 = vmatpush1.bf16.msra.mxu0 %v743
  %988 = vmatprep.subr.bf16.mxu0 0
  %989 = vmatpush1.bf16.msra.mxu0 %v744
  %990 = vmatprep.mubr.bf16.mxu0 %v291
  %991 = vmatmul.mubr.bf16.gmra.mrb[0].mxu0 %v290
  %v992 = vpop.f32.mrb[0].mxu0
  %v993 = vadd.f32 %v952, %v992
  %v994 = vpop.f32.mrb[0].mxu0
  %v995 = vpop.f32.mrb[0].mxu0
  %v996 = vadd.f32 %v955, %v995
  %v997 = vpop.f32.mrb[0].mxu0
  %998 = vdwg.mxu0
  %999 = vmatprep.subr.bf16.mxu0 0
  %1000 = vmatpush1.bf16.msra.mxu0 %v745
  %1001 = vmatprep.subr.bf16.mxu0 0
  %1002 = vmatpush1.bf16.msra.mxu0 %v746
  %1003 = vmatprep.subr.bf16.mxu0 0
  %1004 = vmatpush1.bf16.msra.mxu0 %v747
  %1005 = vmatprep.subr.bf16.mxu0 0
  %1006 = vmatpush1.bf16.msra.mxu0 %v748
  %1007 = vmatprep.subr.bf16.mxu0 0
  %1008 = vmatpush1.bf16.msra.mxu0 %v749
  %1009 = vmatprep.subr.bf16.mxu0 0
  %1010 = vmatpush1.bf16.msra.mxu0 %v750
  %1011 = vmatprep.subr.bf16.mxu0 0
  %1012 = vmatpush1.bf16.msra.mxu0 %v751
  %1013 = vmatprep.subr.bf16.mxu0 0
  %1014 = vmatpush1.bf16.msra.mxu0 %v752
  %1015 = vmatprep.subr.bf16.mxu0 0
  %1016 = vmatpush1.bf16.msra.mxu0 %v753
  %1017 = vmatprep.subr.bf16.mxu0 0
  %1018 = vmatpush1.bf16.msra.mxu0 %v754
  %1019 = vmatprep.subr.bf16.mxu0 0
  %1020 = vmatpush1.bf16.msra.mxu0 %v755
  %1021 = vmatprep.subr.bf16.mxu0 0
  %1022 = vmatpush1.bf16.msra.mxu0 %v756
  %1023 = vmatprep.subr.bf16.mxu0 0
  %1024 = vmatpush1.bf16.msra.mxu0 %v757
  %1025 = vmatprep.subr.bf16.mxu0 0
  %1026 = vmatpush1.bf16.msra.mxu0 %v758
  %1027 = vmatprep.subr.bf16.mxu0 0
  %1028 = vmatpush1.bf16.msra.mxu0 %v759
  %1029 = vmatprep.subr.bf16.mxu0 0
  %1030 = vmatpush1.bf16.msra.mxu0 %v760
  %1031 = vmatprep.mubr.bf16.mxu0 %v293
  %1032 = vmatmul.mubr.bf16.gmra.mrb[0].mxu0 %v292
  %v1033 = vpop.f32.mrb[0].mxu0
  %v1034 = vadd.f32 %v993, %v1033
  %v1035 = vpop.f32.mrb[0].mxu0
  %v1036 = vpop.f32.mrb[0].mxu0
  %v1037 = vadd.f32 %v996, %v1036
  %v1038 = vpop.f32.mrb[0].mxu0
  %1039 = vdwg.mxu0
  %1040 = vmatprep.subr.bf16.mxu0 0
  %1041 = vmatpush1.bf16.msra.mxu0 %v761
  %1042 = vmatprep.subr.bf16.mxu0 0
  %1043 = vmatpush1.bf16.msra.mxu0 %v762
  %1044 = vmatprep.subr.bf16.mxu0 0
  %1045 = vmatpush1.bf16.msra.mxu0 %v763
  %1046 = vmatprep.subr.bf16.mxu0 0
  %1047 = vmatpush1.bf16.msra.mxu0 %v764
  %1048 = vmatprep.subr.bf16.mxu0 0
  %1049 = vmatpush1.bf16.msra.mxu0 %v765
  %1050 = vmatprep.subr.bf16.mxu0 0
  %1051 = vmatpush1.bf16.msra.mxu0 %v766
  %1052 = vmatprep.subr.bf16.mxu0 0
  %1053 = vmatpush1.bf16.msra.mxu0 %v767
  %1054 = vmatprep.subr.bf16.mxu0 0
  %1055 = vmatpush1.bf16.msra.mxu0 %v768
  %1056 = vmatprep.subr.bf16.mxu0 0
  %1057 = vmatpush1.bf16.msra.mxu0 %v769
  %1058 = vmatprep.subr.bf16.mxu0 0
  %1059 = vmatpush1.bf16.msra.mxu0 %v770
  %1060 = vmatprep.subr.bf16.mxu0 0
  %1061 = vmatpush1.bf16.msra.mxu0 %v771
  %1062 = vmatprep.subr.bf16.mxu0 0
  %1063 = vmatpush1.bf16.msra.mxu0 %v772
  %1064 = vmatprep.subr.bf16.mxu0 0
  %1065 = vmatpush1.bf16.msra.mxu0 %v773
  %1066 = vmatprep.subr.bf16.mxu0 0
  %1067 = vmatpush1.bf16.msra.mxu0 %v774
  %1068 = vmatprep.subr.bf16.mxu0 0
  %1069 = vmatpush1.bf16.msra.mxu0 %v775
  %1070 = vmatprep.subr.bf16.mxu0 0
  %1071 = vmatpush1.bf16.msra.mxu0 %v776
  %1072 = vmatprep.mubr.bf16.mxu0 %v295
  %1073 = vmatmul.mubr.bf16.gmra.mrb[0].mxu0 %v294
  %v1074 = vpop.f32.mrb[0].mxu0
  %v1075 = vadd.f32 %v1034, %v1074
  %v1076 = vpop.f32.mrb[0].mxu0
  %v1077 = vpop.f32.mrb[0].mxu0
  %v1078 = vadd.f32 %v1037, %v1077
  %v1079 = vpop.f32.mrb[0].mxu0
  %1080 = vdwg.mxu0
  %1081 = vmatprep.subr.bf16.mxu0 0
  %1082 = vmatpush1.bf16.msra.mxu0 %v777
  %1083 = vmatprep.subr.bf16.mxu0 0
  %1084 = vmatpush1.bf16.msra.mxu0 %v778
  %1085 = vmatprep.subr.bf16.mxu0 0
  %1086 = vmatpush1.bf16.msra.mxu0 %v779
  %1087 = vmatprep.subr.bf16.mxu0 0
  %1088 = vmatpush1.bf16.msra.mxu0 %v780
  %1089 = vmatprep.subr.bf16.mxu0 0
  %1090 = vmatpush1.bf16.msra.mxu0 %v781
  %1091 = vmatprep.subr.bf16.mxu0 0
  %1092 = vmatpush1.bf16.msra.mxu0 %v782
  %1093 = vmatprep.subr.bf16.mxu0 0
  %1094 = vmatpush1.bf16.msra.mxu0 %v783
  %1095 = vmatprep.subr.bf16.mxu0 0
  %1096 = vmatpush1.bf16.msra.mxu0 %v784
  %1097 = vmatprep.subr.bf16.mxu0 0
  %1098 = vmatpush1.bf16.msra.mxu0 %v785
  %1099 = vmatprep.subr.bf16.mxu0 0
  %1100 = vmatpush1.bf16.msra.mxu0 %v786
  %1101 = vmatprep.subr.bf16.mxu0 0
  %1102 = vmatpush1.bf16.msra.mxu0 %v787
  %1103 = vmatprep.subr.bf16.mxu0 0
  %1104 = vmatpush1.bf16.msra.mxu0 %v788
  %1105 = vmatprep.subr.bf16.mxu0 0
  %1106 = vmatpush1.bf16.msra.mxu0 %v789
  %1107 = vmatprep.subr.bf16.mxu0 0
  %1108 = vmatpush1.bf16.msra.mxu0 %v790
  %1109 = vmatprep.subr.bf16.mxu0 0
  %1110 = vmatpush1.bf16.msra.mxu0 %v791
  %1111 = vmatprep.subr.bf16.mxu0 0
  %1112 = vmatpush1.bf16.msra.mxu0 %v792
  %1113 = vmatprep.mubr.bf16.mxu0 %v297
  %1114 = vmatmul.mubr.bf16.gmra.mrb[0].mxu0 %v296
  %v1115 = vpop.f32.mrb[0].mxu0
  %v1116 = vadd.f32 %v1075, %v1115
  %v1117 = vpop.f32.mrb[0].mxu0
  %v1118 = vpop.f32.mrb[0].mxu0
  %v1119 = vadd.f32 %v1078, %v1118
  %v1120 = vpop.f32.mrb[0].mxu0
  %1121 = vdwg.mxu0
  %1122 = vmatprep.subr.bf16.mxu0 0
  %1123 = vmatpush1.bf16.msra.mxu0 %v793
  %1124 = vmatprep.subr.bf16.mxu0 0
  %1125 = vmatpush1.bf16.msra.mxu0 %v794
  %1126 = vmatprep.subr.bf16.mxu0 0
  %1127 = vmatpush1.bf16.msra.mxu0 %v795
  %1128 = vmatprep.subr.bf16.mxu0 0
  %1129 = vmatpush1.bf16.msra.mxu0 %v796
  %1130 = vmatprep.subr.bf16.mxu0 0
  %1131 = vmatpush1.bf16.msra.mxu0 %v797
  %1132 = vmatprep.subr.bf16.mxu0 0
  %1133 = vmatpush1.bf16.msra.mxu0 %v798
  %1134 = vmatprep.subr.bf16.mxu0 0
  %1135 = vmatpush1.bf16.msra.mxu0 %v799
  %1136 = vmatprep.subr.bf16.mxu0 0
  %1137 = vmatpush1.bf16.msra.mxu0 %v800
  %1138 = vmatprep.subr.bf16.mxu0 0
  %1139 = vmatpush1.bf16.msra.mxu0 %v801
  %1140 = vmatprep.subr.bf16.mxu0 0
  %1141 = vmatpush1.bf16.msra.mxu0 %v802
  %1142 = vmatprep.subr.bf16.mxu0 0
  %1143 = vmatpush1.bf16.msra.mxu0 %v803
  %1144 = vmatprep.subr.bf16.mxu0 0
  %1145 = vmatpush1.bf16.msra.mxu0 %v804
  %1146 = vmatprep.subr.bf16.mxu0 0
  %1147 = vmatpush1.bf16.msra.mxu0 %v805
  %1148 = vmatprep.subr.bf16.mxu0 0
  %1149 = vmatpush1.bf16.msra.mxu0 %v806
  %1150 = vmatprep.subr.bf16.mxu0 0
  %1151 = vmatpush1.bf16.msra.mxu0 %v807
  %1152 = vmatprep.subr.bf16.mxu0 0
  %1153 = vmatpush1.bf16.msra.mxu0 %v808
  %1154 = vmatprep.mubr.bf16.mxu0 %v299
  %1155 = vmatmul.mubr.bf16.gmra.mrb[0].mxu0 %v298
  %v1156 = vpop.f32.mrb[0].mxu0
  %v1157 = vadd.f32 %v1116, %v1156
  %v1158 = vpop.f32.mrb[0].mxu0
  %v1159 = vpop.f32.mrb[0].mxu0
  %v1160 = vadd.f32 %v1119, %v1159
  %v1161 = vpop.f32.mrb[0].mxu0
  %1162 = vdwg.mxu0
  %1163 = vmatprep.subr.bf16.mxu0 0
  %1164 = vmatpush1.bf16.msra.mxu0 %v809
  %1165 = vmatprep.subr.bf16.mxu0 0
  %1166 = vmatpush1.bf16.msra.mxu0 %v810
  %1167 = vmatprep.subr.bf16.mxu0 0
  %1168 = vmatpush1.bf16.msra.mxu0 %v811
  %1169 = vmatprep.subr.bf16.mxu0 0
  %1170 = vmatpush1.bf16.msra.mxu0 %v812
  %1171 = vmatprep.subr.bf16.mxu0 0
  %1172 = vmatpush1.bf16.msra.mxu0 0
  %1173 = vmatprep.subr.bf16.mxu0 0
  %1174 = vmatpush1.bf16.msra.mxu0 0
  %1175 = vmatprep.subr.bf16.mxu0 0
  %1176 = vmatpush1.bf16.msra.mxu0 0
  %1177 = vmatprep.subr.bf16.mxu0 0
  %1178 = vmatpush1.bf16.msra.mxu0 0
  %1179 = vmatprep.subr.bf16.mxu0 0
  %1180 = vmatpush1.bf16.msra.mxu0 0
  %1181 = vmatprep.subr.bf16.mxu0 0
  %1182 = vmatpush1.bf16.msra.mxu0 0
  %1183 = vmatprep.subr.bf16.mxu0 0
  %1184 = vmatpush1.bf16.msra.mxu0 0
  %1185 = vmatprep.subr.bf16.mxu0 0
  %1186 = vmatpush1.bf16.msra.mxu0 0
  %1187 = vmatprep.subr.bf16.mxu0 0
  %1188 = vmatpush1.bf16.msra.mxu0 0
  %1189 = vmatprep.subr.bf16.mxu0 0
  %1190 = vmatpush1.bf16.msra.mxu0 0
  %1191 = vmatprep.subr.bf16.mxu0 0
  %1192 = vmatpush1.bf16.msra.mxu0 0
  %1193 = vmatprep.subr.bf16.mxu0 0
  %1194 = vmatpush1.bf16.msra.mxu0 0
  %1195 = vmatprep.mubr.bf16.mxu0 0
  %1196 = vmatmul.mubr.bf16.gmra.mrb[0].mxu0 %v915
  %v1197 = vpop.f32.mrb[0].mxu0
  %v1198 = vadd.f32 %v1157, %v1197
  %v1199 = vpop.f32.mrb[0].mxu0
  %v1200 = vpop.f32.mrb[0].mxu0
  %v1201 = vadd.f32 %v1160, %v1200
  %v1202 = vpop.f32.mrb[0].mxu0
  %1203 = vdwg.mxu0
  %v1204 = vmax.f32 %v1198, 0.0
  %v1205 = vmax.f32 %v1201, 0.0
  %v1206 = vpack.c.bf16 %v1205, %v1204
  %v1207 = vld [vmem:[%s3] sm:$0xf]
  %v1208 = vld [vmem:[%s3 + $0x4] sm:$0xf]
  %v1209 = vld [vmem:[%s3 + $0x8] sm:$0xf]
  %v1210 = vld [vmem:[%s3 + $0xc] sm:$0xf]
  %v1211 = vld [vmem:[%s3 + $0x10] sm:$0xf]
  %v1212 = vld [vmem:[%s3 + $0x14] sm:$0xf]
  %v1213 = vld [vmem:[%s3 + $0x18] sm:$0xf]
  %v1214 = vld [vmem:[%s3 + $0x1c] sm:$0xf]
  %v1215 = vld [vmem:[%s3 + $0x20] sm:$0xf]
  %v1216 = vld [vmem:[%s3 + $0x24] sm:$0xf]
  %v1217 = vld [vmem:[%s3 + $0x28] sm:$0xf]
  %v1218 = vld [vmem:[%s3 + $0x2c] sm:$0xf]
  %v1219 = vld [vmem:[%s3 + $0x30] sm:$0xf]
  %v1220 = vld [vmem:[%s3 + $0x34] sm:$0xf]
  %v1221 = vld [vmem:[%s3 + $0x38] sm:$0xf]
  %v1222 = vld [vmem:[%s3 + $0x3c] sm:$0xf]
  %v1223 = vld [vmem:[%s4] sm:$0x1]
  %v1225 = vlaneseq
  %v1226 = vshrl.u32 %v1225, 7
  %v1227 = vsub.s32 0, %v1226
  %v1228 = vrot.slane %v1223, %v1227
  %v1246 = vunpack.c.l.b16 %v1207
  %v1247 = vunpack.c.l.b16 %v1208
  %v1248 = vunpack.c.l.b16 %v1209
  %v1249 = vunpack.c.l.b16 %v1210
  %v1250 = vunpack.c.l.b16 %v1211
  %v1251 = vunpack.c.l.b16 %v1212
  %v1252 = vunpack.c.l.b16 %v1213
  %v1253 = vunpack.c.l.b16 %v1214
  %v1254 = vunpack.c.l.b16 %v1215
  %v1255 = vunpack.c.l.b16 %v1216
  %v1256 = vunpack.c.l.b16 %v1217
  %v1257 = vunpack.c.l.b16 %v1218
  %v1258 = vunpack.c.l.b16 %v1219
  %v1259 = vunpack.c.l.b16 %v1220
  %v1260 = vunpack.c.l.b16 %v1221
  %v1261 = vunpack.c.l.b16 %v1222
  %v1262 = vpack.c.b16 %v1247, %v1246
  %v1263 = vpack.c.b16 %v1249, %v1248
  %v1264 = vpack.c.b16 %v1251, %v1250
  %v1265 = vpack.c.b16 %v1253, %v1252
  %v1266 = vpack.c.b16 %v1255, %v1254
  %v1267 = vpack.c.b16 %v1257, %v1256
  %v1268 = vpack.c.b16 %v1259, %v1258
  %v1269 = vpack.c.b16 %v1261, %v1260
  %1278 = vmatprep.subr.bf16.mxu0 0
  %1279 = vmatpush1.bf16.msra.mxu0 %v1262
  %1280 = vmatprep.subr.bf16.mxu0 0
  %1281 = vmatpush1.bf16.msra.mxu0 %v1263
  %1282 = vmatprep.subr.bf16.mxu0 0
  %1283 = vmatpush1.bf16.msra.mxu0 %v1264
  %1284 = vmatprep.subr.bf16.mxu0 0
  %1285 = vmatpush1.bf16.msra.mxu0 %v1265
  %1286 = vmatprep.subr.bf16.mxu0 0
  %1287 = vmatpush1.bf16.msra.mxu0 %v1266
  %1288 = vmatprep.subr.bf16.mxu0 0
  %1289 = vmatpush1.bf16.msra.mxu0 %v1267
  %1290 = vmatprep.subr.bf16.mxu0 0
  %1291 = vmatpush1.bf16.msra.mxu0 %v1268
  %1292 = vmatprep.subr.bf16.mxu0 0
  %1293 = vmatpush1.bf16.msra.mxu0 %v1269
  %1294 = vmatprep.subr.bf16.mxu0 0
  %1295 = vmatpush1.bf16.msra.mxu0 0
  %1296 = vmatprep.subr.bf16.mxu0 0
  %1297 = vmatpush1.bf16.msra.mxu0 0
  %1298 = vmatprep.subr.bf16.mxu0 0
  %1299 = vmatpush1.bf16.msra.mxu0 0
  %1300 = vmatprep.subr.bf16.mxu0 0
  %1301 = vmatpush1.bf16.msra.mxu0 0
  %1302 = vmatprep.subr.bf16.mxu0 0
  %1303 = vmatpush1.bf16.msra.mxu0 0
  %1304 = vmatprep.subr.bf16.mxu0 0
  %1305 = vmatpush1.bf16.msra.mxu0 0
  %1306 = vmatprep.subr.bf16.mxu0 0
  %1307 = vmatpush1.bf16.msra.mxu0 0
  %1308 = vmatprep.subr.bf16.mxu0 0
  %1309 = vmatpush1.bf16.msra.mxu0 0
  %1310 = vmatprep.mubr.bf16.mxu0 0
  %1311 = vmatmul.mubr.bf16.gmra.mrb[0].mxu0 %v1206
  %v1312 = vpop.f32.mrb[0].mxu0
  %v1313 = vadd.f32 %v1228, %v1312
  %v1314 = vpop.f32.mrb[0].mxu0
  %v1315 = vpop.f32.mrb[0].mxu0
  %v1316 = vadd.f32 %v1228, %v1315
  %v1317 = vpop.f32.mrb[0].mxu0
  %1318 = vdwg.mxu0
  %v1319 = vmax.f32 %v1313, 0.0
  %v1320 = vmax.f32 %v1316, 0.0
  %v1321 = vpack.c.bf16 %v1320, %v1319
  %v1322 = vld [vmem:[%s5] sm:$0xf]
  %v1323 = vld [vmem:[%s5 + $0x4] sm:$0xf]
  %v1324 = vld [vmem:[%s5 + $0x8] sm:$0xf]
  %v1325 = vld [vmem:[%s5 + $0xc] sm:$0xf]
  %v1326 = vld [vmem:[%s5 + $0x10] sm:$0xf]
  %v1327 = vld [vmem:[%s5 + $0x14] sm:$0xf]
  %v1328 = vld [vmem:[%s5 + $0x18] sm:$0xf]
  %v1329 = vld [vmem:[%s5 + $0x1c] sm:$0xf]
  %v1330 = vld [vmem:[%s6] sm:$0x1]
  %v1332 = vlaneseq
  %v1333 = vshrl.u32 %v1332, 7
  %v1334 = vsub.s32 0, %v1333
  %v1335 = vrot.slane %v1330, %v1334
  %v1345 = vunpack.c.l.b16 %v1322
  %v1346 = vunpack.c.l.b16 %v1323
  %v1347 = vunpack.c.l.b16 %v1324
  %v1348 = vunpack.c.l.b16 %v1325
  %v1349 = vunpack.c.l.b16 %v1326
  %v1350 = vunpack.c.l.b16 %v1327
  %v1351 = vunpack.c.l.b16 %v1328
  %v1352 = vunpack.c.l.b16 %v1329
  %v1353 = vpack.c.b16 %v1346, %v1345
  %v1354 = vpack.c.b16 %v1348, %v1347
  %v1355 = vpack.c.b16 %v1350, %v1349
  %v1356 = vpack.c.b16 %v1352, %v1351
  %v1362 = vsel %vm913, %v1321, 0
  %1364 = vmatprep.subr.bf16.mxu0 0
  %1365 = vmatpush1.bf16.msra.mxu0 %v1353
  %1366 = vmatprep.subr.bf16.mxu0 0
  %1367 = vmatpush1.bf16.msra.mxu0 %v1354
  %1368 = vmatprep.subr.bf16.mxu0 0
  %1369 = vmatpush1.bf16.msra.mxu0 %v1355
  %1370 = vmatprep.subr.bf16.mxu0 0
  %1371 = vmatpush1.bf16.msra.mxu0 %v1356
  %1372 = vmatprep.subr.bf16.mxu0 0
  %1373 = vmatpush1.bf16.msra.mxu0 0
  %1374 = vmatprep.subr.bf16.mxu0 0
  %1375 = vmatpush1.bf16.msra.mxu0 0
  %1376 = vmatprep.subr.bf16.mxu0 0
  %1377 = vmatpush1.bf16.msra.mxu0 0
  %1378 = vmatprep.subr.bf16.mxu0 0
  %1379 = vmatpush1.bf16.msra.mxu0 0
  %1380 = vmatprep.subr.bf16.mxu0 0
  %1381 = vmatpush1.bf16.msra.mxu0 0
  %1382 = vmatprep.subr.bf16.mxu0 0
  %1383 = vmatpush1.bf16.msra.mxu0 0
  %1384 = vmatprep.subr.bf16.mxu0 0
  %1385 = vmatpush1.bf16.msra.mxu0 0
  %1386 = vmatprep.subr.bf16.mxu0 0
  %1387 = vmatpush1.bf16.msra.mxu0 0
  %1388 = vmatprep.subr.bf16.mxu0 0
  %1389 = vmatpush1.bf16.msra.mxu0 0
  %1390 = vmatprep.subr.bf16.mxu0 0
  %1391 = vmatpush1.bf16.msra.mxu0 0
  %1392 = vmatprep.subr.bf16.mxu0 0
  %1393 = vmatpush1.bf16.msra.mxu0 0
  %1394 = vmatprep.subr.bf16.mxu0 0
  %1395 = vmatpush1.bf16.msra.mxu0 0
  %1396 = vmatprep.mubr.bf16.mxu0 0
  %1397 = vmatmul.mubr.bf16.gmra.mrb[0].mxu0 %v1362
  %v1398 = vpop.f32.mrb[0].mxu0
  %v1399 = vadd.f32 %v1335, %v1398
  %v1400 = vpop.f32.mrb[0].mxu0
  %v1401 = vpop.f32.mrb[0].mxu0
  %v1402 = vadd.f32 %v1335, %v1401
  %v1403 = vpop.f32.mrb[0].mxu0
  %1404 = vdwg.mxu0
  %1405 = vst [vmem:[%s7] sm:$0xff] %v1399
  %1406 = vst [vmem:[%s7 + $0x8] sm:$0xff] %v1402
  // Predicated region
  $region30: #{lenet_forward.9} parent=0 // pred_check
    _
  $region31: #{lenet_forward.9} parent=0 // pred_check_branch
    %1408 = sbr.rel (0) target = $region33
  $region32: #{lenet_forward.9} parent=0 // pred_region
    _
  $region33: #{lenet_forward.9} parent=0 // pred_fallthru
    _
  // Predicated region
  $region34: #{lenet_forward.9} parent=0 // pred_check
    _
  $region35: #{lenet_forward.9} parent=0 // pred_check_branch
    %1410 = sbr.rel (0) target = $region37
  $region36: #{lenet_forward.9} parent=0 // pred_region
    _
  $region37: #{lenet_forward.9} parent=0 // pred_fallthru
    _

</llo_original>
